<compile_context>
chip_gen: v6e
topology: v6e:2x2x1
jax: 0.10.0
libtpu: 0.0.40
codegen_flags: <defaults>
</compile_context>

<pallas_src>
import functools

import jax
import jax.numpy as jnp
from jax.experimental import pallas as pl
from jax.experimental.pallas import tpu as pltpu


def _round_up(x, m):
    return (x + m - 1) // m * m


def _pick_row_tile(Ho, Wo, CP, bytes_per_elem=4, tile_budget_bytes=2 * 1024 * 1024):
    """Largest divisor of Ho whose (TH*Wo rows x CP lanes) output tile fits the budget.

    Sized conservatively so double-buffered tiles stay well under the default scoped
    VMEM limit even on v7x (64 MiB physical / 32 MiB scoped).
    """
    best = 1
    for d in range(1, Ho + 1):
        if Ho % d:
            continue
        if d * Wo * CP * bytes_per_elem <= tile_budget_bytes:
            best = d
    return best


def _conv_kernel(x_ref, w_ref, b_ref, o_ref, *stats_refs,
                 K, stride, dilation, TH, Wo, use_bn, activation):
    # x_ref:  (1, Hp, Wp, Cin)   zero-padded NHWC slab for this batch element
    # w_ref:  (K, K, Cin, CP)    HWIO weights, Cout zero-padded to CP (mult of 128)
    # b_ref:  (1, CP)            conv bias (used only when use_bn=False)
    # o_ref:  (1, TH*Wo, CP)     lane-dense flattened output tile
    # stats_refs[0]: (1, 1, 2, CP) per-tile [channel sum; channel sum-of-squares]
    Cin = x_ref.shape[-1]
    CP = o_ref.shape[-1]
    rows = TH * Wo

    h_base = pl.program_id(1) * (TH * stride)
    if (TH * stride) % 8 == 0:
        h_base = pl.multiple_of(h_base, 8)

    acc = jnp.zeros((rows, CP), jnp.float32)
    # Direct conv as K*K shifted matmuls on the MXU; each tap is sliced straight
    # off the Ref (only the H start is dynamic), keeping live values to one tap.
    for kh in range(K):
        for kw in range(K):
            h0 = h_base + kh * dilation
            w0 = kw * dilation
            if stride == 1:
                patch = x_ref[0, pl.ds(h0, TH), pl.ds(w0, Wo), :]
            else:
                # TODO(synk): stride>1 path (strided ref slices) is not exercised by
                # the small __main__ test.
                patch = x_ref[0, pl.ds(h0, TH, stride=stride),
                              pl.ds(w0, Wo, stride=stride), :]
            acc = acc + jnp.dot(patch.reshape(rows, Cin), w_ref[kh, kw],
                                preferred_element_type=jnp.float32)

    if use_bn:
        # Conv bias is skipped here: it cancels exactly under BN mean subtraction.
        s = jnp.sum(acc, axis=0, keepdims=True)
        ss = jnp.sum(acc * acc, axis=0, keepdims=True)
        stats_refs[0][0, 0, 0:1, :] = s
        stats_refs[0][0, 0, 1:2, :] = ss
        o_ref[0] = acc.astype(o_ref.dtype)
    else:
        acc = acc + b_ref[...].astype(jnp.float32)
        if activation == "relu":
            acc = jnp.maximum(acc, 0.0)
        o_ref[0] = acc.astype(o_ref.dtype)


def _bn_act_kernel(y_ref, scale_ref, shift_ref, o_ref, *, activation):
    # y_ref: (1, rows, CP) f32 conv output tile; scale/shift: (1, CP) folded BN params.
    y = y_ref[0].astype(jnp.float32)
    out = y * scale_ref[...] + shift_ref[...]          # single fused mul-add per element
    if activation == "relu":
        out = jnp.maximum(out, 0.0)
    o_ref[0] = out.astype(o_ref.dtype)


def base_si_conv(x_nchw, weight, bias, gamma, beta, *,
                 stride=1, padding=1, dilation=1,
                 use_bn=False, activation=None, eps=1e-5):
    """Forward pass of BaseSIConv.

    x_nchw: [N, Cin, H, W]   (PyTorch NCHW)
    weight: [Cout, Cin, K, K]
    bias, gamma, beta: [Cout]
    Returns [N, Cout, Ho, Wo] (NCHW).
    """
    N, Cin, H, W = x_nchw.shape
    Cout, Cin_w, K, K2 = weight.shape
    assert Cin == Cin_w and K == K2
    # TODO(synk): groups != 1 not implemented (module default groups=1).

    Ho = (H + 2 * padding - dilation * (K - 1) - 1) // stride + 1
    Wo = (W + 2 * padding - dilation * (K - 1) - 1) // stride + 1
    CP = _round_up(Cout, 128)

    # Layout glue: NCHW -> NHWC, spatial zero-pad, HWIO weights, channel pad to CP.
    x_nhwc = jnp.transpose(x_nchw, (0, 2, 3, 1))
    x_pad = jnp.pad(x_nhwc, ((0, 0), (padding, padding), (padding, padding), (0, 0)))
    Hp, Wp = x_pad.shape[1], x_pad.shape[2]
    w_hwio = jnp.pad(jnp.transpose(weight, (2, 3, 1, 0)),
                     ((0, 0), (0, 0), (0, 0), (0, CP - Cout)))
    b_p = jnp.pad(bias, (0, CP - Cout)).reshape(1, CP)

    TH = _pick_row_tile(Ho, Wo, CP)
    n_h = Ho // TH
    rows = TH * Wo
    grid = (N, n_h)
    dims = ("parallel", "parallel")

    conv_dtype = jnp.float32 if use_bn else x_nchw.dtype
    conv_kernel = functools.partial(
        _conv_kernel, K=K, stride=stride, dilation=dilation,
        TH=TH, Wo=Wo, use_bn=use_bn, activation=activation)

    in_specs = [
        pl.BlockSpec((1, Hp, Wp, Cin), lambda n, h: (n, 0, 0, 0)),   # one image, resident per n
        pl.BlockSpec((K, K, Cin, CP), lambda n, h: (0, 0, 0, 0)),    # weights resident
        pl.BlockSpec((1, CP), lambda n, h: (0, 0)),                  # bias resident
    ]
    conv_out_spec = pl.BlockSpec((1, rows, CP), lambda n, h: (n, h, 0))

    if use_bn:
        out_shape = (jax.ShapeDtypeStruct((N, Ho * Wo, CP), conv_dtype),
                     jax.ShapeDtypeStruct((N, n_h, 2, CP), jnp.float32))
        out_specs = (conv_out_spec,
                     pl.BlockSpec((1, 1, 2, CP), lambda n, h: (n, h, 0, 0)))
    else:
        out_shape = jax.ShapeDtypeStruct((N, Ho * Wo, CP), conv_dtype)
        out_specs = conv_out_spec

    conv_result = pl.pallas_call(
        conv_kernel,
        out_shape=out_shape,
        grid=grid,
        in_specs=in_specs,
        out_specs=out_specs,
        compiler_params=pltpu.CompilerParams(dimension_semantics=dims),
    )(x_pad, w_hwio, b_p)

    if use_bn:
        conv_flat, stats = conv_result
        # Tiny cross-tile BN finalization (O(grid * CP) elements) -> fused scale/shift.
        psum = jnp.sum(stats, axis=(0, 1))                  # (2, CP)
        count = jnp.float32(N * Ho * Wo)
        mean = psum[0] / count
        var = jnp.maximum(psum[1] / count - mean * mean, 0.0)   # biased batch var
        inv = jax.lax.rsqrt(var + eps)
        gamma_p = jnp.pad(gamma, (0, CP - Cout)).astype(jnp.float32)
        beta_p = jnp.pad(beta, (0, CP - Cout)).astype(jnp.float32)
        scale = (gamma_p * inv).reshape(1, CP)
        shift = (beta_p - mean * gamma_p * inv).reshape(1, CP)

        bn_kernel = functools.partial(_bn_act_kernel, activation=activation)
        out_flat = pl.pallas_call(
            bn_kernel,
            out_shape=jax.ShapeDtypeStruct((N, Ho * Wo, CP), x_nchw.dtype),
            grid=grid,
            in_specs=[
                pl.BlockSpec((1, rows, CP), lambda n, h: (n, h, 0)),
                pl.BlockSpec((1, CP), lambda n, h: (0, 0)),
                pl.BlockSpec((1, CP), lambda n, h: (0, 0)),
            ],
            out_specs=pl.BlockSpec((1, rows, CP), lambda n, h: (n, h, 0)),
            compiler_params=pltpu.CompilerParams(dimension_semantics=dims),
        )(conv_flat, scale, shift)
    else:
        out_flat = conv_result

    out_nhwc = out_flat.reshape(N, Ho, Wo, CP)[:, :, :, :Cout]
    return jnp.transpose(out_nhwc, (0, 3, 1, 2))   # back to NCHW


def _reference(x_nchw, weight, bias, gamma, beta, *,
               stride, padding, dilation, use_bn, activation, eps=1e-5):
    out = jax.lax.conv_general_dilated(
        x_nchw.astype(jnp.float32), weight.astype(jnp.float32),
        window_strides=(stride, stride),
        padding=((padding, padding), (padding, padding)),
        rhs_dilation=(dilation, dilation),
        dimension_numbers=("NCHW", "OIHW", "NCHW"),
    ) + bias.reshape(1, -1, 1, 1)
    if use_bn:
        mean = jnp.mean(out, axis=(0, 2, 3), keepdims=True)
        var = jnp.mean((out - mean) ** 2, axis=(0, 2, 3), keepdims=True)
        out = (out - mean) * jax.lax.rsqrt(var + eps)
        out = out * gamma.reshape(1, -1, 1, 1) + beta.reshape(1, -1, 1, 1)
    if activation == "relu":
        out = jnp.maximum(out, 0.0)
    return out.astype(x_nchw.dtype)


if __name__ == "__main__":
    # Module config: BaseSIConv(in_channels=4, out_channels=8, kernel_size=3,
    #                           stride=1, padding=1, use_bn=True, activation=ReLU)
    N, Cin, H, W = 2, 4, 16, 16
    Cout, K = 8, 3
    stride, padding, dilation = 1, 1, 1
    use_bn, activation = True, "relu"

    key = jax.random.PRNGKey(0)
    kx, kw, kb = jax.random.split(key, 3)

    x = jax.random.normal(kx, (N, Cin, H, W), dtype=jnp.float32)
    fan_in = Cin * K * K
    weight = jax.random.normal(kw, (Cout, Cin, K, K), dtype=jnp.float32) / jnp.sqrt(fan_in)
    bias = jax.random.normal(kb, (Cout,), dtype=jnp.float32) * 0.1
    gamma = jnp.ones((Cout,), dtype=jnp.float32)   # BN weight init
    beta = jnp.zeros((Cout,), dtype=jnp.float32)   # BN bias init

    out = base_si_conv(x, weight, bias, gamma, beta,
                       stride=stride, padding=padding, dilation=dilation,
                       use_bn=use_bn, activation=activation)
    out = jax.block_until_ready(out)

    ref = _reference(x, weight, bias, gamma, beta,
                     stride=stride, padding=padding, dilation=dilation,
                     use_bn=use_bn, activation=activation)
    assert out.shape == (N, Cout, H, W)
    assert jnp.allclose(out, ref, rtol=1e-4, atol=1e-4)

    print("KERNEL_OK")
</pallas_src>

<mosaic_0001>
module attributes {stable_mosaic.version = 11 : i64} {
  func.func @_conv_kernel(%arg0: i32, %arg1: i32, %arg2: memref<1x18x18x4xf32, #tpu.memory_space<vmem>>, %arg3: memref<3x3x4x128xf32, #tpu.memory_space<vmem>>, %arg4: memref<1x128xf32, #tpu.memory_space<vmem>>, %arg5: memref<1x256x128xf32, #tpu.memory_space<vmem>>, %arg6: memref<1x1x2x128xf32, #tpu.memory_space<vmem>>) attributes {dimension_semantics = [#tpu.dimension_semantics<parallel>, #tpu.dimension_semantics<parallel>], iteration_bounds = array<i64: 2, 1>, scalar_prefetch = 0 : i64, scratch_operands = 0 : i64, tpu.core_type = #tpu.core_type<tc>, window_params = [{transform_indices = @transform_0, window_bounds = array<i64: 1, 18, 18, 4>}, {pipeline_mode = #tpu.pipeline_mode<synchronous>, transform_indices = @transform_1, window_bounds = array<i64: 3, 3, 4, 128>}, {pipeline_mode = #tpu.pipeline_mode<synchronous>, transform_indices = @transform_2, window_bounds = array<i64: 1, 128>}, {transform_indices = @transform_3, window_bounds = array<i64: 1, 256, 128>}, {transform_indices = @transform_4, window_bounds = array<i64: 1, 1, 2, 128>}]} {
    %c16_i32 = arith.constant 16 : i32
    %0 = arith.muli %arg1, %c16_i32 : i32
    %1 = tpu.assume_multiple %0, 8 : i32
    %cst = arith.constant 0.000000e+00 : f32
    %2 = vector.broadcast %cst : f32 to vector<256x128xf32>
    %c0_i32 = arith.constant 0 : i32
    %3 = arith.addi %1, %c0_i32 : i32
    %c0 = arith.constant 0 : index
    %4 = arith.index_cast %3 : i32 to index
    %c0_0 = arith.constant 0 : index
    %c0_1 = arith.constant 0 : index
    %5 = vector.load %arg2[%c0, %4, %c0_0, %c0_1] : memref<1x18x18x4xf32, #tpu.memory_space<vmem>>, vector<1x16x16x4xf32>
    %6 = vector.shape_cast %5 : vector<1x16x16x4xf32> to vector<16x16x4xf32>
    %7 = vector.shape_cast %6 : vector<16x16x4xf32> to vector<256x4xf32>
    %c0_2 = arith.constant 0 : index
    %c0_3 = arith.constant 0 : index
    %c0_4 = arith.constant 0 : index
    %c0_5 = arith.constant 0 : index
    %8 = vector.load %arg3[%c0_2, %c0_3, %c0_4, %c0_5] : memref<3x3x4x128xf32, #tpu.memory_space<vmem>>, vector<1x1x4x128xf32>
    %9 = vector.shape_cast %8 : vector<1x1x4x128xf32> to vector<4x128xf32>
    %cst_6 = arith.constant dense<0.000000e+00> : vector<256x128xf32>
    %10 = tpu.matmul %7, %9, %cst_6 {dimension_numbers = #tpu.dot_dimension_numbers<[1], [0], [0], [1], [0, 0, 1, 1], [], []>} : vector<256x4xf32>, vector<4x128xf32>, vector<256x128xf32> -> vector<256x128xf32>
    %11 = arith.addf %2, %10 : vector<256x128xf32>
    %c0_i32_7 = arith.constant 0 : i32
    %12 = arith.addi %1, %c0_i32_7 : i32
    %c0_8 = arith.constant 0 : index
    %13 = arith.index_cast %12 : i32 to index
    %c1 = arith.constant 1 : index
    %c0_9 = arith.constant 0 : index
    %14 = vector.load %arg2[%c0_8, %13, %c1, %c0_9] : memref<1x18x18x4xf32, #tpu.memory_space<vmem>>, vector<1x16x16x4xf32>
    %15 = vector.shape_cast %14 : vector<1x16x16x4xf32> to vector<16x16x4xf32>
    %16 = vector.shape_cast %15 : vector<16x16x4xf32> to vector<256x4xf32>
    %c0_10 = arith.constant 0 : index
    %c1_11 = arith.constant 1 : index
    %c0_12 = arith.constant 0 : index
    %c0_13 = arith.constant 0 : index
    %17 = vector.load %arg3[%c0_10, %c1_11, %c0_12, %c0_13] : memref<3x3x4x128xf32, #tpu.memory_space<vmem>>, vector<1x1x4x128xf32>
    %18 = vector.shape_cast %17 : vector<1x1x4x128xf32> to vector<4x128xf32>
    %cst_14 = arith.constant dense<0.000000e+00> : vector<256x128xf32>
    %19 = tpu.matmul %16, %18, %cst_14 {dimension_numbers = #tpu.dot_dimension_numbers<[1], [0], [0], [1], [0, 0, 1, 1], [], []>} : vector<256x4xf32>, vector<4x128xf32>, vector<256x128xf32> -> vector<256x128xf32>
    %20 = arith.addf %11, %19 : vector<256x128xf32>
    %c0_i32_15 = arith.constant 0 : i32
    %21 = arith.addi %1, %c0_i32_15 : i32
    %c0_16 = arith.constant 0 : index
    %22 = arith.index_cast %21 : i32 to index
    %c2 = arith.constant 2 : index
    %c0_17 = arith.constant 0 : index
    %23 = vector.load %arg2[%c0_16, %22, %c2, %c0_17] : memref<1x18x18x4xf32, #tpu.memory_space<vmem>>, vector<1x16x16x4xf32>
    %24 = vector.shape_cast %23 : vector<1x16x16x4xf32> to vector<16x16x4xf32>
    %25 = vector.shape_cast %24 : vector<16x16x4xf32> to vector<256x4xf32>
    %c0_18 = arith.constant 0 : index
    %c2_19 = arith.constant 2 : index
    %c0_20 = arith.constant 0 : index
    %c0_21 = arith.constant 0 : index
    %26 = vector.load %arg3[%c0_18, %c2_19, %c0_20, %c0_21] : memref<3x3x4x128xf32, #tpu.memory_space<vmem>>, vector<1x1x4x128xf32>
    %27 = vector.shape_cast %26 : vector<1x1x4x128xf32> to vector<4x128xf32>
    %cst_22 = arith.constant dense<0.000000e+00> : vector<256x128xf32>
    %28 = tpu.matmul %25, %27, %cst_22 {dimension_numbers = #tpu.dot_dimension_numbers<[1], [0], [0], [1], [0, 0, 1, 1], [], []>} : vector<256x4xf32>, vector<4x128xf32>, vector<256x128xf32> -> vector<256x128xf32>
    %29 = arith.addf %20, %28 : vector<256x128xf32>
    %c1_i32 = arith.constant 1 : i32
    %30 = arith.addi %1, %c1_i32 : i32
    %c0_23 = arith.constant 0 : index
    %31 = arith.index_cast %30 : i32 to index
    %c0_24 = arith.constant 0 : index
    %c0_25 = arith.constant 0 : index
    %32 = vector.load %arg2[%c0_23, %31, %c0_24, %c0_25] : memref<1x18x18x4xf32, #tpu.memory_space<vmem>>, vector<1x16x16x4xf32>
    %33 = vector.shape_cast %32 : vector<1x16x16x4xf32> to vector<16x16x4xf32>
    %34 = vector.shape_cast %33 : vector<16x16x4xf32> to vector<256x4xf32>
    %c1_26 = arith.constant 1 : index
    %c0_27 = arith.constant 0 : index
    %c0_28 = arith.constant 0 : index
    %c0_29 = arith.constant 0 : index
    %35 = vector.load %arg3[%c1_26, %c0_27, %c0_28, %c0_29] : memref<3x3x4x128xf32, #tpu.memory_space<vmem>>, vector<1x1x4x128xf32>
    %36 = vector.shape_cast %35 : vector<1x1x4x128xf32> to vector<4x128xf32>
    %cst_30 = arith.constant dense<0.000000e+00> : vector<256x128xf32>
    %37 = tpu.matmul %34, %36, %cst_30 {dimension_numbers = #tpu.dot_dimension_numbers<[1], [0], [0], [1], [0, 0, 1, 1], [], []>} : vector<256x4xf32>, vector<4x128xf32>, vector<256x128xf32> -> vector<256x128xf32>
    %38 = arith.addf %29, %37 : vector<256x128xf32>
    %c1_i32_31 = arith.constant 1 : i32
    %39 = arith.addi %1, %c1_i32_31 : i32
    %c0_32 = arith.constant 0 : index
    %40 = arith.index_cast %39 : i32 to index
    %c1_33 = arith.constant 1 : index
    %c0_34 = arith.constant 0 : index
    %41 = vector.load %arg2[%c0_32, %40, %c1_33, %c0_34] : memref<1x18x18x4xf32, #tpu.memory_space<vmem>>, vector<1x16x16x4xf32>
    %42 = vector.shape_cast %41 : vector<1x16x16x4xf32> to vector<16x16x4xf32>
    %43 = vector.shape_cast %42 : vector<16x16x4xf32> to vector<256x4xf32>
    %c1_35 = arith.constant 1 : index
    %c1_36 = arith.constant 1 : index
    %c0_37 = arith.constant 0 : index
    %c0_38 = arith.constant 0 : index
    %44 = vector.load %arg3[%c1_35, %c1_36, %c0_37, %c0_38] : memref<3x3x4x128xf32, #tpu.memory_space<vmem>>, vector<1x1x4x128xf32>
    %45 = vector.shape_cast %44 : vector<1x1x4x128xf32> to vector<4x128xf32>
    %cst_39 = arith.constant dense<0.000000e+00> : vector<256x128xf32>
    %46 = tpu.matmul %43, %45, %cst_39 {dimension_numbers = #tpu.dot_dimension_numbers<[1], [0], [0], [1], [0, 0, 1, 1], [], []>} : vector<256x4xf32>, vector<4x128xf32>, vector<256x128xf32> -> vector<256x128xf32>
    %47 = arith.addf %38, %46 : vector<256x128xf32>
    %c1_i32_40 = arith.constant 1 : i32
    %48 = arith.addi %1, %c1_i32_40 : i32
    %c0_41 = arith.constant 0 : index
    %49 = arith.index_cast %48 : i32 to index
    %c2_42 = arith.constant 2 : index
    %c0_43 = arith.constant 0 : index
    %50 = vector.load %arg2[%c0_41, %49, %c2_42, %c0_43] : memref<1x18x18x4xf32, #tpu.memory_space<vmem>>, vector<1x16x16x4xf32>
    %51 = vector.shape_cast %50 : vector<1x16x16x4xf32> to vector<16x16x4xf32>
    %52 = vector.shape_cast %51 : vector<16x16x4xf32> to vector<256x4xf32>
    %c1_44 = arith.constant 1 : index
    %c2_45 = arith.constant 2 : index
    %c0_46 = arith.constant 0 : index
    %c0_47 = arith.constant 0 : index
    %53 = vector.load %arg3[%c1_44, %c2_45, %c0_46, %c0_47] : memref<3x3x4x128xf32, #tpu.memory_space<vmem>>, vector<1x1x4x128xf32>
    %54 = vector.shape_cast %53 : vector<1x1x4x128xf32> to vector<4x128xf32>
    %cst_48 = arith.constant dense<0.000000e+00> : vector<256x128xf32>
    %55 = tpu.matmul %52, %54, %cst_48 {dimension_numbers = #tpu.dot_dimension_numbers<[1], [0], [0], [1], [0, 0, 1, 1], [], []>} : vector<256x4xf32>, vector<4x128xf32>, vector<256x128xf32> -> vector<256x128xf32>
    %56 = arith.addf %47, %55 : vector<256x128xf32>
    %c2_i32 = arith.constant 2 : i32
    %57 = arith.addi %1, %c2_i32 : i32
    %c0_49 = arith.constant 0 : index
    %58 = arith.index_cast %57 : i32 to index
    %c0_50 = arith.constant 0 : index
    %c0_51 = arith.constant 0 : index
    %59 = vector.load %arg2[%c0_49, %58, %c0_50, %c0_51] : memref<1x18x18x4xf32, #tpu.memory_space<vmem>>, vector<1x16x16x4xf32>
    %60 = vector.shape_cast %59 : vector<1x16x16x4xf32> to vector<16x16x4xf32>
    %61 = vector.shape_cast %60 : vector<16x16x4xf32> to vector<256x4xf32>
    %c2_52 = arith.constant 2 : index
    %c0_53 = arith.constant 0 : index
    %c0_54 = arith.constant 0 : index
    %c0_55 = arith.constant 0 : index
    %62 = vector.load %arg3[%c2_52, %c0_53, %c0_54, %c0_55] : memref<3x3x4x128xf32, #tpu.memory_space<vmem>>, vector<1x1x4x128xf32>
    %63 = vector.shape_cast %62 : vector<1x1x4x128xf32> to vector<4x128xf32>
    %cst_56 = arith.constant dense<0.000000e+00> : vector<256x128xf32>
    %64 = tpu.matmul %61, %63, %cst_56 {dimension_numbers = #tpu.dot_dimension_numbers<[1], [0], [0], [1], [0, 0, 1, 1], [], []>} : vector<256x4xf32>, vector<4x128xf32>, vector<256x128xf32> -> vector<256x128xf32>
    %65 = arith.addf %56, %64 : vector<256x128xf32>
    %c2_i32_57 = arith.constant 2 : i32
    %66 = arith.addi %1, %c2_i32_57 : i32
    %c0_58 = arith.constant 0 : index
    %67 = arith.index_cast %66 : i32 to index
    %c1_59 = arith.constant 1 : index
    %c0_60 = arith.constant 0 : index
    %68 = vector.load %arg2[%c0_58, %67, %c1_59, %c0_60] : memref<1x18x18x4xf32, #tpu.memory_space<vmem>>, vector<1x16x16x4xf32>
    %69 = vector.shape_cast %68 : vector<1x16x16x4xf32> to vector<16x16x4xf32>
    %70 = vector.shape_cast %69 : vector<16x16x4xf32> to vector<256x4xf32>
    %c2_61 = arith.constant 2 : index
    %c1_62 = arith.constant 1 : index
    %c0_63 = arith.constant 0 : index
    %c0_64 = arith.constant 0 : index
    %71 = vector.load %arg3[%c2_61, %c1_62, %c0_63, %c0_64] : memref<3x3x4x128xf32, #tpu.memory_space<vmem>>, vector<1x1x4x128xf32>
    %72 = vector.shape_cast %71 : vector<1x1x4x128xf32> to vector<4x128xf32>
    %cst_65 = arith.constant dense<0.000000e+00> : vector<256x128xf32>
    %73 = tpu.matmul %70, %72, %cst_65 {dimension_numbers = #tpu.dot_dimension_numbers<[1], [0], [0], [1], [0, 0, 1, 1], [], []>} : vector<256x4xf32>, vector<4x128xf32>, vector<256x128xf32> -> vector<256x128xf32>
    %74 = arith.addf %65, %73 : vector<256x128xf32>
    %c2_i32_66 = arith.constant 2 : i32
    %75 = arith.addi %1, %c2_i32_66 : i32
    %c0_67 = arith.constant 0 : index
    %76 = arith.index_cast %75 : i32 to index
    %c2_68 = arith.constant 2 : index
    %c0_69 = arith.constant 0 : index
    %77 = vector.load %arg2[%c0_67, %76, %c2_68, %c0_69] : memref<1x18x18x4xf32, #tpu.memory_space<vmem>>, vector<1x16x16x4xf32>
    %78 = vector.shape_cast %77 : vector<1x16x16x4xf32> to vector<16x16x4xf32>
    %79 = vector.shape_cast %78 : vector<16x16x4xf32> to vector<256x4xf32>
    %c2_70 = arith.constant 2 : index
    %c2_71 = arith.constant 2 : index
    %c0_72 = arith.constant 0 : index
    %c0_73 = arith.constant 0 : index
    %80 = vector.load %arg3[%c2_70, %c2_71, %c0_72, %c0_73] : memref<3x3x4x128xf32, #tpu.memory_space<vmem>>, vector<1x1x4x128xf32>
    %81 = vector.shape_cast %80 : vector<1x1x4x128xf32> to vector<4x128xf32>
    %cst_74 = arith.constant dense<0.000000e+00> : vector<256x128xf32>
    %82 = tpu.matmul %79, %81, %cst_74 {dimension_numbers = #tpu.dot_dimension_numbers<[1], [0], [0], [1], [0, 0, 1, 1], [], []>} : vector<256x4xf32>, vector<4x128xf32>, vector<256x128xf32> -> vector<256x128xf32>
    %83 = arith.addf %74, %82 : vector<256x128xf32>
    %cst_75 = arith.constant dense<0.000000e+00> : vector<128xf32>
    %84 = vector.multi_reduction <add>, %83, %cst_75 [0] : vector<256x128xf32> to vector<128xf32>
    %85 = vector.shape_cast %84 : vector<128xf32> to vector<1x128xf32>
    %86 = arith.mulf %83, %83 : vector<256x128xf32>
    %cst_76 = arith.constant dense<0.000000e+00> : vector<128xf32>
    %87 = vector.multi_reduction <add>, %86, %cst_76 [0] : vector<256x128xf32> to vector<128xf32>
    %88 = vector.shape_cast %87 : vector<128xf32> to vector<1x128xf32>
    %c0_77 = arith.constant 0 : index
    %c0_78 = arith.constant 0 : index
    %c0_79 = arith.constant 0 : index
    %c0_80 = arith.constant 0 : index
    %89 = vector.load %arg6[%c0_77, %c0_78, %c0_79, %c0_80] : memref<1x1x2x128xf32, #tpu.memory_space<vmem>>, vector<1x1x1x128xf32>
    %90 = vector.shape_cast %89 : vector<1x1x1x128xf32> to vector<1x128xf32>
    %91 = vector.shape_cast %85 : vector<1x128xf32> to vector<1x1x1x128xf32>
    tpu.vector_store %arg6[%c0_77, %c0_78, %c0_79, %c0_80], %91 {strides = array<i32>} : memref<1x1x2x128xf32, #tpu.memory_space<vmem>>, vector<1x1x1x128xf32>,
    %c0_81 = arith.constant 0 : index
    %c0_82 = arith.constant 0 : index
    %c1_83 = arith.constant 1 : index
    %c0_84 = arith.constant 0 : index
    %92 = vector.load %arg6[%c0_81, %c0_82, %c1_83, %c0_84] : memref<1x1x2x128xf32, #tpu.memory_space<vmem>>, vector<1x1x1x128xf32>
    %93 = vector.shape_cast %92 : vector<1x1x1x128xf32> to vector<1x128xf32>
    %94 = vector.shape_cast %88 : vector<1x128xf32> to vector<1x1x1x128xf32>
    tpu.vector_store %arg6[%c0_81, %c0_82, %c1_83, %c0_84], %94 {strides = array<i32>} : memref<1x1x2x128xf32, #tpu.memory_space<vmem>>, vector<1x1x1x128xf32>,
    %c0_85 = arith.constant 0 : index
    %c0_86 = arith.constant 0 : index
    %c0_87 = arith.constant 0 : index
    %95 = vector.load %arg5[%c0_85, %c0_86, %c0_87] : memref<1x256x128xf32, #tpu.memory_space<vmem>>, vector<1x256x128xf32>
    %96 = vector.shape_cast %95 : vector<1x256x128xf32> to vector<256x128xf32>
    %97 = vector.shape_cast %83 : vector<256x128xf32> to vector<1x256x128xf32>
    tpu.vector_store %arg5[%c0_85, %c0_86, %c0_87], %97 {strides = array<i32>} : memref<1x256x128xf32, #tpu.memory_space<vmem>>, vector<1x256x128xf32>,
    return
  }
  func.func @transform_0(%arg0: i32, %arg1: i32) -> (i32, i32, i32, i32) {
    %c0_i32 = arith.constant 0 : i32
    %c0_i32_0 = arith.constant 0 : i32
    %c0_i32_1 = arith.constant 0 : i32
    %c0_i32_2 = arith.constant 0 : i32
    return %arg0, %c0_i32, %c0_i32_0, %c0_i32_1 : i32, i32, i32, i32
  }
  func.func @transform_1(%arg0: i32, %arg1: i32) -> (i32, i32, i32, i32) {
    %c0_i32 = arith.constant 0 : i32
    %c0_i32_0 = arith.constant 0 : i32
    %c0_i32_1 = arith.constant 0 : i32
    %c0_i32_2 = arith.constant 0 : i32
    %c0_i32_3 = arith.constant 0 : i32
    return %c0_i32, %c0_i32_0, %c0_i32_1, %c0_i32_2 : i32, i32, i32, i32
  }
  func.func @transform_2(%arg0: i32, %arg1: i32) -> (i32, i32) {
    %c0_i32 = arith.constant 0 : i32
    %c0_i32_0 = arith.constant 0 : i32
    %c0_i32_1 = arith.constant 0 : i32
    return %c0_i32, %c0_i32_0 : i32, i32
  }
  func.func @transform_3(%arg0: i32, %arg1: i32) -> (i32, i32, i32) {
    %c0_i32 = arith.constant 0 : i32
    %c0_i32_0 = arith.constant 0 : i32
    return %arg0, %arg1, %c0_i32 : i32, i32, i32
  }
  func.func @transform_4(%arg0: i32, %arg1: i32) -> (i32, i32, i32, i32) {
    %c0_i32 = arith.constant 0 : i32
    %c0_i32_0 = arith.constant 0 : i32
    %c0_i32_1 = arith.constant 0 : i32
    return %arg0, %arg1, %c0_i32, %c0_i32_0 : i32, i32, i32, i32
  }
}

</mosaic_0001>

<llo_original>
// kernel: tpu_custom_call.1
$region0: #{tpu_custom_call.1}
  #allocation0 [shape = 'u32[]', space=smem, size = 0x4, offset = 0x4, fixed_abs, tag = 'smem constant byte address 0x4 - core index']
  #allocation1 [shape = 'u32[144,128]{1,0:T(1,128)}', space=vmem, size = 0x12000, scoped, tag = 'internal scratch']
  %s0 = inlined_call_operand.vmem [shape: f32[2,18,18,4], index: 0, kind: input, shape index: {}]
  %s1 = inlined_call_operand.vmem [shape: f32[3,3,4,128], index: 1, kind: input, shape index: {}]
  %s2 = inlined_call_operand.vmem [shape: f32[1,128], index: 2, kind: input, shape index: {}]
  %s3 = inlined_call_operand.hbm [shape: f32[2,256,128], index: 3, kind: output, shape index: {0}]
  %s4 = inlined_call_operand.hbm [shape: f32[2,1,2,128], index: 4, kind: output, shape index: {1}]
  %5 = xla_tuple %s3, %s4
  %s6 = sld [smem:[#allocation0]]
  $region53: #{tpu_custom_call.1} parent=0
    _
  %s8 = ssub.s32 1, %s6
  %s9 = scalar_select 0, %s8, %s6
  $region1: #{tpu_custom_call.1} parent=0
    #allocation2 [shape = 'u8[262144]{0}', space=vmem, size = 0x40000, scoped, tag = 'output window, operand 0']
    #allocation3 [shape = 's32[2]{0}', space=sflag, size = 0x8, scoped, tag = 'scoped memory for tpu_custom_call.1']
    #allocation4 [shape = 'u8[2048]{0}', space=vmem, size = 0x800, scoped, tag = 'output window, operand 1']
    #allocation5 [shape = 's32[2]{0}', space=sflag, size = 0x8, scoped, tag = 'scoped memory for tpu_custom_call.1']
    %10 = vsyncpa [#allocation3], 0
    %s11 = scalar_lea.sflag [#allocation3], 1
    %12 = vsyncpa %s11, 0
    %13 = vsyncpa [#allocation5], 0
    %s14 = scalar_lea.sflag [#allocation5], 1
    %15 = vsyncpa %s14, 0
    loop: start=0, step=1, limit=4
    $region2: #{tpu_custom_call.1} parent=1 // loop_pre_header
      _
    $region3: #{tpu_custom_call.1} parent=1 // loop_header
      %s17 = sphi 0, %s21
      %p18 = scmp.ge.s32.totalorder %s17, 4
      %s24 = sphi 0, %s36
      %s25 = sphi 0, %s32
      %s26 = sphi 0, %s24
      %s27 = sphi 0, %s25
      %s28 = sphi 0, %s26
      %s29 = sphi 0, %s27
      %s39 = sphi 0, %s41
      %s42 = sphi 0, %s39
      %s43 = sphi 0, %s42
      %s59 = sphi 0, %s43
      %s63 = sphi 0, %s63
      %s65 = sphi 0, %s63
      %s66 = sphi 0, %s65
      %s80 = sphi 0, %s66
      %s84 = sphi 0, %s84
      %s86 = sphi 0, %s84
      %s87 = sphi 0, %s86
      %s101 = sphi 0, %s87
      %s109 = sphi 0, %s111
      %s112 = sphi 0, %s109
      %s113 = sphi 0, %s112
      %s129 = sphi 0, %s113
      %s137 = sphi 0, %s139
      %s140 = sphi 0, %s137
      %s141 = sphi 0, %s140
      %s157 = sphi 0, %s141
    $region4: #{tpu_custom_call.1} parent=1 // loop_header_branch
      %20 = sbr.rel (%p18) target = $region8
    $region5: #{tpu_custom_call.1} parent=1 // loop_body
      %s22 = ssub.s32 %s17, 1
      %s23 = ssub.s32 %s17, 2
      %s30 = sadd.s32 1, %s25
      %p31 = scmp.ge.s32.totalorder %s30, 1
      %s32 = scalar_select %p31, 0, %s30
      %s33 = sadd.s32 1, %s24
      %s34 = scalar_select %p31, %s33, %s24
      %p35 = scmp.ge.s32.totalorder %s34, 2
      %s36 = scalar_select %p35, 0, %s34
      %s37 = ssub.s32 %s24, %s36
      %p38 = scmp.eq.s32.totalorder %s37, 0
      %s40 = sadd.s32 %s39, 1
      %s41 = scalar_select %p38, %s39, %s40
      %p44 = pneg %p38
      %p45 = scmp.eq.s32.totalorder %s17, 1
      %p46 = por %p44, %p45
      %p47 = scmp.ne.s32.totalorder %s39, %s42
      %p48 = scmp.eq.s32.totalorder %s17, 0
      %p49 = por %p47, %p48
      %p50 = scmp.ne.s32.totalorder %s39, %s42
      %p51 = scmp.eq.s32.totalorder %s22, 1
      %p52 = por %p50, %p51
      %p53 = scmp.ne.s32.totalorder %s42, %s43
      %p54 = scmp.eq.s32.totalorder %s22, 0
      %p55 = por %p53, %p54
      %p56 = scmp.ne.s32.totalorder %s42, %s43
      %p57 = scmp.eq.s32.totalorder %s23, 1
      %p58 = por %p56, %p57
      %p60 = scmp.ne.s32.totalorder %s43, %s59
      %p61 = scmp.eq.s32.totalorder %s23, 0
      %p62 = por %p60, %p61
      %s64 = sadd.s32 %s63, 1
      %p67 = scmp.eq.s32.totalorder %s17, 1
      %p68 = scmp.ne.s32.totalorder %s63, %s65
      %p69 = scmp.eq.s32.totalorder %s17, 0
      %p70 = por %p68, %p69
      %p71 = scmp.ne.s32.totalorder %s63, %s65
      %p72 = scmp.eq.s32.totalorder %s22, 1
      %p73 = por %p71, %p72
      %p74 = scmp.ne.s32.totalorder %s65, %s66
      %p75 = scmp.eq.s32.totalorder %s22, 0
      %p76 = por %p74, %p75
      %p77 = scmp.ne.s32.totalorder %s65, %s66
      %p78 = scmp.eq.s32.totalorder %s23, 1
      %p79 = por %p77, %p78
      %p81 = scmp.ne.s32.totalorder %s66, %s80
      %p82 = scmp.eq.s32.totalorder %s23, 0
      %p83 = por %p81, %p82
      %s85 = sadd.s32 %s84, 1
      %p88 = scmp.eq.s32.totalorder %s17, 1
      %p89 = scmp.ne.s32.totalorder %s84, %s86
      %p90 = scmp.eq.s32.totalorder %s17, 0
      %p91 = por %p89, %p90
      %p92 = scmp.ne.s32.totalorder %s84, %s86
      %p93 = scmp.eq.s32.totalorder %s22, 1
      %p94 = por %p92, %p93
      %p95 = scmp.ne.s32.totalorder %s86, %s87
      %p96 = scmp.eq.s32.totalorder %s22, 0
      %p97 = por %p95, %p96
      %p98 = scmp.ne.s32.totalorder %s86, %s87
      %p99 = scmp.eq.s32.totalorder %s23, 1
      %p100 = por %p98, %p99
      %p102 = scmp.ne.s32.totalorder %s87, %s101
      %p103 = scmp.eq.s32.totalorder %s23, 0
      %p104 = por %p102, %p103
      %s105 = ssub.s32 %s24, %s36
      %s106 = ssub.s32 %s25, %s32
      %s107 = sor.u32 %s105, %s106
      %p108 = scmp.eq.s32.totalorder %s107, 0
      %s110 = sadd.s32 %s109, 1
      %s111 = scalar_select %p108, %s109, %s110
      %p114 = pneg %p108
      %p115 = scmp.eq.s32.totalorder %s17, 1
      %p116 = por %p114, %p115
      %p117 = scmp.ne.s32.totalorder %s109, %s112
      %p118 = scmp.eq.s32.totalorder %s17, 0
      %p119 = por %p117, %p118
      %p120 = scmp.ne.s32.totalorder %s109, %s112
      %p121 = scmp.eq.s32.totalorder %s22, 1
      %p122 = por %p120, %p121
      %p123 = scmp.ne.s32.totalorder %s112, %s113
      %p124 = scmp.eq.s32.totalorder %s22, 0
      %p125 = por %p123, %p124
      %p126 = scmp.ne.s32.totalorder %s112, %s113
      %p127 = scmp.eq.s32.totalorder %s23, 1
      %p128 = por %p126, %p127
      %p130 = scmp.ne.s32.totalorder %s113, %s129
      %p131 = scmp.eq.s32.totalorder %s23, 0
      %p132 = por %p130, %p131
      %s133 = ssub.s32 %s24, %s36
      %s134 = ssub.s32 %s25, %s32
      %s135 = sor.u32 %s133, %s134
      %p136 = scmp.eq.s32.totalorder %s135, 0
      %s138 = sadd.s32 %s137, 1
      %s139 = scalar_select %p136, %s137, %s138
      %p142 = pneg %p136
      %p143 = scmp.eq.s32.totalorder %s17, 1
      %p144 = por %p142, %p143
      %p145 = scmp.ne.s32.totalorder %s137, %s140
      %p146 = scmp.eq.s32.totalorder %s17, 0
      %p147 = por %p145, %p146
      %p148 = scmp.ne.s32.totalorder %s137, %s140
      %p149 = scmp.eq.s32.totalorder %s22, 1
      %p150 = por %p148, %p149
      %p151 = scmp.ne.s32.totalorder %s140, %s141
      %p152 = scmp.eq.s32.totalorder %s22, 0
      %p153 = por %p151, %p152
      %p154 = scmp.ne.s32.totalorder %s140, %s141
      %p155 = scmp.eq.s32.totalorder %s23, 1
      %p156 = por %p154, %p155
      %p158 = scmp.ne.s32.totalorder %s141, %s157
      %p159 = scmp.eq.s32.totalorder %s23, 0
      %p160 = por %p158, %p159
      %p161 = scmp.le.s32.totalorder 1, %s17
      %p162 = scmp.lt.s32.totalorder %s17, 3
      %p163 = pnand %p161, %p162
      %p164 = pneg %p163
      // Predicated region
      $region9: #{tpu_custom_call.1} parent=5 // pred_check
        _
      $region10: #{tpu_custom_call.1} parent=5 // pred_check_branch
        %166 = sbr.rel (%p163) target = $region12
      $region11: #{tpu_custom_call.1} parent=5 // pred_region
        %s167 = ssub.s32 %s17, 1
        // Predicated region
        $region13: #{tpu_custom_call.1} parent=11 // pred_check
          %p168 = pneg %p76
        $region14: #{tpu_custom_call.1} parent=11 // pred_check_branch
          %170 = sbr.rel (%p168) target = $region16
        $region15: #{tpu_custom_call.1} parent=11 // pred_region
          _
        $region16: #{tpu_custom_call.1} parent=11 // pred_fallthru
          _
        // Predicated region
        $region17: #{tpu_custom_call.1} parent=11 // pred_check
          %p171 = pneg %p97
        $region18: #{tpu_custom_call.1} parent=11 // pred_check_branch
          %173 = sbr.rel (%p171) target = $region20
        $region19: #{tpu_custom_call.1} parent=11 // pred_region
          _
        $region20: #{tpu_custom_call.1} parent=11 // pred_fallthru
          _
      $region12: #{tpu_custom_call.1} parent=5 // pred_fallthru
        _
      %p174 = scmp.lt.s32.totalorder %s17, 2
      // Predicated region
      $region21: #{tpu_custom_call.1} parent=5 // pred_check
        %p175 = pneg %p174
      $region22: #{tpu_custom_call.1} parent=5 // pred_check_branch
        %177 = sbr.rel (%p175) target = $region24
      $region23: #{tpu_custom_call.1} parent=5 // pred_region
        // Predicated region
        $region25: #{tpu_custom_call.1} parent=23 // pred_check
          %p178 = pneg %p49
        $region26: #{tpu_custom_call.1} parent=23 // pred_check_branch
          %180 = sbr.rel (%p178) target = $region28
        $region27: #{tpu_custom_call.1} parent=23 // pred_region
          %p181 = scmp.lt.s32.totalorder %s24, 1
          %s182 = scalar_select %p181, %s24, 1
          %s183 = smul.addr %s182, 54
          %s184 = smul.addr %s183, 8
          %s185 = scalar_lea.vmem %s0, %s184
        $region28: #{tpu_custom_call.1} parent=23 // pred_fallthru
          _
      $region24: #{tpu_custom_call.1} parent=5 // pred_fallthru
        _
      %p186 = scmp.le.s32.totalorder 1, %s17
      %p187 = scmp.lt.s32.totalorder %s17, 3
      %p188 = pnand %p186, %p187
      %p189 = pneg %p188
      // Predicated region
      $region29: #{tpu_custom_call.1} parent=5 // pred_check
        _
      $region30: #{tpu_custom_call.1} parent=5 // pred_check_branch
        %191 = sbr.rel (%p188) target = $region32
      $region31: #{tpu_custom_call.1} parent=5 // pred_region
        %s192 = ssub.s32 %s17, 1
        %p193 = scmp.lt.s32.totalorder %s26, 1
        %s194 = scalar_select %p193, %s26, 1
        %s195 = smul.addr %s194, 54
        %s196 = smul.addr %s195, 8
        %s197 = scalar_lea.vmem %s0, %s196
        %p198 = pneg %p55
        %p199 = pneg %p52
        %p200 = pneg %p76
        %p201 = pneg %p73
        %p202 = pneg %p97
        %p203 = pneg %p94
        %p204 = pneg %p125
        %p205 = pneg %p122
        %s206 = sand.u32 %s112, 1
        %s207 = scalar_lea.sflag [#allocation3], %s206
        %s208 = sand.u32 %s112, 1
        %s209 = smul.addr %s208, 256
        %s210 = scalar_lea.vmem [#allocation2], %s209
        %p211 = pneg %p153
        %p212 = pneg %p150
        %s213 = sand.u32 %s140, 1
        %s214 = scalar_lea.sflag [#allocation5], %s213
        %s215 = sand.u32 %s140, 1
        %s216 = smul.addr %s215, 2
        %s217 = scalar_lea.vmem [#allocation4], %s216
        %p218 = scmp.lt.s32.totalorder %s26, 1
        %s219 = scalar_select %p218, %s26, 1
        %s220 = smul.addr %s219, 54
        %s221 = smul.addr %s220, 8
        %s222 = scalar_lea.vmem %s0, %s221
        %s223 = smul.u32 32, %s27
        %s224 = smul.u32 %s27, 16
        %s225 = smul.u32 %s224, 24
        %s226 = scalar_lea.vmem %s222, %s225
        %v227 = vld [vmem:[%s226] sm:$0xff]
        %v228 = vld [vmem:[%s226 + $0x8] sm:$0xff]
        %v229 = vld [vmem:[%s226 + $0x18] sm:$0xff]
        %v230 = vld [vmem:[%s226 + $0x20] sm:$0xff]
        %v231 = vld [vmem:[%s226 + $0x30] sm:$0xff]
        %v232 = vld [vmem:[%s226 + $0x38] sm:$0xff]
        %v233 = vld [vmem:[%s226 + $0x48] sm:$0xff]
        %v234 = vld [vmem:[%s226 + $0x50] sm:$0xff]
        %v235 = vld [vmem:[%s226 + $0x60] sm:$0xff]
        %v236 = vld [vmem:[%s226 + $0x68] sm:$0xff]
        %v237 = vld [vmem:[%s226 + $0x78] sm:$0xff]
        %v238 = vld [vmem:[%s226 + $0x80] sm:$0xff]
        %v239 = vld [vmem:[%s226 + $0x90] sm:$0xff]
        %v240 = vld [vmem:[%s226 + $0x98] sm:$0xff]
        %v241 = vld [vmem:[%s226 + $0xa8] sm:$0xff]
        %v242 = vld [vmem:[%s226 + $0xb0] sm:$0xff]
        %v243 = vld [vmem:[%s226 + $0xc0] sm:$0xff]
        %v244 = vld [vmem:[%s226 + $0xc8] sm:$0xff]
        %v245 = vld [vmem:[%s226 + $0xd8] sm:$0xff]
        %v246 = vld [vmem:[%s226 + $0xe0] sm:$0xff]
        %v247 = vld [vmem:[%s226 + $0xf0] sm:$0xff]
        %v248 = vld [vmem:[%s226 + $0xf8] sm:$0xff]
        %v249 = vld [vmem:[%s226 + $0x108] sm:$0xff]
        %v250 = vld [vmem:[%s226 + $0x110] sm:$0xff]
        %v251 = vld [vmem:[%s226 + $0x120] sm:$0xff]
        %v252 = vld [vmem:[%s226 + $0x128] sm:$0xff]
        %v253 = vld [vmem:[%s226 + $0x138] sm:$0xff]
        %v254 = vld [vmem:[%s226 + $0x140] sm:$0xff]
        %v255 = vld [vmem:[%s226 + $0x150] sm:$0xff]
        %v256 = vld [vmem:[%s226 + $0x158] sm:$0xff]
        %v257 = vld [vmem:[%s226 + $0x168] sm:$0xff]
        %v258 = vld [vmem:[%s226 + $0x170] sm:$0xff]
        %v259 = vld [vmem:[%s1] sm:$0xf]
        %v260 = vld [vmem:[%s226 + $0x1] sm:$0xff]
        %v261 = vld [vmem:[%s226 + $0x9] sm:$0xff]
        %v262 = vld [vmem:[%s226 + $0x19] sm:$0xff]
        %v263 = vld [vmem:[%s226 + $0x21] sm:$0xff]
        %v264 = vld [vmem:[%s226 + $0x31] sm:$0xff]
        %v265 = vld [vmem:[%s226 + $0x39] sm:$0xff]
        %v266 = vld [vmem:[%s226 + $0x49] sm:$0xff]
        %v267 = vld [vmem:[%s226 + $0x51] sm:$0xff]
        %v268 = vld [vmem:[%s226 + $0x61] sm:$0xff]
        %v269 = vld [vmem:[%s226 + $0x69] sm:$0xff]
        %v270 = vld [vmem:[%s226 + $0x79] sm:$0xff]
        %v271 = vld [vmem:[%s226 + $0x81] sm:$0xff]
        %v272 = vld [vmem:[%s226 + $0x91] sm:$0xff]
        %v273 = vld [vmem:[%s226 + $0x99] sm:$0xff]
        %v274 = vld [vmem:[%s226 + $0xa9] sm:$0xff]
        %v275 = vld [vmem:[%s226 + $0xb1] sm:$0xff]
        %v276 = vld [vmem:[%s226 + $0xc1] sm:$0xff]
        %v277 = vld [vmem:[%s226 + $0xc9] sm:$0xff]
        %v278 = vld [vmem:[%s226 + $0xd9] sm:$0xff]
        %v279 = vld [vmem:[%s226 + $0xe1] sm:$0xff]
        %v280 = vld [vmem:[%s226 + $0xf1] sm:$0xff]
        %v281 = vld [vmem:[%s226 + $0xf9] sm:$0xff]
        %v282 = vld [vmem:[%s226 + $0x109] sm:$0xff]
        %v283 = vld [vmem:[%s226 + $0x111] sm:$0xff]
        %v284 = vld [vmem:[%s226 + $0x121] sm:$0xff]
        %v285 = vld [vmem:[%s226 + $0x129] sm:$0xff]
        %v286 = vld [vmem:[%s226 + $0x139] sm:$0xff]
        %v287 = vld [vmem:[%s226 + $0x141] sm:$0xff]
        %v288 = vld [vmem:[%s226 + $0x151] sm:$0xff]
        %v289 = vld [vmem:[%s226 + $0x159] sm:$0xff]
        %v290 = vld [vmem:[%s226 + $0x169] sm:$0xff]
        %v291 = vld [vmem:[%s226 + $0x171] sm:$0xff]
        %s292 = scalar_lea.vmem %s1, 4
        %v293 = vld [vmem:[%s292] sm:$0xf]
        %vm294 = vcmask 31744
        %v296 = vsel %vm294, %v260, 0
        %v299 = vsel %vm294, %v261, 0
        %v302 = vsel %vm294, %v262, 0
        %v305 = vsel %vm294, %v263, 0
        %v308 = vsel %vm294, %v264, 0
        %v311 = vsel %vm294, %v265, 0
        %v314 = vsel %vm294, %v266, 0
        %v317 = vsel %vm294, %v267, 0
        %v320 = vsel %vm294, %v268, 0
        %v323 = vsel %vm294, %v269, 0
        %v326 = vsel %vm294, %v270, 0
        %v329 = vsel %vm294, %v271, 0
        %v332 = vsel %vm294, %v272, 0
        %v335 = vsel %vm294, %v273, 0
        %v338 = vsel %vm294, %v274, 0
        %v341 = vsel %vm294, %v275, 0
        %v344 = vsel %vm294, %v276, 0
        %v347 = vsel %vm294, %v277, 0
        %v350 = vsel %vm294, %v278, 0
        %v353 = vsel %vm294, %v279, 0
        %v356 = vsel %vm294, %v280, 0
        %v359 = vsel %vm294, %v281, 0
        %v362 = vsel %vm294, %v282, 0
        %v365 = vsel %vm294, %v283, 0
        %v368 = vsel %vm294, %v284, 0
        %v371 = vsel %vm294, %v285, 0
        %v374 = vsel %vm294, %v286, 0
        %v377 = vsel %vm294, %v287, 0
        %v380 = vsel %vm294, %v288, 0
        %v383 = vsel %vm294, %v289, 0
        %v386 = vsel %vm294, %v290, 0
        %v389 = vsel %vm294, %v291, 0
        %vm391 = vcmask 1043456
        %v393 = vsel %vm391, %v293, 0
        %395 = vmatprep.subr.mxu0 0.0
        %396 = vmatpush1.msra.mxu0 0.0
        %397 = vmatprep.subr.mxu0 0.0
        %398 = vmatpush1.msra.mxu0 0.0
        %399 = vmatprep.subr.mxu0 0.0
        %400 = vmatpush1.msra.mxu0 0.0
        %401 = vmatprep.subr.mxu0 0.0
        %402 = vmatpush1.msra.mxu0 0.0
        %403 = vmatprep.subr.mxu0 0.0
        %404 = vmatpush1.msra.mxu0 0.0
        %405 = vmatprep.subr.mxu0 0.0
        %406 = vmatpush1.msra.mxu0 0.0
        %407 = vmatprep.subr.mxu0 0.0
        %408 = vmatpush1.msra.mxu0 0.0
        %409 = vmatprep.subr.mxu0 0.0
        %410 = vmatpush1.msra.mxu0 0.0
        %411 = vmatprep.subr.mxu0 0.0
        %412 = vmatpush1.msra.mxu0 0.0
        %413 = vmatprep.subr.mxu0 0.0
        %414 = vmatpush1.msra.mxu0 0.0
        %415 = vmatprep.subr.mxu0 0.0
        %416 = vmatpush1.msra.mxu0 0.0
        %417 = vmatprep.subr.mxu0 0.0
        %418 = vmatpush1.msra.mxu0 0.0
        %419 = vmatprep.subr.mxu0 0.0
        %420 = vmatpush1.msra.mxu0 0.0
        %421 = vmatprep.subr.mxu0 0.0
        %422 = vmatpush1.msra.mxu0 0.0
        %423 = vmatprep.subr.mxu0 0.0
        %424 = vmatpush1.msra.mxu0 0.0
        %425 = vmatprep.subr.mxu0 0.0
        %426 = vmatpush1.msra.mxu0 %v393
        %427 = vmatprep.subr.mxu0 0.0
        %428 = vmatpush2.msra.mxu0 0.0
        %429 = vmatprep.subr.mxu0 0.0
        %430 = vmatpush2.msra.mxu0 0.0
        %431 = vmatprep.subr.mxu0 0.0
        %432 = vmatpush2.msra.mxu0 0.0
        %433 = vmatprep.subr.mxu0 0.0
        %434 = vmatpush2.msra.mxu0 0.0
        %435 = vmatprep.subr.mxu0 0.0
        %436 = vmatpush2.msra.mxu0 0.0
        %437 = vmatprep.subr.mxu0 0.0
        %438 = vmatpush2.msra.mxu0 0.0
        %439 = vmatprep.subr.mxu0 0.0
        %440 = vmatpush2.msra.mxu0 0.0
        %441 = vmatprep.subr.mxu0 0.0
        %442 = vmatpush2.msra.mxu0 0.0
        %443 = vmatprep.subr.mxu0 0.0
        %444 = vmatpush2.msra.mxu0 0.0
        %445 = vmatprep.subr.mxu0 0.0
        %446 = vmatpush2.msra.mxu0 0.0
        %447 = vmatprep.subr.mxu0 0.0
        %448 = vmatpush2.msra.mxu0 0.0
        %449 = vmatprep.subr.mxu0 0.0
        %450 = vmatpush2.msra.mxu0 0.0
        %451 = vmatprep.subr.mxu0 0.0
        %452 = vmatpush2.msra.mxu0 0.0
        %453 = vmatprep.subr.mxu0 0.0
        %454 = vmatpush2.msra.mxu0 0.0
        %455 = vmatprep.subr.mxu0 0.0
        %456 = vmatpush2.msra.mxu0 0.0
        %457 = vmatprep.subr.mxu0 0.0
        %458 = vmatpush2.msra.mxu0 0.0
        %459 = vmatprep.mubr.f32.mxu0 0.0
        %460 = vmatmul.mubr.f32.gmra.mxu0 %v296
        %v461 = vpop.f32.mrf.mxu0
        %v462 = vadd.f32 0.0, %v461
        %v463 = vpop.f32.mrf.mxu0
        %464 = vmatprep.mubr.f32.mxu0 0.0
        %465 = vmatmul.mubr.f32.gmra.mxu0 %v299
        %v466 = vpop.f32.mrf.mxu0
        %v467 = vadd.f32 0.0, %v466
        %v468 = vpop.f32.mrf.mxu0
        %469 = vmatprep.mubr.f32.mxu0 0.0
        %470 = vmatmul.mubr.f32.gmra.mxu0 %v302
        %v471 = vpop.f32.mrf.mxu0
        %v472 = vadd.f32 0.0, %v471
        %v473 = vpop.f32.mrf.mxu0
        %474 = vmatprep.mubr.f32.mxu0 0.0
        %475 = vmatmul.mubr.f32.gmra.mxu0 %v305
        %v476 = vpop.f32.mrf.mxu0
        %v477 = vadd.f32 0.0, %v476
        %v478 = vpop.f32.mrf.mxu0
        %479 = vmatprep.mubr.f32.mxu0 0.0
        %480 = vmatmul.mubr.f32.gmra.mxu0 %v308
        %v481 = vpop.f32.mrf.mxu0
        %v482 = vadd.f32 0.0, %v481
        %v483 = vpop.f32.mrf.mxu0
        %484 = vmatprep.mubr.f32.mxu0 0.0
        %485 = vmatmul.mubr.f32.gmra.mxu0 %v311
        %v486 = vpop.f32.mrf.mxu0
        %v487 = vadd.f32 0.0, %v486
        %v488 = vpop.f32.mrf.mxu0
        %489 = vmatprep.mubr.f32.mxu0 0.0
        %490 = vmatmul.mubr.f32.gmra.mxu0 %v314
        %v491 = vpop.f32.mrf.mxu0
        %v492 = vadd.f32 0.0, %v491
        %v493 = vpop.f32.mrf.mxu0
        %494 = vmatprep.mubr.f32.mxu0 0.0
        %495 = vmatmul.mubr.f32.gmra.mxu0 %v317
        %v496 = vpop.f32.mrf.mxu0
        %v497 = vadd.f32 0.0, %v496
        %v498 = vpop.f32.mrf.mxu0
        %499 = vmatprep.mubr.f32.mxu0 0.0
        %500 = vmatmul.mubr.f32.gmra.mxu0 %v320
        %v501 = vpop.f32.mrf.mxu0
        %v502 = vadd.f32 0.0, %v501
        %v503 = vpop.f32.mrf.mxu0
        %504 = vmatprep.mubr.f32.mxu0 0.0
        %505 = vmatmul.mubr.f32.gmra.mxu0 %v323
        %v506 = vpop.f32.mrf.mxu0
        %v507 = vadd.f32 0.0, %v506
        %v508 = vpop.f32.mrf.mxu0
        %509 = vmatprep.mubr.f32.mxu0 0.0
        %510 = vmatmul.mubr.f32.gmra.mxu0 %v326
        %v511 = vpop.f32.mrf.mxu0
        %v512 = vadd.f32 0.0, %v511
        %v513 = vpop.f32.mrf.mxu0
        %514 = vmatprep.mubr.f32.mxu0 0.0
        %515 = vmatmul.mubr.f32.gmra.mxu0 %v329
        %v516 = vpop.f32.mrf.mxu0
        %v517 = vadd.f32 0.0, %v516
        %v518 = vpop.f32.mrf.mxu0
        %519 = vmatprep.mubr.f32.mxu0 0.0
        %520 = vmatmul.mubr.f32.gmra.mxu0 %v332
        %v521 = vpop.f32.mrf.mxu0
        %v522 = vadd.f32 0.0, %v521
        %v523 = vpop.f32.mrf.mxu0
        %524 = vmatprep.mubr.f32.mxu0 0.0
        %525 = vmatmul.mubr.f32.gmra.mxu0 %v335
        %v526 = vpop.f32.mrf.mxu0
        %v527 = vadd.f32 0.0, %v526
        %v528 = vpop.f32.mrf.mxu0
        %529 = vmatprep.mubr.f32.mxu0 0.0
        %530 = vmatmul.mubr.f32.gmra.mxu0 %v338
        %v531 = vpop.f32.mrf.mxu0
        %v532 = vadd.f32 0.0, %v531
        %v533 = vpop.f32.mrf.mxu0
        %534 = vmatprep.mubr.f32.mxu0 0.0
        %535 = vmatmul.mubr.f32.gmra.mxu0 %v341
        %v536 = vpop.f32.mrf.mxu0
        %v537 = vadd.f32 0.0, %v536
        %v538 = vpop.f32.mrf.mxu0
        %539 = vmatprep.mubr.f32.mxu0 0.0
        %540 = vmatmul.mubr.f32.gmra.mxu0 %v344
        %v541 = vpop.f32.mrf.mxu0
        %v542 = vadd.f32 0.0, %v541
        %v543 = vpop.f32.mrf.mxu0
        %544 = vmatprep.mubr.f32.mxu0 0.0
        %545 = vmatmul.mubr.f32.gmra.mxu0 %v347
        %v546 = vpop.f32.mrf.mxu0
        %v547 = vadd.f32 0.0, %v546
        %v548 = vpop.f32.mrf.mxu0
        %549 = vmatprep.mubr.f32.mxu0 0.0
        %550 = vmatmul.mubr.f32.gmra.mxu0 %v350
        %v551 = vpop.f32.mrf.mxu0
        %v552 = vadd.f32 0.0, %v551
        %v553 = vpop.f32.mrf.mxu0
        %554 = vmatprep.mubr.f32.mxu0 0.0
        %555 = vmatmul.mubr.f32.gmra.mxu0 %v353
        %v556 = vpop.f32.mrf.mxu0
        %v557 = vadd.f32 0.0, %v556
        %v558 = vpop.f32.mrf.mxu0
        %559 = vmatprep.mubr.f32.mxu0 0.0
        %560 = vmatmul.mubr.f32.gmra.mxu0 %v356
        %v561 = vpop.f32.mrf.mxu0
        %v562 = vadd.f32 0.0, %v561
        %v563 = vpop.f32.mrf.mxu0
        %564 = vmatprep.mubr.f32.mxu0 0.0
        %565 = vmatmul.mubr.f32.gmra.mxu0 %v359
        %v566 = vpop.f32.mrf.mxu0
        %v567 = vadd.f32 0.0, %v566
        %v568 = vpop.f32.mrf.mxu0
        %569 = vmatprep.mubr.f32.mxu0 0.0
        %570 = vmatmul.mubr.f32.gmra.mxu0 %v362
        %v571 = vpop.f32.mrf.mxu0
        %v572 = vadd.f32 0.0, %v571
        %v573 = vpop.f32.mrf.mxu0
        %574 = vmatprep.mubr.f32.mxu0 0.0
        %575 = vmatmul.mubr.f32.gmra.mxu0 %v365
        %v576 = vpop.f32.mrf.mxu0
        %v577 = vadd.f32 0.0, %v576
        %v578 = vpop.f32.mrf.mxu0
        %579 = vmatprep.mubr.f32.mxu0 0.0
        %580 = vmatmul.mubr.f32.gmra.mxu0 %v368
        %v581 = vpop.f32.mrf.mxu0
        %v582 = vadd.f32 0.0, %v581
        %v583 = vpop.f32.mrf.mxu0
        %584 = vmatprep.mubr.f32.mxu0 0.0
        %585 = vmatmul.mubr.f32.gmra.mxu0 %v371
        %v586 = vpop.f32.mrf.mxu0
        %v587 = vadd.f32 0.0, %v586
        %v588 = vpop.f32.mrf.mxu0
        %589 = vmatprep.mubr.f32.mxu0 0.0
        %590 = vmatmul.mubr.f32.gmra.mxu0 %v374
        %v591 = vpop.f32.mrf.mxu0
        %v592 = vadd.f32 0.0, %v591
        %v593 = vpop.f32.mrf.mxu0
        %594 = vmatprep.mubr.f32.mxu0 0.0
        %595 = vmatmul.mubr.f32.gmra.mxu0 %v377
        %v596 = vpop.f32.mrf.mxu0
        %v597 = vadd.f32 0.0, %v596
        %v598 = vpop.f32.mrf.mxu0
        %599 = vmatprep.mubr.f32.mxu0 0.0
        %600 = vmatmul.mubr.f32.gmra.mxu0 %v380
        %v601 = vpop.f32.mrf.mxu0
        %v602 = vadd.f32 0.0, %v601
        %v603 = vpop.f32.mrf.mxu0
        %604 = vmatprep.mubr.f32.mxu0 0.0
        %605 = vmatmul.mubr.f32.gmra.mxu0 %v383
        %v606 = vpop.f32.mrf.mxu0
        %v607 = vadd.f32 0.0, %v606
        %v608 = vpop.f32.mrf.mxu0
        %609 = vmatprep.mubr.f32.mxu0 0.0
        %610 = vmatmul.mubr.f32.gmra.mxu0 %v386
        %v611 = vpop.f32.mrf.mxu0
        %v612 = vadd.f32 0.0, %v611
        %v613 = vpop.f32.mrf.mxu0
        %614 = vmatprep.mubr.f32.mxu0 0.0
        %615 = vmatmul.mubr.f32.gmra.mxu0 %v389
        %v616 = vpop.f32.mrf.mxu0
        %v617 = vadd.f32 0.0, %v616
        %v618 = vpop.f32.mrf.mxu0
        %619 = vdwg.mxu0
        %v621 = vsel %vm294, %v227, 0
        %v624 = vsel %vm294, %v228, 0
        %v627 = vsel %vm294, %v229, 0
        %v630 = vsel %vm294, %v230, 0
        %v633 = vsel %vm294, %v231, 0
        %v636 = vsel %vm294, %v232, 0
        %v639 = vsel %vm294, %v233, 0
        %v642 = vsel %vm294, %v234, 0
        %v645 = vsel %vm294, %v235, 0
        %v648 = vsel %vm294, %v236, 0
        %v651 = vsel %vm294, %v237, 0
        %v654 = vsel %vm294, %v238, 0
        %v657 = vsel %vm294, %v239, 0
        %v660 = vsel %vm294, %v240, 0
        %v663 = vsel %vm294, %v241, 0
        %v666 = vsel %vm294, %v242, 0
        %v669 = vsel %vm294, %v243, 0
        %v672 = vsel %vm294, %v244, 0
        %v675 = vsel %vm294, %v245, 0
        %v678 = vsel %vm294, %v246, 0
        %v681 = vsel %vm294, %v247, 0
        %v684 = vsel %vm294, %v248, 0
        %v687 = vsel %vm294, %v249, 0
        %v690 = vsel %vm294, %v250, 0
        %v693 = vsel %vm294, %v251, 0
        %v696 = vsel %vm294, %v252, 0
        %v699 = vsel %vm294, %v253, 0
        %v702 = vsel %vm294, %v254, 0
        %v705 = vsel %vm294, %v255, 0
        %v708 = vsel %vm294, %v256, 0
        %v711 = vsel %vm294, %v257, 0
        %v714 = vsel %vm294, %v258, 0
        %v717 = vsel %vm391, %v259, 0
        %719 = vmatprep.subr.mxu0 0.0
        %720 = vmatpush1.msra.mxu0 0.0
        %721 = vmatprep.subr.mxu0 0.0
        %722 = vmatpush1.msra.mxu0 0.0
        %723 = vmatprep.subr.mxu0 0.0
        %724 = vmatpush1.msra.mxu0 0.0
        %725 = vmatprep.subr.mxu0 0.0
        %726 = vmatpush1.msra.mxu0 0.0
        %727 = vmatprep.subr.mxu0 0.0
        %728 = vmatpush1.msra.mxu0 0.0
        %729 = vmatprep.subr.mxu0 0.0
        %730 = vmatpush1.msra.mxu0 0.0
        %731 = vmatprep.subr.mxu0 0.0
        %732 = vmatpush1.msra.mxu0 0.0
        %733 = vmatprep.subr.mxu0 0.0
        %734 = vmatpush1.msra.mxu0 0.0
        %735 = vmatprep.subr.mxu0 0.0
        %736 = vmatpush1.msra.mxu0 0.0
        %737 = vmatprep.subr.mxu0 0.0
        %738 = vmatpush1.msra.mxu0 0.0
        %739 = vmatprep.subr.mxu0 0.0
        %740 = vmatpush1.msra.mxu0 0.0
        %741 = vmatprep.subr.mxu0 0.0
        %742 = vmatpush1.msra.mxu0 0.0
        %743 = vmatprep.subr.mxu0 0.0
        %744 = vmatpush1.msra.mxu0 0.0
        %745 = vmatprep.subr.mxu0 0.0
        %746 = vmatpush1.msra.mxu0 0.0
        %747 = vmatprep.subr.mxu0 0.0
        %748 = vmatpush1.msra.mxu0 0.0
        %749 = vmatprep.subr.mxu0 0.0
        %750 = vmatpush1.msra.mxu0 %v717
        %751 = vmatprep.subr.mxu0 0.0
        %752 = vmatpush2.msra.mxu0 0.0
        %753 = vmatprep.subr.mxu0 0.0
        %754 = vmatpush2.msra.mxu0 0.0
        %755 = vmatprep.subr.mxu0 0.0
        %756 = vmatpush2.msra.mxu0 0.0
        %757 = vmatprep.subr.mxu0 0.0
        %758 = vmatpush2.msra.mxu0 0.0
        %759 = vmatprep.subr.mxu0 0.0
        %760 = vmatpush2.msra.mxu0 0.0
        %761 = vmatprep.subr.mxu0 0.0
        %762 = vmatpush2.msra.mxu0 0.0
        %763 = vmatprep.subr.mxu0 0.0
        %764 = vmatpush2.msra.mxu0 0.0
        %765 = vmatprep.subr.mxu0 0.0
        %766 = vmatpush2.msra.mxu0 0.0
        %767 = vmatprep.subr.mxu0 0.0
        %768 = vmatpush2.msra.mxu0 0.0
        %769 = vmatprep.subr.mxu0 0.0
        %770 = vmatpush2.msra.mxu0 0.0
        %771 = vmatprep.subr.mxu0 0.0
        %772 = vmatpush2.msra.mxu0 0.0
        %773 = vmatprep.subr.mxu0 0.0
        %774 = vmatpush2.msra.mxu0 0.0
        %775 = vmatprep.subr.mxu0 0.0
        %776 = vmatpush2.msra.mxu0 0.0
        %777 = vmatprep.subr.mxu0 0.0
        %778 = vmatpush2.msra.mxu0 0.0
        %779 = vmatprep.subr.mxu0 0.0
        %780 = vmatpush2.msra.mxu0 0.0
        %781 = vmatprep.subr.mxu0 0.0
        %782 = vmatpush2.msra.mxu0 0.0
        %783 = vmatprep.mubr.f32.mxu0 0.0
        %784 = vmatmul.mubr.f32.gmra.mxu0 %v621
        %v785 = vpop.f32.mrf.mxu0
        %v786 = vadd.f32 %v462, %v785
        %v787 = vpop.f32.mrf.mxu0
        %788 = vmatprep.mubr.f32.mxu0 0.0
        %789 = vmatmul.mubr.f32.gmra.mxu0 %v624
        %v790 = vpop.f32.mrf.mxu0
        %v791 = vadd.f32 %v467, %v790
        %v792 = vpop.f32.mrf.mxu0
        %793 = vmatprep.mubr.f32.mxu0 0.0
        %794 = vmatmul.mubr.f32.gmra.mxu0 %v627
        %v795 = vpop.f32.mrf.mxu0
        %v796 = vadd.f32 %v472, %v795
        %v797 = vpop.f32.mrf.mxu0
        %798 = vmatprep.mubr.f32.mxu0 0.0
        %799 = vmatmul.mubr.f32.gmra.mxu0 %v630
        %v800 = vpop.f32.mrf.mxu0
        %v801 = vadd.f32 %v477, %v800
        %v802 = vpop.f32.mrf.mxu0
        %803 = vmatprep.mubr.f32.mxu0 0.0
        %804 = vmatmul.mubr.f32.gmra.mxu0 %v633
        %v805 = vpop.f32.mrf.mxu0
        %v806 = vadd.f32 %v482, %v805
        %v807 = vpop.f32.mrf.mxu0
        %808 = vmatprep.mubr.f32.mxu0 0.0
        %809 = vmatmul.mubr.f32.gmra.mxu0 %v636
        %v810 = vpop.f32.mrf.mxu0
        %v811 = vadd.f32 %v487, %v810
        %v812 = vpop.f32.mrf.mxu0
        %813 = vmatprep.mubr.f32.mxu0 0.0
        %814 = vmatmul.mubr.f32.gmra.mxu0 %v639
        %v815 = vpop.f32.mrf.mxu0
        %v816 = vadd.f32 %v492, %v815
        %v817 = vpop.f32.mrf.mxu0
        %818 = vmatprep.mubr.f32.mxu0 0.0
        %819 = vmatmul.mubr.f32.gmra.mxu0 %v642
        %v820 = vpop.f32.mrf.mxu0
        %v821 = vadd.f32 %v497, %v820
        %v822 = vpop.f32.mrf.mxu0
        %823 = vmatprep.mubr.f32.mxu0 0.0
        %824 = vmatmul.mubr.f32.gmra.mxu0 %v645
        %v825 = vpop.f32.mrf.mxu0
        %v826 = vadd.f32 %v502, %v825
        %v827 = vpop.f32.mrf.mxu0
        %828 = vmatprep.mubr.f32.mxu0 0.0
        %829 = vmatmul.mubr.f32.gmra.mxu0 %v648
        %v830 = vpop.f32.mrf.mxu0
        %v831 = vadd.f32 %v507, %v830
        %v832 = vpop.f32.mrf.mxu0
        %833 = vmatprep.mubr.f32.mxu0 0.0
        %834 = vmatmul.mubr.f32.gmra.mxu0 %v651
        %v835 = vpop.f32.mrf.mxu0
        %v836 = vadd.f32 %v512, %v835
        %v837 = vpop.f32.mrf.mxu0
        %838 = vmatprep.mubr.f32.mxu0 0.0
        %839 = vmatmul.mubr.f32.gmra.mxu0 %v654
        %v840 = vpop.f32.mrf.mxu0
        %v841 = vadd.f32 %v517, %v840
        %v842 = vpop.f32.mrf.mxu0
        %843 = vmatprep.mubr.f32.mxu0 0.0
        %844 = vmatmul.mubr.f32.gmra.mxu0 %v657
        %v845 = vpop.f32.mrf.mxu0
        %v846 = vadd.f32 %v522, %v845
        %v847 = vpop.f32.mrf.mxu0
        %848 = vmatprep.mubr.f32.mxu0 0.0
        %849 = vmatmul.mubr.f32.gmra.mxu0 %v660
        %v850 = vpop.f32.mrf.mxu0
        %v851 = vadd.f32 %v527, %v850
        %v852 = vpop.f32.mrf.mxu0
        %853 = vmatprep.mubr.f32.mxu0 0.0
        %854 = vmatmul.mubr.f32.gmra.mxu0 %v663
        %v855 = vpop.f32.mrf.mxu0
        %v856 = vadd.f32 %v532, %v855
        %v857 = vpop.f32.mrf.mxu0
        %858 = vmatprep.mubr.f32.mxu0 0.0
        %859 = vmatmul.mubr.f32.gmra.mxu0 %v666
        %v860 = vpop.f32.mrf.mxu0
        %v861 = vadd.f32 %v537, %v860
        %v862 = vpop.f32.mrf.mxu0
        %863 = vmatprep.mubr.f32.mxu0 0.0
        %864 = vmatmul.mubr.f32.gmra.mxu0 %v669
        %v865 = vpop.f32.mrf.mxu0
        %v866 = vadd.f32 %v542, %v865
        %v867 = vpop.f32.mrf.mxu0
        %868 = vmatprep.mubr.f32.mxu0 0.0
        %869 = vmatmul.mubr.f32.gmra.mxu0 %v672
        %v870 = vpop.f32.mrf.mxu0
        %v871 = vadd.f32 %v547, %v870
        %v872 = vpop.f32.mrf.mxu0
        %873 = vmatprep.mubr.f32.mxu0 0.0
        %874 = vmatmul.mubr.f32.gmra.mxu0 %v675
        %v875 = vpop.f32.mrf.mxu0
        %v876 = vadd.f32 %v552, %v875
        %v877 = vpop.f32.mrf.mxu0
        %878 = vmatprep.mubr.f32.mxu0 0.0
        %879 = vmatmul.mubr.f32.gmra.mxu0 %v678
        %v880 = vpop.f32.mrf.mxu0
        %v881 = vadd.f32 %v557, %v880
        %v882 = vpop.f32.mrf.mxu0
        %883 = vmatprep.mubr.f32.mxu0 0.0
        %884 = vmatmul.mubr.f32.gmra.mxu0 %v681
        %v885 = vpop.f32.mrf.mxu0
        %v886 = vadd.f32 %v562, %v885
        %v887 = vpop.f32.mrf.mxu0
        %888 = vmatprep.mubr.f32.mxu0 0.0
        %889 = vmatmul.mubr.f32.gmra.mxu0 %v684
        %v890 = vpop.f32.mrf.mxu0
        %v891 = vadd.f32 %v567, %v890
        %v892 = vpop.f32.mrf.mxu0
        %893 = vmatprep.mubr.f32.mxu0 0.0
        %894 = vmatmul.mubr.f32.gmra.mxu0 %v687
        %v895 = vpop.f32.mrf.mxu0
        %v896 = vadd.f32 %v572, %v895
        %v897 = vpop.f32.mrf.mxu0
        %898 = vmatprep.mubr.f32.mxu0 0.0
        %899 = vmatmul.mubr.f32.gmra.mxu0 %v690
        %v900 = vpop.f32.mrf.mxu0
        %v901 = vadd.f32 %v577, %v900
        %v902 = vpop.f32.mrf.mxu0
        %903 = vmatprep.mubr.f32.mxu0 0.0
        %904 = vmatmul.mubr.f32.gmra.mxu0 %v693
        %v905 = vpop.f32.mrf.mxu0
        %v906 = vadd.f32 %v582, %v905
        %v907 = vpop.f32.mrf.mxu0
        %908 = vmatprep.mubr.f32.mxu0 0.0
        %909 = vmatmul.mubr.f32.gmra.mxu0 %v696
        %v910 = vpop.f32.mrf.mxu0
        %v911 = vadd.f32 %v587, %v910
        %v912 = vpop.f32.mrf.mxu0
        %913 = vmatprep.mubr.f32.mxu0 0.0
        %914 = vmatmul.mubr.f32.gmra.mxu0 %v699
        %v915 = vpop.f32.mrf.mxu0
        %v916 = vadd.f32 %v592, %v915
        %v917 = vpop.f32.mrf.mxu0
        %918 = vmatprep.mubr.f32.mxu0 0.0
        %919 = vmatmul.mubr.f32.gmra.mxu0 %v702
        %v920 = vpop.f32.mrf.mxu0
        %v921 = vadd.f32 %v597, %v920
        %v922 = vpop.f32.mrf.mxu0
        %923 = vmatprep.mubr.f32.mxu0 0.0
        %924 = vmatmul.mubr.f32.gmra.mxu0 %v705
        %v925 = vpop.f32.mrf.mxu0
        %v926 = vadd.f32 %v602, %v925
        %v927 = vpop.f32.mrf.mxu0
        %928 = vmatprep.mubr.f32.mxu0 0.0
        %929 = vmatmul.mubr.f32.gmra.mxu0 %v708
        %v930 = vpop.f32.mrf.mxu0
        %v931 = vadd.f32 %v607, %v930
        %v932 = vpop.f32.mrf.mxu0
        %933 = vmatprep.mubr.f32.mxu0 0.0
        %934 = vmatmul.mubr.f32.gmra.mxu0 %v711
        %v935 = vpop.f32.mrf.mxu0
        %v936 = vadd.f32 %v612, %v935
        %v937 = vpop.f32.mrf.mxu0
        %938 = vmatprep.mubr.f32.mxu0 0.0
        %939 = vmatmul.mubr.f32.gmra.mxu0 %v714
        %v940 = vpop.f32.mrf.mxu0
        %v941 = vadd.f32 %v617, %v940
        %v942 = vpop.f32.mrf.mxu0
        %943 = vdwg.mxu0
        %v944 = vld [vmem:[%s226 + $0x2] sm:$0xff]
        %v945 = vld [vmem:[%s226 + $0xa] sm:$0xff]
        %v946 = vld [vmem:[%s226 + $0x1a] sm:$0xff]
        %v947 = vld [vmem:[%s226 + $0x22] sm:$0xff]
        %v948 = vld [vmem:[%s226 + $0x32] sm:$0xff]
        %v949 = vld [vmem:[%s226 + $0x3a] sm:$0xff]
        %v950 = vld [vmem:[%s226 + $0x4a] sm:$0xff]
        %v951 = vld [vmem:[%s226 + $0x52] sm:$0xff]
        %v952 = vld [vmem:[%s226 + $0x62] sm:$0xff]
        %v953 = vld [vmem:[%s226 + $0x6a] sm:$0xff]
        %v954 = vld [vmem:[%s226 + $0x7a] sm:$0xff]
        %v955 = vld [vmem:[%s226 + $0x82] sm:$0xff]
        %v956 = vld [vmem:[%s226 + $0x92] sm:$0xff]
        %v957 = vld [vmem:[%s226 + $0x9a] sm:$0xff]
        %v958 = vld [vmem:[%s226 + $0xaa] sm:$0xff]
        %v959 = vld [vmem:[%s226 + $0xb2] sm:$0xff]
        %v960 = vld [vmem:[%s226 + $0xc2] sm:$0xff]
        %v961 = vld [vmem:[%s226 + $0xca] sm:$0xff]
        %v962 = vld [vmem:[%s226 + $0xda] sm:$0xff]
        %v963 = vld [vmem:[%s226 + $0xe2] sm:$0xff]
        %v964 = vld [vmem:[%s226 + $0xf2] sm:$0xff]
        %v965 = vld [vmem:[%s226 + $0xfa] sm:$0xff]
        %v966 = vld [vmem:[%s226 + $0x10a] sm:$0xff]
        %v967 = vld [vmem:[%s226 + $0x112] sm:$0xff]
        %v968 = vld [vmem:[%s226 + $0x122] sm:$0xff]
        %v969 = vld [vmem:[%s226 + $0x12a] sm:$0xff]
        %v970 = vld [vmem:[%s226 + $0x13a] sm:$0xff]
        %v971 = vld [vmem:[%s226 + $0x142] sm:$0xff]
        %v972 = vld [vmem:[%s226 + $0x152] sm:$0xff]
        %v973 = vld [vmem:[%s226 + $0x15a] sm:$0xff]
        %v974 = vld [vmem:[%s226 + $0x16a] sm:$0xff]
        %v975 = vld [vmem:[%s226 + $0x172] sm:$0xff]
        %s976 = scalar_lea.vmem %s1, 8
        %v977 = vld [vmem:[%s976] sm:$0xf]
        %v979 = vsel %vm294, %v944, 0
        %v982 = vsel %vm294, %v945, 0
        %v985 = vsel %vm294, %v946, 0
        %v988 = vsel %vm294, %v947, 0
        %v991 = vsel %vm294, %v948, 0
        %v994 = vsel %vm294, %v949, 0
        %v997 = vsel %vm294, %v950, 0
        %v1000 = vsel %vm294, %v951, 0
        %v1003 = vsel %vm294, %v952, 0
        %v1006 = vsel %vm294, %v953, 0
        %v1009 = vsel %vm294, %v954, 0
        %v1012 = vsel %vm294, %v955, 0
        %v1015 = vsel %vm294, %v956, 0
        %v1018 = vsel %vm294, %v957, 0
        %v1021 = vsel %vm294, %v958, 0
        %v1024 = vsel %vm294, %v959, 0
        %v1027 = vsel %vm294, %v960, 0
        %v1030 = vsel %vm294, %v961, 0
        %v1033 = vsel %vm294, %v962, 0
        %v1036 = vsel %vm294, %v963, 0
        %v1039 = vsel %vm294, %v964, 0
        %v1042 = vsel %vm294, %v965, 0
        %v1045 = vsel %vm294, %v966, 0
        %v1048 = vsel %vm294, %v967, 0
        %v1051 = vsel %vm294, %v968, 0
        %v1054 = vsel %vm294, %v969, 0
        %v1057 = vsel %vm294, %v970, 0
        %v1060 = vsel %vm294, %v971, 0
        %v1063 = vsel %vm294, %v972, 0
        %v1066 = vsel %vm294, %v973, 0
        %v1069 = vsel %vm294, %v974, 0
        %v1072 = vsel %vm294, %v975, 0
        %v1075 = vsel %vm391, %v977, 0
        %1077 = vmatprep.subr.mxu0 0.0
        %1078 = vmatpush1.msra.mxu0 0.0
        %1079 = vmatprep.subr.mxu0 0.0
        %1080 = vmatpush1.msra.mxu0 0.0
        %1081 = vmatprep.subr.mxu0 0.0
        %1082 = vmatpush1.msra.mxu0 0.0
        %1083 = vmatprep.subr.mxu0 0.0
        %1084 = vmatpush1.msra.mxu0 0.0
        %1085 = vmatprep.subr.mxu0 0.0
        %1086 = vmatpush1.msra.mxu0 0.0
        %1087 = vmatprep.subr.mxu0 0.0
        %1088 = vmatpush1.msra.mxu0 0.0
        %1089 = vmatprep.subr.mxu0 0.0
        %1090 = vmatpush1.msra.mxu0 0.0
        %1091 = vmatprep.subr.mxu0 0.0
        %1092 = vmatpush1.msra.mxu0 0.0
        %1093 = vmatprep.subr.mxu0 0.0
        %1094 = vmatpush1.msra.mxu0 0.0
        %1095 = vmatprep.subr.mxu0 0.0
        %1096 = vmatpush1.msra.mxu0 0.0
        %1097 = vmatprep.subr.mxu0 0.0
        %1098 = vmatpush1.msra.mxu0 0.0
        %1099 = vmatprep.subr.mxu0 0.0
        %1100 = vmatpush1.msra.mxu0 0.0
        %1101 = vmatprep.subr.mxu0 0.0
        %1102 = vmatpush1.msra.mxu0 0.0
        %1103 = vmatprep.subr.mxu0 0.0
        %1104 = vmatpush1.msra.mxu0 0.0
        %1105 = vmatprep.subr.mxu0 0.0
        %1106 = vmatpush1.msra.mxu0 0.0
        %1107 = vmatprep.subr.mxu0 0.0
        %1108 = vmatpush1.msra.mxu0 %v1075
        %1109 = vmatprep.subr.mxu0 0.0
        %1110 = vmatpush2.msra.mxu0 0.0
        %1111 = vmatprep.subr.mxu0 0.0
        %1112 = vmatpush2.msra.mxu0 0.0
        %1113 = vmatprep.subr.mxu0 0.0
        %1114 = vmatpush2.msra.mxu0 0.0
        %1115 = vmatprep.subr.mxu0 0.0
        %1116 = vmatpush2.msra.mxu0 0.0
        %1117 = vmatprep.subr.mxu0 0.0
        %1118 = vmatpush2.msra.mxu0 0.0
        %1119 = vmatprep.subr.mxu0 0.0
        %1120 = vmatpush2.msra.mxu0 0.0
        %1121 = vmatprep.subr.mxu0 0.0
        %1122 = vmatpush2.msra.mxu0 0.0
        %1123 = vmatprep.subr.mxu0 0.0
        %1124 = vmatpush2.msra.mxu0 0.0
        %1125 = vmatprep.subr.mxu0 0.0
        %1126 = vmatpush2.msra.mxu0 0.0
        %1127 = vmatprep.subr.mxu0 0.0
        %1128 = vmatpush2.msra.mxu0 0.0
        %1129 = vmatprep.subr.mxu0 0.0
        %1130 = vmatpush2.msra.mxu0 0.0
        %1131 = vmatprep.subr.mxu0 0.0
        %1132 = vmatpush2.msra.mxu0 0.0
        %1133 = vmatprep.subr.mxu0 0.0
        %1134 = vmatpush2.msra.mxu0 0.0
        %1135 = vmatprep.subr.mxu0 0.0
        %1136 = vmatpush2.msra.mxu0 0.0
        %1137 = vmatprep.subr.mxu0 0.0
        %1138 = vmatpush2.msra.mxu0 0.0
        %1139 = vmatprep.subr.mxu0 0.0
        %1140 = vmatpush2.msra.mxu0 0.0
        %1141 = vmatprep.mubr.f32.mxu0 0.0
        %1142 = vmatmul.mubr.f32.gmra.mxu0 %v979
        %v1143 = vpop.f32.mrf.mxu0
        %v1144 = vadd.f32 0.0, %v1143
        %v1145 = vpop.f32.mrf.mxu0
        %1146 = vmatprep.mubr.f32.mxu0 0.0
        %1147 = vmatmul.mubr.f32.gmra.mxu0 %v982
        %v1148 = vpop.f32.mrf.mxu0
        %v1149 = vadd.f32 0.0, %v1148
        %v1150 = vpop.f32.mrf.mxu0
        %1151 = vmatprep.mubr.f32.mxu0 0.0
        %1152 = vmatmul.mubr.f32.gmra.mxu0 %v985
        %v1153 = vpop.f32.mrf.mxu0
        %v1154 = vadd.f32 0.0, %v1153
        %v1155 = vpop.f32.mrf.mxu0
        %1156 = vmatprep.mubr.f32.mxu0 0.0
        %1157 = vmatmul.mubr.f32.gmra.mxu0 %v988
        %v1158 = vpop.f32.mrf.mxu0
        %v1159 = vadd.f32 0.0, %v1158
        %v1160 = vpop.f32.mrf.mxu0
        %1161 = vmatprep.mubr.f32.mxu0 0.0
        %1162 = vmatmul.mubr.f32.gmra.mxu0 %v991
        %v1163 = vpop.f32.mrf.mxu0
        %v1164 = vadd.f32 0.0, %v1163
        %v1165 = vpop.f32.mrf.mxu0
        %1166 = vmatprep.mubr.f32.mxu0 0.0
        %1167 = vmatmul.mubr.f32.gmra.mxu0 %v994
        %v1168 = vpop.f32.mrf.mxu0
        %v1169 = vadd.f32 0.0, %v1168
        %v1170 = vpop.f32.mrf.mxu0
        %1171 = vmatprep.mubr.f32.mxu0 0.0
        %1172 = vmatmul.mubr.f32.gmra.mxu0 %v997
        %v1173 = vpop.f32.mrf.mxu0
        %v1174 = vadd.f32 0.0, %v1173
        %v1175 = vpop.f32.mrf.mxu0
        %1176 = vmatprep.mubr.f32.mxu0 0.0
        %1177 = vmatmul.mubr.f32.gmra.mxu0 %v1000
        %v1178 = vpop.f32.mrf.mxu0
        %v1179 = vadd.f32 0.0, %v1178
        %v1180 = vpop.f32.mrf.mxu0
        %1181 = vmatprep.mubr.f32.mxu0 0.0
        %1182 = vmatmul.mubr.f32.gmra.mxu0 %v1003
        %v1183 = vpop.f32.mrf.mxu0
        %v1184 = vadd.f32 0.0, %v1183
        %v1185 = vpop.f32.mrf.mxu0
        %1186 = vmatprep.mubr.f32.mxu0 0.0
        %1187 = vmatmul.mubr.f32.gmra.mxu0 %v1006
        %v1188 = vpop.f32.mrf.mxu0
        %v1189 = vadd.f32 0.0, %v1188
        %v1190 = vpop.f32.mrf.mxu0
        %1191 = vmatprep.mubr.f32.mxu0 0.0
        %1192 = vmatmul.mubr.f32.gmra.mxu0 %v1009
        %v1193 = vpop.f32.mrf.mxu0
        %v1194 = vadd.f32 0.0, %v1193
        %v1195 = vpop.f32.mrf.mxu0
        %1196 = vmatprep.mubr.f32.mxu0 0.0
        %1197 = vmatmul.mubr.f32.gmra.mxu0 %v1012
        %v1198 = vpop.f32.mrf.mxu0
        %v1199 = vadd.f32 0.0, %v1198
        %v1200 = vpop.f32.mrf.mxu0
        %1201 = vmatprep.mubr.f32.mxu0 0.0
        %1202 = vmatmul.mubr.f32.gmra.mxu0 %v1015
        %v1203 = vpop.f32.mrf.mxu0
        %v1204 = vadd.f32 0.0, %v1203
        %v1205 = vpop.f32.mrf.mxu0
        %1206 = vmatprep.mubr.f32.mxu0 0.0
        %1207 = vmatmul.mubr.f32.gmra.mxu0 %v1018
        %v1208 = vpop.f32.mrf.mxu0
        %v1209 = vadd.f32 0.0, %v1208
        %v1210 = vpop.f32.mrf.mxu0
        %1211 = vmatprep.mubr.f32.mxu0 0.0
        %1212 = vmatmul.mubr.f32.gmra.mxu0 %v1021
        %v1213 = vpop.f32.mrf.mxu0
        %v1214 = vadd.f32 0.0, %v1213
        %v1215 = vpop.f32.mrf.mxu0
        %1216 = vmatprep.mubr.f32.mxu0 0.0
        %1217 = vmatmul.mubr.f32.gmra.mxu0 %v1024
        %v1218 = vpop.f32.mrf.mxu0
        %v1219 = vadd.f32 0.0, %v1218
        %v1220 = vpop.f32.mrf.mxu0
        %1221 = vmatprep.mubr.f32.mxu0 0.0
        %1222 = vmatmul.mubr.f32.gmra.mxu0 %v1027
        %v1223 = vpop.f32.mrf.mxu0
        %v1224 = vadd.f32 0.0, %v1223
        %v1225 = vpop.f32.mrf.mxu0
        %1226 = vmatprep.mubr.f32.mxu0 0.0
        %1227 = vmatmul.mubr.f32.gmra.mxu0 %v1030
        %v1228 = vpop.f32.mrf.mxu0
        %v1229 = vadd.f32 0.0, %v1228
        %v1230 = vpop.f32.mrf.mxu0
        %1231 = vmatprep.mubr.f32.mxu0 0.0
        %1232 = vmatmul.mubr.f32.gmra.mxu0 %v1033
        %v1233 = vpop.f32.mrf.mxu0
        %v1234 = vadd.f32 0.0, %v1233
        %v1235 = vpop.f32.mrf.mxu0
        %1236 = vmatprep.mubr.f32.mxu0 0.0
        %1237 = vmatmul.mubr.f32.gmra.mxu0 %v1036
        %v1238 = vpop.f32.mrf.mxu0
        %v1239 = vadd.f32 0.0, %v1238
        %v1240 = vpop.f32.mrf.mxu0
        %1241 = vmatprep.mubr.f32.mxu0 0.0
        %1242 = vmatmul.mubr.f32.gmra.mxu0 %v1039
        %v1243 = vpop.f32.mrf.mxu0
        %v1244 = vadd.f32 0.0, %v1243
        %v1245 = vpop.f32.mrf.mxu0
        %1246 = vmatprep.mubr.f32.mxu0 0.0
        %1247 = vmatmul.mubr.f32.gmra.mxu0 %v1042
        %v1248 = vpop.f32.mrf.mxu0
        %v1249 = vadd.f32 0.0, %v1248
        %v1250 = vpop.f32.mrf.mxu0
        %1251 = vmatprep.mubr.f32.mxu0 0.0
        %1252 = vmatmul.mubr.f32.gmra.mxu0 %v1045
        %v1253 = vpop.f32.mrf.mxu0
        %v1254 = vadd.f32 0.0, %v1253
        %v1255 = vpop.f32.mrf.mxu0
        %1256 = vmatprep.mubr.f32.mxu0 0.0
        %1257 = vmatmul.mubr.f32.gmra.mxu0 %v1048
        %v1258 = vpop.f32.mrf.mxu0
        %v1259 = vadd.f32 0.0, %v1258
        %v1260 = vpop.f32.mrf.mxu0
        %1261 = vmatprep.mubr.f32.mxu0 0.0
        %1262 = vmatmul.mubr.f32.gmra.mxu0 %v1051
        %v1263 = vpop.f32.mrf.mxu0
        %v1264 = vadd.f32 0.0, %v1263
        %v1265 = vpop.f32.mrf.mxu0
        %1266 = vmatprep.mubr.f32.mxu0 0.0
        %1267 = vmatmul.mubr.f32.gmra.mxu0 %v1054
        %v1268 = vpop.f32.mrf.mxu0
        %v1269 = vadd.f32 0.0, %v1268
        %v1270 = vpop.f32.mrf.mxu0
        %1271 = vmatprep.mubr.f32.mxu0 0.0
        %1272 = vmatmul.mubr.f32.gmra.mxu0 %v1057
        %v1273 = vpop.f32.mrf.mxu0
        %v1274 = vadd.f32 0.0, %v1273
        %v1275 = vpop.f32.mrf.mxu0
        %1276 = vmatprep.mubr.f32.mxu0 0.0
        %1277 = vmatmul.mubr.f32.gmra.mxu0 %v1060
        %v1278 = vpop.f32.mrf.mxu0
        %v1279 = vadd.f32 0.0, %v1278
        %v1280 = vpop.f32.mrf.mxu0
        %1281 = vmatprep.mubr.f32.mxu0 0.0
        %1282 = vmatmul.mubr.f32.gmra.mxu0 %v1063
        %v1283 = vpop.f32.mrf.mxu0
        %v1284 = vadd.f32 0.0, %v1283
        %v1285 = vpop.f32.mrf.mxu0
        %1286 = vmatprep.mubr.f32.mxu0 0.0
        %1287 = vmatmul.mubr.f32.gmra.mxu0 %v1066
        %v1288 = vpop.f32.mrf.mxu0
        %v1289 = vadd.f32 0.0, %v1288
        %v1290 = vpop.f32.mrf.mxu0
        %1291 = vmatprep.mubr.f32.mxu0 0.0
        %1292 = vmatmul.mubr.f32.gmra.mxu0 %v1069
        %v1293 = vpop.f32.mrf.mxu0
        %v1294 = vadd.f32 0.0, %v1293
        %v1295 = vpop.f32.mrf.mxu0
        %1296 = vmatprep.mubr.f32.mxu0 0.0
        %1297 = vmatmul.mubr.f32.gmra.mxu0 %v1072
        %v1298 = vpop.f32.mrf.mxu0
        %v1299 = vadd.f32 0.0, %v1298
        %v1300 = vpop.f32.mrf.mxu0
        %1301 = vdwg.mxu0
        %v1302 = vadd.f32 %v786, %v1144
        %v1303 = vadd.f32 %v791, %v1149
        %v1304 = vadd.f32 %v796, %v1154
        %v1305 = vadd.f32 %v801, %v1159
        %v1306 = vadd.f32 %v806, %v1164
        %v1307 = vadd.f32 %v811, %v1169
        %v1308 = vadd.f32 %v816, %v1174
        %v1309 = vadd.f32 %v821, %v1179
        %v1310 = vadd.f32 %v826, %v1184
        %v1311 = vadd.f32 %v831, %v1189
        %v1312 = vadd.f32 %v836, %v1194
        %v1313 = vadd.f32 %v841, %v1199
        %v1314 = vadd.f32 %v846, %v1204
        %v1315 = vadd.f32 %v851, %v1209
        %v1316 = vadd.f32 %v856, %v1214
        %v1317 = vadd.f32 %v861, %v1219
        %v1318 = vadd.f32 %v866, %v1224
        %v1319 = vadd.f32 %v871, %v1229
        %v1320 = vadd.f32 %v876, %v1234
        %v1321 = vadd.f32 %v881, %v1239
        %v1322 = vadd.f32 %v886, %v1244
        %v1323 = vadd.f32 %v891, %v1249
        %v1324 = vadd.f32 %v896, %v1254
        %v1325 = vadd.f32 %v901, %v1259
        %v1326 = vadd.f32 %v906, %v1264
        %v1327 = vadd.f32 %v911, %v1269
        %v1328 = vadd.f32 %v916, %v1274
        %v1329 = vadd.f32 %v921, %v1279
        %v1330 = vadd.f32 %v926, %v1284
        %v1331 = vadd.f32 %v931, %v1289
        %v1332 = vadd.f32 %v936, %v1294
        %v1333 = vadd.f32 %v941, %v1299
        %s1334 = sadd.s32 %s224, 1
        %s1335 = smul.u32 %s1334, 24
        %s1336 = scalar_lea.vmem %s222, %s1335
        %v1337 = vld [vmem:[%s1336] sm:$0xff]
        %v1338 = vld [vmem:[%s1336 + $0x8] sm:$0xff]
        %v1339 = vld [vmem:[%s1336 + $0x18] sm:$0xff]
        %v1340 = vld [vmem:[%s1336 + $0x20] sm:$0xff]
        %v1341 = vld [vmem:[%s1336 + $0x30] sm:$0xff]
        %v1342 = vld [vmem:[%s1336 + $0x38] sm:$0xff]
        %v1343 = vld [vmem:[%s1336 + $0x48] sm:$0xff]
        %v1344 = vld [vmem:[%s1336 + $0x50] sm:$0xff]
        %v1345 = vld [vmem:[%s1336 + $0x60] sm:$0xff]
        %v1346 = vld [vmem:[%s1336 + $0x68] sm:$0xff]
        %v1347 = vld [vmem:[%s1336 + $0x78] sm:$0xff]
        %v1348 = vld [vmem:[%s1336 + $0x80] sm:$0xff]
        %v1349 = vld [vmem:[%s1336 + $0x90] sm:$0xff]
        %v1350 = vld [vmem:[%s1336 + $0x98] sm:$0xff]
        %v1351 = vld [vmem:[%s1336 + $0xa8] sm:$0xff]
        %v1352 = vld [vmem:[%s1336 + $0xb0] sm:$0xff]
        %v1353 = vld [vmem:[%s1336 + $0xc0] sm:$0xff]
        %v1354 = vld [vmem:[%s1336 + $0xc8] sm:$0xff]
        %v1355 = vld [vmem:[%s1336 + $0xd8] sm:$0xff]
        %v1356 = vld [vmem:[%s1336 + $0xe0] sm:$0xff]
        %v1357 = vld [vmem:[%s1336 + $0xf0] sm:$0xff]
        %v1358 = vld [vmem:[%s1336 + $0xf8] sm:$0xff]
        %v1359 = vld [vmem:[%s1336 + $0x108] sm:$0xff]
        %v1360 = vld [vmem:[%s1336 + $0x110] sm:$0xff]
        %v1361 = vld [vmem:[%s1336 + $0x120] sm:$0xff]
        %v1362 = vld [vmem:[%s1336 + $0x128] sm:$0xff]
        %v1363 = vld [vmem:[%s1336 + $0x138] sm:$0xff]
        %v1364 = vld [vmem:[%s1336 + $0x140] sm:$0xff]
        %v1365 = vld [vmem:[%s1336 + $0x150] sm:$0xff]
        %v1366 = vld [vmem:[%s1336 + $0x158] sm:$0xff]
        %v1367 = vld [vmem:[%s1336 + $0x168] sm:$0xff]
        %v1368 = vld [vmem:[%s1336 + $0x170] sm:$0xff]
        %s1369 = scalar_lea.vmem %s1, 12
        %v1370 = vld [vmem:[%s1369] sm:$0xf]
        %v1372 = vsel %vm294, %v1337, 0
        %v1375 = vsel %vm294, %v1338, 0
        %v1378 = vsel %vm294, %v1339, 0
        %v1381 = vsel %vm294, %v1340, 0
        %v1384 = vsel %vm294, %v1341, 0
        %v1387 = vsel %vm294, %v1342, 0
        %v1390 = vsel %vm294, %v1343, 0
        %v1393 = vsel %vm294, %v1344, 0
        %v1396 = vsel %vm294, %v1345, 0
        %v1399 = vsel %vm294, %v1346, 0
        %v1402 = vsel %vm294, %v1347, 0
        %v1405 = vsel %vm294, %v1348, 0
        %v1408 = vsel %vm294, %v1349, 0
        %v1411 = vsel %vm294, %v1350, 0
        %v1414 = vsel %vm294, %v1351, 0
        %v1417 = vsel %vm294, %v1352, 0
        %v1420 = vsel %vm294, %v1353, 0
        %v1423 = vsel %vm294, %v1354, 0
        %v1426 = vsel %vm294, %v1355, 0
        %v1429 = vsel %vm294, %v1356, 0
        %v1432 = vsel %vm294, %v1357, 0
        %v1435 = vsel %vm294, %v1358, 0
        %v1438 = vsel %vm294, %v1359, 0
        %v1441 = vsel %vm294, %v1360, 0
        %v1444 = vsel %vm294, %v1361, 0
        %v1447 = vsel %vm294, %v1362, 0
        %v1450 = vsel %vm294, %v1363, 0
        %v1453 = vsel %vm294, %v1364, 0
        %v1456 = vsel %vm294, %v1365, 0
        %v1459 = vsel %vm294, %v1366, 0
        %v1462 = vsel %vm294, %v1367, 0
        %v1465 = vsel %vm294, %v1368, 0
        %v1468 = vsel %vm391, %v1370, 0
        %1470 = vmatprep.subr.mxu0 0.0
        %1471 = vmatpush1.msra.mxu0 0.0
        %1472 = vmatprep.subr.mxu0 0.0
        %1473 = vmatpush1.msra.mxu0 0.0
        %1474 = vmatprep.subr.mxu0 0.0
        %1475 = vmatpush1.msra.mxu0 0.0
        %1476 = vmatprep.subr.mxu0 0.0
        %1477 = vmatpush1.msra.mxu0 0.0
        %1478 = vmatprep.subr.mxu0 0.0
        %1479 = vmatpush1.msra.mxu0 0.0
        %1480 = vmatprep.subr.mxu0 0.0
        %1481 = vmatpush1.msra.mxu0 0.0
        %1482 = vmatprep.subr.mxu0 0.0
        %1483 = vmatpush1.msra.mxu0 0.0
        %1484 = vmatprep.subr.mxu0 0.0
        %1485 = vmatpush1.msra.mxu0 0.0
        %1486 = vmatprep.subr.mxu0 0.0
        %1487 = vmatpush1.msra.mxu0 0.0
        %1488 = vmatprep.subr.mxu0 0.0
        %1489 = vmatpush1.msra.mxu0 0.0
        %1490 = vmatprep.subr.mxu0 0.0
        %1491 = vmatpush1.msra.mxu0 0.0
        %1492 = vmatprep.subr.mxu0 0.0
        %1493 = vmatpush1.msra.mxu0 0.0
        %1494 = vmatprep.subr.mxu0 0.0
        %1495 = vmatpush1.msra.mxu0 0.0
        %1496 = vmatprep.subr.mxu0 0.0
        %1497 = vmatpush1.msra.mxu0 0.0
        %1498 = vmatprep.subr.mxu0 0.0
        %1499 = vmatpush1.msra.mxu0 0.0
        %1500 = vmatprep.subr.mxu0 0.0
        %1501 = vmatpush1.msra.mxu0 %v1468
        %1502 = vmatprep.subr.mxu0 0.0
        %1503 = vmatpush2.msra.mxu0 0.0
        %1504 = vmatprep.subr.mxu0 0.0
        %1505 = vmatpush2.msra.mxu0 0.0
        %1506 = vmatprep.subr.mxu0 0.0
        %1507 = vmatpush2.msra.mxu0 0.0
        %1508 = vmatprep.subr.mxu0 0.0
        %1509 = vmatpush2.msra.mxu0 0.0
        %1510 = vmatprep.subr.mxu0 0.0
        %1511 = vmatpush2.msra.mxu0 0.0
        %1512 = vmatprep.subr.mxu0 0.0
        %1513 = vmatpush2.msra.mxu0 0.0
        %1514 = vmatprep.subr.mxu0 0.0
        %1515 = vmatpush2.msra.mxu0 0.0
        %1516 = vmatprep.subr.mxu0 0.0
        %1517 = vmatpush2.msra.mxu0 0.0
        %1518 = vmatprep.subr.mxu0 0.0
        %1519 = vmatpush2.msra.mxu0 0.0
        %1520 = vmatprep.subr.mxu0 0.0
        %1521 = vmatpush2.msra.mxu0 0.0
        %1522 = vmatprep.subr.mxu0 0.0
        %1523 = vmatpush2.msra.mxu0 0.0
        %1524 = vmatprep.subr.mxu0 0.0
        %1525 = vmatpush2.msra.mxu0 0.0
        %1526 = vmatprep.subr.mxu0 0.0
        %1527 = vmatpush2.msra.mxu0 0.0
        %1528 = vmatprep.subr.mxu0 0.0
        %1529 = vmatpush2.msra.mxu0 0.0
        %1530 = vmatprep.subr.mxu0 0.0
        %1531 = vmatpush2.msra.mxu0 0.0
        %1532 = vmatprep.subr.mxu0 0.0
        %1533 = vmatpush2.msra.mxu0 0.0
        %1534 = vmatprep.mubr.f32.mxu0 0.0
        %1535 = vmatmul.mubr.f32.gmra.mxu0 %v1372
        %v1536 = vpop.f32.mrf.mxu0
        %v1537 = vadd.f32 0.0, %v1536
        %v1538 = vpop.f32.mrf.mxu0
        %1539 = vmatprep.mubr.f32.mxu0 0.0
        %1540 = vmatmul.mubr.f32.gmra.mxu0 %v1375
        %v1541 = vpop.f32.mrf.mxu0
        %v1542 = vadd.f32 0.0, %v1541
        %v1543 = vpop.f32.mrf.mxu0
        %1544 = vmatprep.mubr.f32.mxu0 0.0
        %1545 = vmatmul.mubr.f32.gmra.mxu0 %v1378
        %v1546 = vpop.f32.mrf.mxu0
        %v1547 = vadd.f32 0.0, %v1546
        %v1548 = vpop.f32.mrf.mxu0
        %1549 = vmatprep.mubr.f32.mxu0 0.0
        %1550 = vmatmul.mubr.f32.gmra.mxu0 %v1381
        %v1551 = vpop.f32.mrf.mxu0
        %v1552 = vadd.f32 0.0, %v1551
        %v1553 = vpop.f32.mrf.mxu0
        %1554 = vmatprep.mubr.f32.mxu0 0.0
        %1555 = vmatmul.mubr.f32.gmra.mxu0 %v1384
        %v1556 = vpop.f32.mrf.mxu0
        %v1557 = vadd.f32 0.0, %v1556
        %v1558 = vpop.f32.mrf.mxu0
        %1559 = vmatprep.mubr.f32.mxu0 0.0
        %1560 = vmatmul.mubr.f32.gmra.mxu0 %v1387
        %v1561 = vpop.f32.mrf.mxu0
        %v1562 = vadd.f32 0.0, %v1561
        %v1563 = vpop.f32.mrf.mxu0
        %1564 = vmatprep.mubr.f32.mxu0 0.0
        %1565 = vmatmul.mubr.f32.gmra.mxu0 %v1390
        %v1566 = vpop.f32.mrf.mxu0
        %v1567 = vadd.f32 0.0, %v1566
        %v1568 = vpop.f32.mrf.mxu0
        %1569 = vmatprep.mubr.f32.mxu0 0.0
        %1570 = vmatmul.mubr.f32.gmra.mxu0 %v1393
        %v1571 = vpop.f32.mrf.mxu0
        %v1572 = vadd.f32 0.0, %v1571
        %v1573 = vpop.f32.mrf.mxu0
        %1574 = vmatprep.mubr.f32.mxu0 0.0
        %1575 = vmatmul.mubr.f32.gmra.mxu0 %v1396
        %v1576 = vpop.f32.mrf.mxu0
        %v1577 = vadd.f32 0.0, %v1576
        %v1578 = vpop.f32.mrf.mxu0
        %1579 = vmatprep.mubr.f32.mxu0 0.0
        %1580 = vmatmul.mubr.f32.gmra.mxu0 %v1399
        %v1581 = vpop.f32.mrf.mxu0
        %v1582 = vadd.f32 0.0, %v1581
        %v1583 = vpop.f32.mrf.mxu0
        %1584 = vmatprep.mubr.f32.mxu0 0.0
        %1585 = vmatmul.mubr.f32.gmra.mxu0 %v1402
        %v1586 = vpop.f32.mrf.mxu0
        %v1587 = vadd.f32 0.0, %v1586
        %v1588 = vpop.f32.mrf.mxu0
        %1589 = vmatprep.mubr.f32.mxu0 0.0
        %1590 = vmatmul.mubr.f32.gmra.mxu0 %v1405
        %v1591 = vpop.f32.mrf.mxu0
        %v1592 = vadd.f32 0.0, %v1591
        %v1593 = vpop.f32.mrf.mxu0
        %1594 = vmatprep.mubr.f32.mxu0 0.0
        %1595 = vmatmul.mubr.f32.gmra.mxu0 %v1408
        %v1596 = vpop.f32.mrf.mxu0
        %v1597 = vadd.f32 0.0, %v1596
        %v1598 = vpop.f32.mrf.mxu0
        %1599 = vmatprep.mubr.f32.mxu0 0.0
        %1600 = vmatmul.mubr.f32.gmra.mxu0 %v1411
        %v1601 = vpop.f32.mrf.mxu0
        %v1602 = vadd.f32 0.0, %v1601
        %v1603 = vpop.f32.mrf.mxu0
        %1604 = vmatprep.mubr.f32.mxu0 0.0
        %1605 = vmatmul.mubr.f32.gmra.mxu0 %v1414
        %v1606 = vpop.f32.mrf.mxu0
        %v1607 = vadd.f32 0.0, %v1606
        %v1608 = vpop.f32.mrf.mxu0
        %1609 = vmatprep.mubr.f32.mxu0 0.0
        %1610 = vmatmul.mubr.f32.gmra.mxu0 %v1417
        %v1611 = vpop.f32.mrf.mxu0
        %v1612 = vadd.f32 0.0, %v1611
        %v1613 = vpop.f32.mrf.mxu0
        %1614 = vmatprep.mubr.f32.mxu0 0.0
        %1615 = vmatmul.mubr.f32.gmra.mxu0 %v1420
        %v1616 = vpop.f32.mrf.mxu0
        %v1617 = vadd.f32 0.0, %v1616
        %v1618 = vpop.f32.mrf.mxu0
        %1619 = vmatprep.mubr.f32.mxu0 0.0
        %1620 = vmatmul.mubr.f32.gmra.mxu0 %v1423
        %v1621 = vpop.f32.mrf.mxu0
        %v1622 = vadd.f32 0.0, %v1621
        %v1623 = vpop.f32.mrf.mxu0
        %1624 = vmatprep.mubr.f32.mxu0 0.0
        %1625 = vmatmul.mubr.f32.gmra.mxu0 %v1426
        %v1626 = vpop.f32.mrf.mxu0
        %v1627 = vadd.f32 0.0, %v1626
        %v1628 = vpop.f32.mrf.mxu0
        %1629 = vmatprep.mubr.f32.mxu0 0.0
        %1630 = vmatmul.mubr.f32.gmra.mxu0 %v1429
        %v1631 = vpop.f32.mrf.mxu0
        %v1632 = vadd.f32 0.0, %v1631
        %v1633 = vpop.f32.mrf.mxu0
        %1634 = vmatprep.mubr.f32.mxu0 0.0
        %1635 = vmatmul.mubr.f32.gmra.mxu0 %v1432
        %v1636 = vpop.f32.mrf.mxu0
        %v1637 = vadd.f32 0.0, %v1636
        %v1638 = vpop.f32.mrf.mxu0
        %1639 = vmatprep.mubr.f32.mxu0 0.0
        %1640 = vmatmul.mubr.f32.gmra.mxu0 %v1435
        %v1641 = vpop.f32.mrf.mxu0
        %v1642 = vadd.f32 0.0, %v1641
        %v1643 = vpop.f32.mrf.mxu0
        %1644 = vmatprep.mubr.f32.mxu0 0.0
        %1645 = vmatmul.mubr.f32.gmra.mxu0 %v1438
        %v1646 = vpop.f32.mrf.mxu0
        %v1647 = vadd.f32 0.0, %v1646
        %v1648 = vpop.f32.mrf.mxu0
        %1649 = vmatprep.mubr.f32.mxu0 0.0
        %1650 = vmatmul.mubr.f32.gmra.mxu0 %v1441
        %v1651 = vpop.f32.mrf.mxu0
        %v1652 = vadd.f32 0.0, %v1651
        %v1653 = vpop.f32.mrf.mxu0
        %1654 = vmatprep.mubr.f32.mxu0 0.0
        %1655 = vmatmul.mubr.f32.gmra.mxu0 %v1444
        %v1656 = vpop.f32.mrf.mxu0
        %v1657 = vadd.f32 0.0, %v1656
        %v1658 = vpop.f32.mrf.mxu0
        %1659 = vmatprep.mubr.f32.mxu0 0.0
        %1660 = vmatmul.mubr.f32.gmra.mxu0 %v1447
        %v1661 = vpop.f32.mrf.mxu0
        %v1662 = vadd.f32 0.0, %v1661
        %v1663 = vpop.f32.mrf.mxu0
        %1664 = vmatprep.mubr.f32.mxu0 0.0
        %1665 = vmatmul.mubr.f32.gmra.mxu0 %v1450
        %v1666 = vpop.f32.mrf.mxu0
        %v1667 = vadd.f32 0.0, %v1666
        %v1668 = vpop.f32.mrf.mxu0
        %1669 = vmatprep.mubr.f32.mxu0 0.0
        %1670 = vmatmul.mubr.f32.gmra.mxu0 %v1453
        %v1671 = vpop.f32.mrf.mxu0
        %v1672 = vadd.f32 0.0, %v1671
        %v1673 = vpop.f32.mrf.mxu0
        %1674 = vmatprep.mubr.f32.mxu0 0.0
        %1675 = vmatmul.mubr.f32.gmra.mxu0 %v1456
        %v1676 = vpop.f32.mrf.mxu0
        %v1677 = vadd.f32 0.0, %v1676
        %v1678 = vpop.f32.mrf.mxu0
        %1679 = vmatprep.mubr.f32.mxu0 0.0
        %1680 = vmatmul.mubr.f32.gmra.mxu0 %v1459
        %v1681 = vpop.f32.mrf.mxu0
        %v1682 = vadd.f32 0.0, %v1681
        %v1683 = vpop.f32.mrf.mxu0
        %1684 = vmatprep.mubr.f32.mxu0 0.0
        %1685 = vmatmul.mubr.f32.gmra.mxu0 %v1462
        %v1686 = vpop.f32.mrf.mxu0
        %v1687 = vadd.f32 0.0, %v1686
        %v1688 = vpop.f32.mrf.mxu0
        %1689 = vmatprep.mubr.f32.mxu0 0.0
        %1690 = vmatmul.mubr.f32.gmra.mxu0 %v1465
        %v1691 = vpop.f32.mrf.mxu0
        %v1692 = vadd.f32 0.0, %v1691
        %v1693 = vpop.f32.mrf.mxu0
        %1694 = vdwg.mxu0
        %v1695 = vadd.f32 %v1302, %v1537
        %v1696 = vadd.f32 %v1303, %v1542
        %v1697 = vadd.f32 %v1304, %v1547
        %v1698 = vadd.f32 %v1305, %v1552
        %v1699 = vadd.f32 %v1306, %v1557
        %v1700 = vadd.f32 %v1307, %v1562
        %v1701 = vadd.f32 %v1308, %v1567
        %v1702 = vadd.f32 %v1309, %v1572
        %v1703 = vadd.f32 %v1310, %v1577
        %v1704 = vadd.f32 %v1311, %v1582
        %v1705 = vadd.f32 %v1312, %v1587
        %v1706 = vadd.f32 %v1313, %v1592
        %v1707 = vadd.f32 %v1314, %v1597
        %v1708 = vadd.f32 %v1315, %v1602
        %v1709 = vadd.f32 %v1316, %v1607
        %v1710 = vadd.f32 %v1317, %v1612
        %v1711 = vadd.f32 %v1318, %v1617
        %v1712 = vadd.f32 %v1319, %v1622
        %v1713 = vadd.f32 %v1320, %v1627
        %v1714 = vadd.f32 %v1321, %v1632
        %v1715 = vadd.f32 %v1322, %v1637
        %v1716 = vadd.f32 %v1323, %v1642
        %v1717 = vadd.f32 %v1324, %v1647
        %v1718 = vadd.f32 %v1325, %v1652
        %v1719 = vadd.f32 %v1326, %v1657
        %v1720 = vadd.f32 %v1327, %v1662
        %v1721 = vadd.f32 %v1328, %v1667
        %v1722 = vadd.f32 %v1329, %v1672
        %v1723 = vadd.f32 %v1330, %v1677
        %v1724 = vadd.f32 %v1331, %v1682
        %v1725 = vadd.f32 %v1332, %v1687
        %v1726 = vadd.f32 %v1333, %v1692
        %v1727 = vld [vmem:[%s1336 + $0x1] sm:$0xff]
        %v1728 = vld [vmem:[%s1336 + $0x9] sm:$0xff]
        %v1729 = vld [vmem:[%s1336 + $0x19] sm:$0xff]
        %v1730 = vld [vmem:[%s1336 + $0x21] sm:$0xff]
        %v1731 = vld [vmem:[%s1336 + $0x31] sm:$0xff]
        %v1732 = vld [vmem:[%s1336 + $0x39] sm:$0xff]
        %v1733 = vld [vmem:[%s1336 + $0x49] sm:$0xff]
        %v1734 = vld [vmem:[%s1336 + $0x51] sm:$0xff]
        %v1735 = vld [vmem:[%s1336 + $0x61] sm:$0xff]
        %v1736 = vld [vmem:[%s1336 + $0x69] sm:$0xff]
        %v1737 = vld [vmem:[%s1336 + $0x79] sm:$0xff]
        %v1738 = vld [vmem:[%s1336 + $0x81] sm:$0xff]
        %v1739 = vld [vmem:[%s1336 + $0x91] sm:$0xff]
        %v1740 = vld [vmem:[%s1336 + $0x99] sm:$0xff]
        %v1741 = vld [vmem:[%s1336 + $0xa9] sm:$0xff]
        %v1742 = vld [vmem:[%s1336 + $0xb1] sm:$0xff]
        %v1743 = vld [vmem:[%s1336 + $0xc1] sm:$0xff]
        %v1744 = vld [vmem:[%s1336 + $0xc9] sm:$0xff]
        %v1745 = vld [vmem:[%s1336 + $0xd9] sm:$0xff]
        %v1746 = vld [vmem:[%s1336 + $0xe1] sm:$0xff]
        %v1747 = vld [vmem:[%s1336 + $0xf1] sm:$0xff]
        %v1748 = vld [vmem:[%s1336 + $0xf9] sm:$0xff]
        %v1749 = vld [vmem:[%s1336 + $0x109] sm:$0xff]
        %v1750 = vld [vmem:[%s1336 + $0x111] sm:$0xff]
        %v1751 = vld [vmem:[%s1336 + $0x121] sm:$0xff]
        %v1752 = vld [vmem:[%s1336 + $0x129] sm:$0xff]
        %v1753 = vld [vmem:[%s1336 + $0x139] sm:$0xff]
        %v1754 = vld [vmem:[%s1336 + $0x141] sm:$0xff]
        %v1755 = vld [vmem:[%s1336 + $0x151] sm:$0xff]
        %v1756 = vld [vmem:[%s1336 + $0x159] sm:$0xff]
        %v1757 = vld [vmem:[%s1336 + $0x169] sm:$0xff]
        %v1758 = vld [vmem:[%s1336 + $0x171] sm:$0xff]
        %s1759 = scalar_lea.vmem %s1, 16
        %v1760 = vld [vmem:[%s1759] sm:$0xf]
        %v1762 = vsel %vm294, %v1727, 0
        %v1765 = vsel %vm294, %v1728, 0
        %v1768 = vsel %vm294, %v1729, 0
        %v1771 = vsel %vm294, %v1730, 0
        %v1774 = vsel %vm294, %v1731, 0
        %v1777 = vsel %vm294, %v1732, 0
        %v1780 = vsel %vm294, %v1733, 0
        %v1783 = vsel %vm294, %v1734, 0
        %v1786 = vsel %vm294, %v1735, 0
        %v1789 = vsel %vm294, %v1736, 0
        %v1792 = vsel %vm294, %v1737, 0
        %v1795 = vsel %vm294, %v1738, 0
        %v1798 = vsel %vm294, %v1739, 0
        %v1801 = vsel %vm294, %v1740, 0
        %v1804 = vsel %vm294, %v1741, 0
        %v1807 = vsel %vm294, %v1742, 0
        %v1810 = vsel %vm294, %v1743, 0
        %v1813 = vsel %vm294, %v1744, 0
        %v1816 = vsel %vm294, %v1745, 0
        %v1819 = vsel %vm294, %v1746, 0
        %v1822 = vsel %vm294, %v1747, 0
        %v1825 = vsel %vm294, %v1748, 0
        %v1828 = vsel %vm294, %v1749, 0
        %v1831 = vsel %vm294, %v1750, 0
        %v1834 = vsel %vm294, %v1751, 0
        %v1837 = vsel %vm294, %v1752, 0
        %v1840 = vsel %vm294, %v1753, 0
        %v1843 = vsel %vm294, %v1754, 0
        %v1846 = vsel %vm294, %v1755, 0
        %v1849 = vsel %vm294, %v1756, 0
        %v1852 = vsel %vm294, %v1757, 0
        %v1855 = vsel %vm294, %v1758, 0
        %v1858 = vsel %vm391, %v1760, 0
        %1860 = vmatprep.subr.mxu0 0.0
        %1861 = vmatpush1.msra.mxu0 0.0
        %1862 = vmatprep.subr.mxu0 0.0
        %1863 = vmatpush1.msra.mxu0 0.0
        %1864 = vmatprep.subr.mxu0 0.0
        %1865 = vmatpush1.msra.mxu0 0.0
        %1866 = vmatprep.subr.mxu0 0.0
        %1867 = vmatpush1.msra.mxu0 0.0
        %1868 = vmatprep.subr.mxu0 0.0
        %1869 = vmatpush1.msra.mxu0 0.0
        %1870 = vmatprep.subr.mxu0 0.0
        %1871 = vmatpush1.msra.mxu0 0.0
        %1872 = vmatprep.subr.mxu0 0.0
        %1873 = vmatpush1.msra.mxu0 0.0
        %1874 = vmatprep.subr.mxu0 0.0
        %1875 = vmatpush1.msra.mxu0 0.0
        %1876 = vmatprep.subr.mxu0 0.0
        %1877 = vmatpush1.msra.mxu0 0.0
        %1878 = vmatprep.subr.mxu0 0.0
        %1879 = vmatpush1.msra.mxu0 0.0
        %1880 = vmatprep.subr.mxu0 0.0
        %1881 = vmatpush1.msra.mxu0 0.0
        %1882 = vmatprep.subr.mxu0 0.0
        %1883 = vmatpush1.msra.mxu0 0.0
        %1884 = vmatprep.subr.mxu0 0.0
        %1885 = vmatpush1.msra.mxu0 0.0
        %1886 = vmatprep.subr.mxu0 0.0
        %1887 = vmatpush1.msra.mxu0 0.0
        %1888 = vmatprep.subr.mxu0 0.0
        %1889 = vmatpush1.msra.mxu0 0.0
        %1890 = vmatprep.subr.mxu0 0.0
        %1891 = vmatpush1.msra.mxu0 %v1858
        %1892 = vmatprep.subr.mxu0 0.0
        %1893 = vmatpush2.msra.mxu0 0.0
        %1894 = vmatprep.subr.mxu0 0.0
        %1895 = vmatpush2.msra.mxu0 0.0
        %1896 = vmatprep.subr.mxu0 0.0
        %1897 = vmatpush2.msra.mxu0 0.0
        %1898 = vmatprep.subr.mxu0 0.0
        %1899 = vmatpush2.msra.mxu0 0.0
        %1900 = vmatprep.subr.mxu0 0.0
        %1901 = vmatpush2.msra.mxu0 0.0
        %1902 = vmatprep.subr.mxu0 0.0
        %1903 = vmatpush2.msra.mxu0 0.0
        %1904 = vmatprep.subr.mxu0 0.0
        %1905 = vmatpush2.msra.mxu0 0.0
        %1906 = vmatprep.subr.mxu0 0.0
        %1907 = vmatpush2.msra.mxu0 0.0
        %1908 = vmatprep.subr.mxu0 0.0
        %1909 = vmatpush2.msra.mxu0 0.0
        %1910 = vmatprep.subr.mxu0 0.0
        %1911 = vmatpush2.msra.mxu0 0.0
        %1912 = vmatprep.subr.mxu0 0.0
        %1913 = vmatpush2.msra.mxu0 0.0
        %1914 = vmatprep.subr.mxu0 0.0
        %1915 = vmatpush2.msra.mxu0 0.0
        %1916 = vmatprep.subr.mxu0 0.0
        %1917 = vmatpush2.msra.mxu0 0.0
        %1918 = vmatprep.subr.mxu0 0.0
        %1919 = vmatpush2.msra.mxu0 0.0
        %1920 = vmatprep.subr.mxu0 0.0
        %1921 = vmatpush2.msra.mxu0 0.0
        %1922 = vmatprep.subr.mxu0 0.0
        %1923 = vmatpush2.msra.mxu0 0.0
        %1924 = vmatprep.mubr.f32.mxu0 0.0
        %1925 = vmatmul.mubr.f32.gmra.mxu0 %v1762
        %v1926 = vpop.f32.mrf.mxu0
        %v1927 = vadd.f32 0.0, %v1926
        %v1928 = vpop.f32.mrf.mxu0
        %1929 = vmatprep.mubr.f32.mxu0 0.0
        %1930 = vmatmul.mubr.f32.gmra.mxu0 %v1765
        %v1931 = vpop.f32.mrf.mxu0
        %v1932 = vadd.f32 0.0, %v1931
        %v1933 = vpop.f32.mrf.mxu0
        %1934 = vmatprep.mubr.f32.mxu0 0.0
        %1935 = vmatmul.mubr.f32.gmra.mxu0 %v1768
        %v1936 = vpop.f32.mrf.mxu0
        %v1937 = vadd.f32 0.0, %v1936
        %v1938 = vpop.f32.mrf.mxu0
        %1939 = vmatprep.mubr.f32.mxu0 0.0
        %1940 = vmatmul.mubr.f32.gmra.mxu0 %v1771
        %v1941 = vpop.f32.mrf.mxu0
        %v1942 = vadd.f32 0.0, %v1941
        %v1943 = vpop.f32.mrf.mxu0
        %1944 = vmatprep.mubr.f32.mxu0 0.0
        %1945 = vmatmul.mubr.f32.gmra.mxu0 %v1774
        %v1946 = vpop.f32.mrf.mxu0
        %v1947 = vadd.f32 0.0, %v1946
        %v1948 = vpop.f32.mrf.mxu0
        %1949 = vmatprep.mubr.f32.mxu0 0.0
        %1950 = vmatmul.mubr.f32.gmra.mxu0 %v1777
        %v1951 = vpop.f32.mrf.mxu0
        %v1952 = vadd.f32 0.0, %v1951
        %v1953 = vpop.f32.mrf.mxu0
        %1954 = vmatprep.mubr.f32.mxu0 0.0
        %1955 = vmatmul.mubr.f32.gmra.mxu0 %v1780
        %v1956 = vpop.f32.mrf.mxu0
        %v1957 = vadd.f32 0.0, %v1956
        %v1958 = vpop.f32.mrf.mxu0
        %1959 = vmatprep.mubr.f32.mxu0 0.0
        %1960 = vmatmul.mubr.f32.gmra.mxu0 %v1783
        %v1961 = vpop.f32.mrf.mxu0
        %v1962 = vadd.f32 0.0, %v1961
        %v1963 = vpop.f32.mrf.mxu0
        %1964 = vmatprep.mubr.f32.mxu0 0.0
        %1965 = vmatmul.mubr.f32.gmra.mxu0 %v1786
        %v1966 = vpop.f32.mrf.mxu0
        %v1967 = vadd.f32 0.0, %v1966
        %v1968 = vpop.f32.mrf.mxu0
        %1969 = vmatprep.mubr.f32.mxu0 0.0
        %1970 = vmatmul.mubr.f32.gmra.mxu0 %v1789
        %v1971 = vpop.f32.mrf.mxu0
        %v1972 = vadd.f32 0.0, %v1971
        %v1973 = vpop.f32.mrf.mxu0
        %1974 = vmatprep.mubr.f32.mxu0 0.0
        %1975 = vmatmul.mubr.f32.gmra.mxu0 %v1792
        %v1976 = vpop.f32.mrf.mxu0
        %v1977 = vadd.f32 0.0, %v1976
        %v1978 = vpop.f32.mrf.mxu0
        %1979 = vmatprep.mubr.f32.mxu0 0.0
        %1980 = vmatmul.mubr.f32.gmra.mxu0 %v1795
        %v1981 = vpop.f32.mrf.mxu0
        %v1982 = vadd.f32 0.0, %v1981
        %v1983 = vpop.f32.mrf.mxu0
        %1984 = vmatprep.mubr.f32.mxu0 0.0
        %1985 = vmatmul.mubr.f32.gmra.mxu0 %v1798
        %v1986 = vpop.f32.mrf.mxu0
        %v1987 = vadd.f32 0.0, %v1986
        %v1988 = vpop.f32.mrf.mxu0
        %1989 = vmatprep.mubr.f32.mxu0 0.0
        %1990 = vmatmul.mubr.f32.gmra.mxu0 %v1801
        %v1991 = vpop.f32.mrf.mxu0
        %v1992 = vadd.f32 0.0, %v1991
        %v1993 = vpop.f32.mrf.mxu0
        %1994 = vmatprep.mubr.f32.mxu0 0.0
        %1995 = vmatmul.mubr.f32.gmra.mxu0 %v1804
        %v1996 = vpop.f32.mrf.mxu0
        %v1997 = vadd.f32 0.0, %v1996
        %v1998 = vpop.f32.mrf.mxu0
        %1999 = vmatprep.mubr.f32.mxu0 0.0
        %2000 = vmatmul.mubr.f32.gmra.mxu0 %v1807
        %v2001 = vpop.f32.mrf.mxu0
        %v2002 = vadd.f32 0.0, %v2001
        %v2003 = vpop.f32.mrf.mxu0
        %2004 = vmatprep.mubr.f32.mxu0 0.0
        %2005 = vmatmul.mubr.f32.gmra.mxu0 %v1810
        %v2006 = vpop.f32.mrf.mxu0
        %v2007 = vadd.f32 0.0, %v2006
        %v2008 = vpop.f32.mrf.mxu0
        %2009 = vmatprep.mubr.f32.mxu0 0.0
        %2010 = vmatmul.mubr.f32.gmra.mxu0 %v1813
        %v2011 = vpop.f32.mrf.mxu0
        %v2012 = vadd.f32 0.0, %v2011
        %v2013 = vpop.f32.mrf.mxu0
        %2014 = vmatprep.mubr.f32.mxu0 0.0
        %2015 = vmatmul.mubr.f32.gmra.mxu0 %v1816
        %v2016 = vpop.f32.mrf.mxu0
        %v2017 = vadd.f32 0.0, %v2016
        %v2018 = vpop.f32.mrf.mxu0
        %2019 = vmatprep.mubr.f32.mxu0 0.0
        %2020 = vmatmul.mubr.f32.gmra.mxu0 %v1819
        %v2021 = vpop.f32.mrf.mxu0
        %v2022 = vadd.f32 0.0, %v2021
        %v2023 = vpop.f32.mrf.mxu0
        %2024 = vmatprep.mubr.f32.mxu0 0.0
        %2025 = vmatmul.mubr.f32.gmra.mxu0 %v1822
        %v2026 = vpop.f32.mrf.mxu0
        %v2027 = vadd.f32 0.0, %v2026
        %v2028 = vpop.f32.mrf.mxu0
        %2029 = vmatprep.mubr.f32.mxu0 0.0
        %2030 = vmatmul.mubr.f32.gmra.mxu0 %v1825
        %v2031 = vpop.f32.mrf.mxu0
        %v2032 = vadd.f32 0.0, %v2031
        %v2033 = vpop.f32.mrf.mxu0
        %2034 = vmatprep.mubr.f32.mxu0 0.0
        %2035 = vmatmul.mubr.f32.gmra.mxu0 %v1828
        %v2036 = vpop.f32.mrf.mxu0
        %v2037 = vadd.f32 0.0, %v2036
        %v2038 = vpop.f32.mrf.mxu0
        %2039 = vmatprep.mubr.f32.mxu0 0.0
        %2040 = vmatmul.mubr.f32.gmra.mxu0 %v1831
        %v2041 = vpop.f32.mrf.mxu0
        %v2042 = vadd.f32 0.0, %v2041
        %v2043 = vpop.f32.mrf.mxu0
        %2044 = vmatprep.mubr.f32.mxu0 0.0
        %2045 = vmatmul.mubr.f32.gmra.mxu0 %v1834
        %v2046 = vpop.f32.mrf.mxu0
        %v2047 = vadd.f32 0.0, %v2046
        %v2048 = vpop.f32.mrf.mxu0
        %2049 = vmatprep.mubr.f32.mxu0 0.0
        %2050 = vmatmul.mubr.f32.gmra.mxu0 %v1837
        %v2051 = vpop.f32.mrf.mxu0
        %v2052 = vadd.f32 0.0, %v2051
        %v2053 = vpop.f32.mrf.mxu0
        %2054 = vmatprep.mubr.f32.mxu0 0.0
        %2055 = vmatmul.mubr.f32.gmra.mxu0 %v1840
        %v2056 = vpop.f32.mrf.mxu0
        %v2057 = vadd.f32 0.0, %v2056
        %v2058 = vpop.f32.mrf.mxu0
        %2059 = vmatprep.mubr.f32.mxu0 0.0
        %2060 = vmatmul.mubr.f32.gmra.mxu0 %v1843
        %v2061 = vpop.f32.mrf.mxu0
        %v2062 = vadd.f32 0.0, %v2061
        %v2063 = vpop.f32.mrf.mxu0
        %2064 = vmatprep.mubr.f32.mxu0 0.0
        %2065 = vmatmul.mubr.f32.gmra.mxu0 %v1846
        %v2066 = vpop.f32.mrf.mxu0
        %v2067 = vadd.f32 0.0, %v2066
        %v2068 = vpop.f32.mrf.mxu0
        %2069 = vmatprep.mubr.f32.mxu0 0.0
        %2070 = vmatmul.mubr.f32.gmra.mxu0 %v1849
        %v2071 = vpop.f32.mrf.mxu0
        %v2072 = vadd.f32 0.0, %v2071
        %v2073 = vpop.f32.mrf.mxu0
        %2074 = vmatprep.mubr.f32.mxu0 0.0
        %2075 = vmatmul.mubr.f32.gmra.mxu0 %v1852
        %v2076 = vpop.f32.mrf.mxu0
        %v2077 = vadd.f32 0.0, %v2076
        %v2078 = vpop.f32.mrf.mxu0
        %2079 = vmatprep.mubr.f32.mxu0 0.0
        %2080 = vmatmul.mubr.f32.gmra.mxu0 %v1855
        %v2081 = vpop.f32.mrf.mxu0
        %v2082 = vadd.f32 0.0, %v2081
        %v2083 = vpop.f32.mrf.mxu0
        %2084 = vdwg.mxu0
        %v2085 = vadd.f32 %v1695, %v1927
        %v2086 = vadd.f32 %v1696, %v1932
        %v2087 = vadd.f32 %v1697, %v1937
        %v2088 = vadd.f32 %v1698, %v1942
        %v2089 = vadd.f32 %v1699, %v1947
        %v2090 = vadd.f32 %v1700, %v1952
        %v2091 = vadd.f32 %v1701, %v1957
        %v2092 = vadd.f32 %v1702, %v1962
        %v2093 = vadd.f32 %v1703, %v1967
        %v2094 = vadd.f32 %v1704, %v1972
        %v2095 = vadd.f32 %v1705, %v1977
        %v2096 = vadd.f32 %v1706, %v1982
        %v2097 = vadd.f32 %v1707, %v1987
        %v2098 = vadd.f32 %v1708, %v1992
        %v2099 = vadd.f32 %v1709, %v1997
        %v2100 = vadd.f32 %v1710, %v2002
        %v2101 = vadd.f32 %v1711, %v2007
        %v2102 = vadd.f32 %v1712, %v2012
        %v2103 = vadd.f32 %v1713, %v2017
        %v2104 = vadd.f32 %v1714, %v2022
        %v2105 = vadd.f32 %v1715, %v2027
        %v2106 = vadd.f32 %v1716, %v2032
        %v2107 = vadd.f32 %v1717, %v2037
        %v2108 = vadd.f32 %v1718, %v2042
        %v2109 = vadd.f32 %v1719, %v2047
        %v2110 = vadd.f32 %v1720, %v2052
        %v2111 = vadd.f32 %v1721, %v2057
        %v2112 = vadd.f32 %v1722, %v2062
        %v2113 = vadd.f32 %v1723, %v2067
        %v2114 = vadd.f32 %v1724, %v2072
        %v2115 = vadd.f32 %v1725, %v2077
        %v2116 = vadd.f32 %v1726, %v2082
        %v2117 = vld [vmem:[%s1336 + $0x2] sm:$0xff]
        %v2118 = vld [vmem:[%s1336 + $0xa] sm:$0xff]
        %v2119 = vld [vmem:[%s1336 + $0x1a] sm:$0xff]
        %v2120 = vld [vmem:[%s1336 + $0x22] sm:$0xff]
        %v2121 = vld [vmem:[%s1336 + $0x32] sm:$0xff]
        %v2122 = vld [vmem:[%s1336 + $0x3a] sm:$0xff]
        %v2123 = vld [vmem:[%s1336 + $0x4a] sm:$0xff]
        %v2124 = vld [vmem:[%s1336 + $0x52] sm:$0xff]
        %v2125 = vld [vmem:[%s1336 + $0x62] sm:$0xff]
        %v2126 = vld [vmem:[%s1336 + $0x6a] sm:$0xff]
        %v2127 = vld [vmem:[%s1336 + $0x7a] sm:$0xff]
        %v2128 = vld [vmem:[%s1336 + $0x82] sm:$0xff]
        %v2129 = vld [vmem:[%s1336 + $0x92] sm:$0xff]
        %v2130 = vld [vmem:[%s1336 + $0x9a] sm:$0xff]
        %v2131 = vld [vmem:[%s1336 + $0xaa] sm:$0xff]
        %v2132 = vld [vmem:[%s1336 + $0xb2] sm:$0xff]
        %v2133 = vld [vmem:[%s1336 + $0xc2] sm:$0xff]
        %v2134 = vld [vmem:[%s1336 + $0xca] sm:$0xff]
        %v2135 = vld [vmem:[%s1336 + $0xda] sm:$0xff]
        %v2136 = vld [vmem:[%s1336 + $0xe2] sm:$0xff]
        %v2137 = vld [vmem:[%s1336 + $0xf2] sm:$0xff]
        %v2138 = vld [vmem:[%s1336 + $0xfa] sm:$0xff]
        %v2139 = vld [vmem:[%s1336 + $0x10a] sm:$0xff]
        %v2140 = vld [vmem:[%s1336 + $0x112] sm:$0xff]
        %v2141 = vld [vmem:[%s1336 + $0x122] sm:$0xff]
        %v2142 = vld [vmem:[%s1336 + $0x12a] sm:$0xff]
        %v2143 = vld [vmem:[%s1336 + $0x13a] sm:$0xff]
        %v2144 = vld [vmem:[%s1336 + $0x142] sm:$0xff]
        %v2145 = vld [vmem:[%s1336 + $0x152] sm:$0xff]
        %v2146 = vld [vmem:[%s1336 + $0x15a] sm:$0xff]
        %v2147 = vld [vmem:[%s1336 + $0x16a] sm:$0xff]
        %v2148 = vld [vmem:[%s1336 + $0x172] sm:$0xff]
        %s2149 = scalar_lea.vmem %s1, 20
        %v2150 = vld [vmem:[%s2149] sm:$0xf]
        %v2152 = vsel %vm294, %v2117, 0
        %v2155 = vsel %vm294, %v2118, 0
        %v2158 = vsel %vm294, %v2119, 0
        %v2161 = vsel %vm294, %v2120, 0
        %v2164 = vsel %vm294, %v2121, 0
        %v2167 = vsel %vm294, %v2122, 0
        %v2170 = vsel %vm294, %v2123, 0
        %v2173 = vsel %vm294, %v2124, 0
        %v2176 = vsel %vm294, %v2125, 0
        %v2179 = vsel %vm294, %v2126, 0
        %v2182 = vsel %vm294, %v2127, 0
        %v2185 = vsel %vm294, %v2128, 0
        %v2188 = vsel %vm294, %v2129, 0
        %v2191 = vsel %vm294, %v2130, 0
        %v2194 = vsel %vm294, %v2131, 0
        %v2197 = vsel %vm294, %v2132, 0
        %v2200 = vsel %vm294, %v2133, 0
        %v2203 = vsel %vm294, %v2134, 0
        %v2206 = vsel %vm294, %v2135, 0
        %v2209 = vsel %vm294, %v2136, 0
        %v2212 = vsel %vm294, %v2137, 0
        %v2215 = vsel %vm294, %v2138, 0
        %v2218 = vsel %vm294, %v2139, 0
        %v2221 = vsel %vm294, %v2140, 0
        %v2224 = vsel %vm294, %v2141, 0
        %v2227 = vsel %vm294, %v2142, 0
        %v2230 = vsel %vm294, %v2143, 0
        %v2233 = vsel %vm294, %v2144, 0
        %v2236 = vsel %vm294, %v2145, 0
        %v2239 = vsel %vm294, %v2146, 0
        %v2242 = vsel %vm294, %v2147, 0
        %v2245 = vsel %vm294, %v2148, 0
        %v2248 = vsel %vm391, %v2150, 0
        %2250 = vmatprep.subr.mxu0 0.0
        %2251 = vmatpush1.msra.mxu0 0.0
        %2252 = vmatprep.subr.mxu0 0.0
        %2253 = vmatpush1.msra.mxu0 0.0
        %2254 = vmatprep.subr.mxu0 0.0
        %2255 = vmatpush1.msra.mxu0 0.0
        %2256 = vmatprep.subr.mxu0 0.0
        %2257 = vmatpush1.msra.mxu0 0.0
        %2258 = vmatprep.subr.mxu0 0.0
        %2259 = vmatpush1.msra.mxu0 0.0
        %2260 = vmatprep.subr.mxu0 0.0
        %2261 = vmatpush1.msra.mxu0 0.0
        %2262 = vmatprep.subr.mxu0 0.0
        %2263 = vmatpush1.msra.mxu0 0.0
        %2264 = vmatprep.subr.mxu0 0.0
        %2265 = vmatpush1.msra.mxu0 0.0
        %2266 = vmatprep.subr.mxu0 0.0
        %2267 = vmatpush1.msra.mxu0 0.0
        %2268 = vmatprep.subr.mxu0 0.0
        %2269 = vmatpush1.msra.mxu0 0.0
        %2270 = vmatprep.subr.mxu0 0.0
        %2271 = vmatpush1.msra.mxu0 0.0
        %2272 = vmatprep.subr.mxu0 0.0
        %2273 = vmatpush1.msra.mxu0 0.0
        %2274 = vmatprep.subr.mxu0 0.0
        %2275 = vmatpush1.msra.mxu0 0.0
        %2276 = vmatprep.subr.mxu0 0.0
        %2277 = vmatpush1.msra.mxu0 0.0
        %2278 = vmatprep.subr.mxu0 0.0
        %2279 = vmatpush1.msra.mxu0 0.0
        %2280 = vmatprep.subr.mxu0 0.0
        %2281 = vmatpush1.msra.mxu0 %v2248
        %2282 = vmatprep.subr.mxu0 0.0
        %2283 = vmatpush2.msra.mxu0 0.0
        %2284 = vmatprep.subr.mxu0 0.0
        %2285 = vmatpush2.msra.mxu0 0.0
        %2286 = vmatprep.subr.mxu0 0.0
        %2287 = vmatpush2.msra.mxu0 0.0
        %2288 = vmatprep.subr.mxu0 0.0
        %2289 = vmatpush2.msra.mxu0 0.0
        %2290 = vmatprep.subr.mxu0 0.0
        %2291 = vmatpush2.msra.mxu0 0.0
        %2292 = vmatprep.subr.mxu0 0.0
        %2293 = vmatpush2.msra.mxu0 0.0
        %2294 = vmatprep.subr.mxu0 0.0
        %2295 = vmatpush2.msra.mxu0 0.0
        %2296 = vmatprep.subr.mxu0 0.0
        %2297 = vmatpush2.msra.mxu0 0.0
        %2298 = vmatprep.subr.mxu0 0.0
        %2299 = vmatpush2.msra.mxu0 0.0
        %2300 = vmatprep.subr.mxu0 0.0
        %2301 = vmatpush2.msra.mxu0 0.0
        %2302 = vmatprep.subr.mxu0 0.0
        %2303 = vmatpush2.msra.mxu0 0.0
        %2304 = vmatprep.subr.mxu0 0.0
        %2305 = vmatpush2.msra.mxu0 0.0
        %2306 = vmatprep.subr.mxu0 0.0
        %2307 = vmatpush2.msra.mxu0 0.0
        %2308 = vmatprep.subr.mxu0 0.0
        %2309 = vmatpush2.msra.mxu0 0.0
        %2310 = vmatprep.subr.mxu0 0.0
        %2311 = vmatpush2.msra.mxu0 0.0
        %2312 = vmatprep.subr.mxu0 0.0
        %2313 = vmatpush2.msra.mxu0 0.0
        %2314 = vmatprep.mubr.f32.mxu0 0.0
        %2315 = vmatmul.mubr.f32.gmra.mxu0 %v2152
        %v2316 = vpop.f32.mrf.mxu0
        %v2317 = vadd.f32 0.0, %v2316
        %v2318 = vpop.f32.mrf.mxu0
        %2319 = vmatprep.mubr.f32.mxu0 0.0
        %2320 = vmatmul.mubr.f32.gmra.mxu0 %v2155
        %v2321 = vpop.f32.mrf.mxu0
        %v2322 = vadd.f32 0.0, %v2321
        %v2323 = vpop.f32.mrf.mxu0
        %2324 = vmatprep.mubr.f32.mxu0 0.0
        %2325 = vmatmul.mubr.f32.gmra.mxu0 %v2158
        %v2326 = vpop.f32.mrf.mxu0
        %v2327 = vadd.f32 0.0, %v2326
        %v2328 = vpop.f32.mrf.mxu0
        %2329 = vmatprep.mubr.f32.mxu0 0.0
        %2330 = vmatmul.mubr.f32.gmra.mxu0 %v2161
        %v2331 = vpop.f32.mrf.mxu0
        %v2332 = vadd.f32 0.0, %v2331
        %v2333 = vpop.f32.mrf.mxu0
        %2334 = vmatprep.mubr.f32.mxu0 0.0
        %2335 = vmatmul.mubr.f32.gmra.mxu0 %v2164
        %v2336 = vpop.f32.mrf.mxu0
        %v2337 = vadd.f32 0.0, %v2336
        %v2338 = vpop.f32.mrf.mxu0
        %2339 = vmatprep.mubr.f32.mxu0 0.0
        %2340 = vmatmul.mubr.f32.gmra.mxu0 %v2167
        %v2341 = vpop.f32.mrf.mxu0
        %v2342 = vadd.f32 0.0, %v2341
        %v2343 = vpop.f32.mrf.mxu0
        %2344 = vmatprep.mubr.f32.mxu0 0.0
        %2345 = vmatmul.mubr.f32.gmra.mxu0 %v2170
        %v2346 = vpop.f32.mrf.mxu0
        %v2347 = vadd.f32 0.0, %v2346
        %v2348 = vpop.f32.mrf.mxu0
        %2349 = vmatprep.mubr.f32.mxu0 0.0
        %2350 = vmatmul.mubr.f32.gmra.mxu0 %v2173
        %v2351 = vpop.f32.mrf.mxu0
        %v2352 = vadd.f32 0.0, %v2351
        %v2353 = vpop.f32.mrf.mxu0
        %2354 = vmatprep.mubr.f32.mxu0 0.0
        %2355 = vmatmul.mubr.f32.gmra.mxu0 %v2176
        %v2356 = vpop.f32.mrf.mxu0
        %v2357 = vadd.f32 0.0, %v2356
        %v2358 = vpop.f32.mrf.mxu0
        %2359 = vmatprep.mubr.f32.mxu0 0.0
        %2360 = vmatmul.mubr.f32.gmra.mxu0 %v2179
        %v2361 = vpop.f32.mrf.mxu0
        %v2362 = vadd.f32 0.0, %v2361
        %v2363 = vpop.f32.mrf.mxu0
        %2364 = vmatprep.mubr.f32.mxu0 0.0
        %2365 = vmatmul.mubr.f32.gmra.mxu0 %v2182
        %v2366 = vpop.f32.mrf.mxu0
        %v2367 = vadd.f32 0.0, %v2366
        %v2368 = vpop.f32.mrf.mxu0
        %2369 = vmatprep.mubr.f32.mxu0 0.0
        %2370 = vmatmul.mubr.f32.gmra.mxu0 %v2185
        %v2371 = vpop.f32.mrf.mxu0
        %v2372 = vadd.f32 0.0, %v2371
        %v2373 = vpop.f32.mrf.mxu0
        %2374 = vmatprep.mubr.f32.mxu0 0.0
        %2375 = vmatmul.mubr.f32.gmra.mxu0 %v2188
        %v2376 = vpop.f32.mrf.mxu0
        %v2377 = vadd.f32 0.0, %v2376
        %v2378 = vpop.f32.mrf.mxu0
        %2379 = vmatprep.mubr.f32.mxu0 0.0
        %2380 = vmatmul.mubr.f32.gmra.mxu0 %v2191
        %v2381 = vpop.f32.mrf.mxu0
        %v2382 = vadd.f32 0.0, %v2381
        %v2383 = vpop.f32.mrf.mxu0
        %2384 = vmatprep.mubr.f32.mxu0 0.0
        %2385 = vmatmul.mubr.f32.gmra.mxu0 %v2194
        %v2386 = vpop.f32.mrf.mxu0
        %v2387 = vadd.f32 0.0, %v2386
        %v2388 = vpop.f32.mrf.mxu0
        %2389 = vmatprep.mubr.f32.mxu0 0.0
        %2390 = vmatmul.mubr.f32.gmra.mxu0 %v2197
        %v2391 = vpop.f32.mrf.mxu0
        %v2392 = vadd.f32 0.0, %v2391
        %v2393 = vpop.f32.mrf.mxu0
        %2394 = vmatprep.mubr.f32.mxu0 0.0
        %2395 = vmatmul.mubr.f32.gmra.mxu0 %v2200
        %v2396 = vpop.f32.mrf.mxu0
        %v2397 = vadd.f32 0.0, %v2396
        %v2398 = vpop.f32.mrf.mxu0
        %2399 = vmatprep.mubr.f32.mxu0 0.0
        %2400 = vmatmul.mubr.f32.gmra.mxu0 %v2203
        %v2401 = vpop.f32.mrf.mxu0
        %v2402 = vadd.f32 0.0, %v2401
        %v2403 = vpop.f32.mrf.mxu0
        %2404 = vmatprep.mubr.f32.mxu0 0.0
        %2405 = vmatmul.mubr.f32.gmra.mxu0 %v2206
        %v2406 = vpop.f32.mrf.mxu0
        %v2407 = vadd.f32 0.0, %v2406
        %v2408 = vpop.f32.mrf.mxu0
        %2409 = vmatprep.mubr.f32.mxu0 0.0
        %2410 = vmatmul.mubr.f32.gmra.mxu0 %v2209
        %v2411 = vpop.f32.mrf.mxu0
        %v2412 = vadd.f32 0.0, %v2411
        %v2413 = vpop.f32.mrf.mxu0
        %2414 = vmatprep.mubr.f32.mxu0 0.0
        %2415 = vmatmul.mubr.f32.gmra.mxu0 %v2212
        %v2416 = vpop.f32.mrf.mxu0
        %v2417 = vadd.f32 0.0, %v2416
        %v2418 = vpop.f32.mrf.mxu0
        %2419 = vmatprep.mubr.f32.mxu0 0.0
        %2420 = vmatmul.mubr.f32.gmra.mxu0 %v2215
        %v2421 = vpop.f32.mrf.mxu0
        %v2422 = vadd.f32 0.0, %v2421
        %v2423 = vpop.f32.mrf.mxu0
        %2424 = vmatprep.mubr.f32.mxu0 0.0
        %2425 = vmatmul.mubr.f32.gmra.mxu0 %v2218
        %v2426 = vpop.f32.mrf.mxu0
        %v2427 = vadd.f32 0.0, %v2426
        %v2428 = vpop.f32.mrf.mxu0
        %2429 = vmatprep.mubr.f32.mxu0 0.0
        %2430 = vmatmul.mubr.f32.gmra.mxu0 %v2221
        %v2431 = vpop.f32.mrf.mxu0
        %v2432 = vadd.f32 0.0, %v2431
        %v2433 = vpop.f32.mrf.mxu0
        %2434 = vmatprep.mubr.f32.mxu0 0.0
        %2435 = vmatmul.mubr.f32.gmra.mxu0 %v2224
        %v2436 = vpop.f32.mrf.mxu0
        %v2437 = vadd.f32 0.0, %v2436
        %v2438 = vpop.f32.mrf.mxu0
        %2439 = vmatprep.mubr.f32.mxu0 0.0
        %2440 = vmatmul.mubr.f32.gmra.mxu0 %v2227
        %v2441 = vpop.f32.mrf.mxu0
        %v2442 = vadd.f32 0.0, %v2441
        %v2443 = vpop.f32.mrf.mxu0
        %2444 = vmatprep.mubr.f32.mxu0 0.0
        %2445 = vmatmul.mubr.f32.gmra.mxu0 %v2230
        %v2446 = vpop.f32.mrf.mxu0
        %v2447 = vadd.f32 0.0, %v2446
        %v2448 = vpop.f32.mrf.mxu0
        %2449 = vmatprep.mubr.f32.mxu0 0.0
        %2450 = vmatmul.mubr.f32.gmra.mxu0 %v2233
        %v2451 = vpop.f32.mrf.mxu0
        %v2452 = vadd.f32 0.0, %v2451
        %v2453 = vpop.f32.mrf.mxu0
        %2454 = vmatprep.mubr.f32.mxu0 0.0
        %2455 = vmatmul.mubr.f32.gmra.mxu0 %v2236
        %v2456 = vpop.f32.mrf.mxu0
        %v2457 = vadd.f32 0.0, %v2456
        %v2458 = vpop.f32.mrf.mxu0
        %2459 = vmatprep.mubr.f32.mxu0 0.0
        %2460 = vmatmul.mubr.f32.gmra.mxu0 %v2239
        %v2461 = vpop.f32.mrf.mxu0
        %v2462 = vadd.f32 0.0, %v2461
        %v2463 = vpop.f32.mrf.mxu0
        %2464 = vmatprep.mubr.f32.mxu0 0.0
        %2465 = vmatmul.mubr.f32.gmra.mxu0 %v2242
        %v2466 = vpop.f32.mrf.mxu0
        %v2467 = vadd.f32 0.0, %v2466
        %v2468 = vpop.f32.mrf.mxu0
        %2469 = vmatprep.mubr.f32.mxu0 0.0
        %2470 = vmatmul.mubr.f32.gmra.mxu0 %v2245
        %v2471 = vpop.f32.mrf.mxu0
        %v2472 = vadd.f32 0.0, %v2471
        %v2473 = vpop.f32.mrf.mxu0
        %2474 = vdwg.mxu0
        %v2475 = vadd.f32 %v2085, %v2317
        %v2476 = vadd.f32 %v2086, %v2322
        %v2477 = vadd.f32 %v2087, %v2327
        %v2478 = vadd.f32 %v2088, %v2332
        %v2479 = vadd.f32 %v2089, %v2337
        %v2480 = vadd.f32 %v2090, %v2342
        %v2481 = vadd.f32 %v2091, %v2347
        %v2482 = vadd.f32 %v2092, %v2352
        %v2483 = vadd.f32 %v2093, %v2357
        %v2484 = vadd.f32 %v2094, %v2362
        %v2485 = vadd.f32 %v2095, %v2367
        %v2486 = vadd.f32 %v2096, %v2372
        %v2487 = vadd.f32 %v2097, %v2377
        %v2488 = vadd.f32 %v2098, %v2382
        %v2489 = vadd.f32 %v2099, %v2387
        %v2490 = vadd.f32 %v2100, %v2392
        %v2491 = vadd.f32 %v2101, %v2397
        %v2492 = vadd.f32 %v2102, %v2402
        %v2493 = vadd.f32 %v2103, %v2407
        %v2494 = vadd.f32 %v2104, %v2412
        %v2495 = vadd.f32 %v2105, %v2417
        %v2496 = vadd.f32 %v2106, %v2422
        %v2497 = vadd.f32 %v2107, %v2427
        %v2498 = vadd.f32 %v2108, %v2432
        %v2499 = vadd.f32 %v2109, %v2437
        %v2500 = vadd.f32 %v2110, %v2442
        %v2501 = vadd.f32 %v2111, %v2447
        %v2502 = vadd.f32 %v2112, %v2452
        %v2503 = vadd.f32 %v2113, %v2457
        %v2504 = vadd.f32 %v2114, %v2462
        %v2505 = vadd.f32 %v2115, %v2467
        %v2506 = vadd.f32 %v2116, %v2472
        %s2507 = sadd.s32 %s224, 2
        %s2508 = smul.u32 %s2507, 24
        %s2509 = scalar_lea.vmem %s222, %s2508
        %v2510 = vld [vmem:[%s2509] sm:$0xff]
        %v2511 = vld [vmem:[%s2509 + $0x8] sm:$0xff]
        %v2512 = vld [vmem:[%s2509 + $0x18] sm:$0xff]
        %v2513 = vld [vmem:[%s2509 + $0x20] sm:$0xff]
        %v2514 = vld [vmem:[%s2509 + $0x30] sm:$0xff]
        %v2515 = vld [vmem:[%s2509 + $0x38] sm:$0xff]
        %v2516 = vld [vmem:[%s2509 + $0x48] sm:$0xff]
        %v2517 = vld [vmem:[%s2509 + $0x50] sm:$0xff]
        %v2518 = vld [vmem:[%s2509 + $0x60] sm:$0xff]
        %v2519 = vld [vmem:[%s2509 + $0x68] sm:$0xff]
        %v2520 = vld [vmem:[%s2509 + $0x78] sm:$0xff]
        %v2521 = vld [vmem:[%s2509 + $0x80] sm:$0xff]
        %v2522 = vld [vmem:[%s2509 + $0x90] sm:$0xff]
        %v2523 = vld [vmem:[%s2509 + $0x98] sm:$0xff]
        %v2524 = vld [vmem:[%s2509 + $0xa8] sm:$0xff]
        %v2525 = vld [vmem:[%s2509 + $0xb0] sm:$0xff]
        %v2526 = vld [vmem:[%s2509 + $0xc0] sm:$0xff]
        %v2527 = vld [vmem:[%s2509 + $0xc8] sm:$0xff]
        %v2528 = vld [vmem:[%s2509 + $0xd8] sm:$0xff]
        %v2529 = vld [vmem:[%s2509 + $0xe0] sm:$0xff]
        %v2530 = vld [vmem:[%s2509 + $0xf0] sm:$0xff]
        %v2531 = vld [vmem:[%s2509 + $0xf8] sm:$0xff]
        %v2532 = vld [vmem:[%s2509 + $0x108] sm:$0xff]
        %v2533 = vld [vmem:[%s2509 + $0x110] sm:$0xff]
        %v2534 = vld [vmem:[%s2509 + $0x120] sm:$0xff]
        %v2535 = vld [vmem:[%s2509 + $0x128] sm:$0xff]
        %v2536 = vld [vmem:[%s2509 + $0x138] sm:$0xff]
        %v2537 = vld [vmem:[%s2509 + $0x140] sm:$0xff]
        %v2538 = vld [vmem:[%s2509 + $0x150] sm:$0xff]
        %v2539 = vld [vmem:[%s2509 + $0x158] sm:$0xff]
        %v2540 = vld [vmem:[%s2509 + $0x168] sm:$0xff]
        %v2541 = vld [vmem:[%s2509 + $0x170] sm:$0xff]
        %s2542 = scalar_lea.vmem %s1, 24
        %v2543 = vld [vmem:[%s2542] sm:$0xf]
        %v2545 = vsel %vm294, %v2510, 0
        %v2548 = vsel %vm294, %v2511, 0
        %v2551 = vsel %vm294, %v2512, 0
        %v2554 = vsel %vm294, %v2513, 0
        %v2557 = vsel %vm294, %v2514, 0
        %v2560 = vsel %vm294, %v2515, 0
        %v2563 = vsel %vm294, %v2516, 0
        %v2566 = vsel %vm294, %v2517, 0
        %v2569 = vsel %vm294, %v2518, 0
        %v2572 = vsel %vm294, %v2519, 0
        %v2575 = vsel %vm294, %v2520, 0
        %v2578 = vsel %vm294, %v2521, 0
        %v2581 = vsel %vm294, %v2522, 0
        %v2584 = vsel %vm294, %v2523, 0
        %v2587 = vsel %vm294, %v2524, 0
        %v2590 = vsel %vm294, %v2525, 0
        %v2593 = vsel %vm294, %v2526, 0
        %v2596 = vsel %vm294, %v2527, 0
        %v2599 = vsel %vm294, %v2528, 0
        %v2602 = vsel %vm294, %v2529, 0
        %v2605 = vsel %vm294, %v2530, 0
        %v2608 = vsel %vm294, %v2531, 0
        %v2611 = vsel %vm294, %v2532, 0
        %v2614 = vsel %vm294, %v2533, 0
        %v2617 = vsel %vm294, %v2534, 0
        %v2620 = vsel %vm294, %v2535, 0
        %v2623 = vsel %vm294, %v2536, 0
        %v2626 = vsel %vm294, %v2537, 0
        %v2629 = vsel %vm294, %v2538, 0
        %v2632 = vsel %vm294, %v2539, 0
        %v2635 = vsel %vm294, %v2540, 0
        %v2638 = vsel %vm294, %v2541, 0
        %v2641 = vsel %vm391, %v2543, 0
        %2643 = vmatprep.subr.mxu0 0.0
        %2644 = vmatpush1.msra.mxu0 0.0
        %2645 = vmatprep.subr.mxu0 0.0
        %2646 = vmatpush1.msra.mxu0 0.0
        %2647 = vmatprep.subr.mxu0 0.0
        %2648 = vmatpush1.msra.mxu0 0.0
        %2649 = vmatprep.subr.mxu0 0.0
        %2650 = vmatpush1.msra.mxu0 0.0
        %2651 = vmatprep.subr.mxu0 0.0
        %2652 = vmatpush1.msra.mxu0 0.0
        %2653 = vmatprep.subr.mxu0 0.0
        %2654 = vmatpush1.msra.mxu0 0.0
        %2655 = vmatprep.subr.mxu0 0.0
        %2656 = vmatpush1.msra.mxu0 0.0
        %2657 = vmatprep.subr.mxu0 0.0
        %2658 = vmatpush1.msra.mxu0 0.0
        %2659 = vmatprep.subr.mxu0 0.0
        %2660 = vmatpush1.msra.mxu0 0.0
        %2661 = vmatprep.subr.mxu0 0.0
        %2662 = vmatpush1.msra.mxu0 0.0
        %2663 = vmatprep.subr.mxu0 0.0
        %2664 = vmatpush1.msra.mxu0 0.0
        %2665 = vmatprep.subr.mxu0 0.0
        %2666 = vmatpush1.msra.mxu0 0.0
        %2667 = vmatprep.subr.mxu0 0.0
        %2668 = vmatpush1.msra.mxu0 0.0
        %2669 = vmatprep.subr.mxu0 0.0
        %2670 = vmatpush1.msra.mxu0 0.0
        %2671 = vmatprep.subr.mxu0 0.0
        %2672 = vmatpush1.msra.mxu0 0.0
        %2673 = vmatprep.subr.mxu0 0.0
        %2674 = vmatpush1.msra.mxu0 %v2641
        %2675 = vmatprep.subr.mxu0 0.0
        %2676 = vmatpush2.msra.mxu0 0.0
        %2677 = vmatprep.subr.mxu0 0.0
        %2678 = vmatpush2.msra.mxu0 0.0
        %2679 = vmatprep.subr.mxu0 0.0
        %2680 = vmatpush2.msra.mxu0 0.0
        %2681 = vmatprep.subr.mxu0 0.0
        %2682 = vmatpush2.msra.mxu0 0.0
        %2683 = vmatprep.subr.mxu0 0.0
        %2684 = vmatpush2.msra.mxu0 0.0
        %2685 = vmatprep.subr.mxu0 0.0
        %2686 = vmatpush2.msra.mxu0 0.0
        %2687 = vmatprep.subr.mxu0 0.0
        %2688 = vmatpush2.msra.mxu0 0.0
        %2689 = vmatprep.subr.mxu0 0.0
        %2690 = vmatpush2.msra.mxu0 0.0
        %2691 = vmatprep.subr.mxu0 0.0
        %2692 = vmatpush2.msra.mxu0 0.0
        %2693 = vmatprep.subr.mxu0 0.0
        %2694 = vmatpush2.msra.mxu0 0.0
        %2695 = vmatprep.subr.mxu0 0.0
        %2696 = vmatpush2.msra.mxu0 0.0
        %2697 = vmatprep.subr.mxu0 0.0
        %2698 = vmatpush2.msra.mxu0 0.0
        %2699 = vmatprep.subr.mxu0 0.0
        %2700 = vmatpush2.msra.mxu0 0.0
        %2701 = vmatprep.subr.mxu0 0.0
        %2702 = vmatpush2.msra.mxu0 0.0
        %2703 = vmatprep.subr.mxu0 0.0
        %2704 = vmatpush2.msra.mxu0 0.0
        %2705 = vmatprep.subr.mxu0 0.0
        %2706 = vmatpush2.msra.mxu0 0.0
        %2707 = vmatprep.mubr.f32.mxu0 0.0
        %2708 = vmatmul.mubr.f32.gmra.mxu0 %v2545
        %v2709 = vpop.f32.mrf.mxu0
        %v2710 = vadd.f32 0.0, %v2709
        %v2711 = vpop.f32.mrf.mxu0
        %2712 = vmatprep.mubr.f32.mxu0 0.0
        %2713 = vmatmul.mubr.f32.gmra.mxu0 %v2548
        %v2714 = vpop.f32.mrf.mxu0
        %v2715 = vadd.f32 0.0, %v2714
        %v2716 = vpop.f32.mrf.mxu0
        %2717 = vmatprep.mubr.f32.mxu0 0.0
        %2718 = vmatmul.mubr.f32.gmra.mxu0 %v2551
        %v2719 = vpop.f32.mrf.mxu0
        %v2720 = vadd.f32 0.0, %v2719
        %v2721 = vpop.f32.mrf.mxu0
        %2722 = vmatprep.mubr.f32.mxu0 0.0
        %2723 = vmatmul.mubr.f32.gmra.mxu0 %v2554
        %v2724 = vpop.f32.mrf.mxu0
        %v2725 = vadd.f32 0.0, %v2724
        %v2726 = vpop.f32.mrf.mxu0
        %2727 = vmatprep.mubr.f32.mxu0 0.0
        %2728 = vmatmul.mubr.f32.gmra.mxu0 %v2557
        %v2729 = vpop.f32.mrf.mxu0
        %v2730 = vadd.f32 0.0, %v2729
        %v2731 = vpop.f32.mrf.mxu0
        %2732 = vmatprep.mubr.f32.mxu0 0.0
        %2733 = vmatmul.mubr.f32.gmra.mxu0 %v2560
        %v2734 = vpop.f32.mrf.mxu0
        %v2735 = vadd.f32 0.0, %v2734
        %v2736 = vpop.f32.mrf.mxu0
        %2737 = vmatprep.mubr.f32.mxu0 0.0
        %2738 = vmatmul.mubr.f32.gmra.mxu0 %v2563
        %v2739 = vpop.f32.mrf.mxu0
        %v2740 = vadd.f32 0.0, %v2739
        %v2741 = vpop.f32.mrf.mxu0
        %2742 = vmatprep.mubr.f32.mxu0 0.0
        %2743 = vmatmul.mubr.f32.gmra.mxu0 %v2566
        %v2744 = vpop.f32.mrf.mxu0
        %v2745 = vadd.f32 0.0, %v2744
        %v2746 = vpop.f32.mrf.mxu0
        %2747 = vmatprep.mubr.f32.mxu0 0.0
        %2748 = vmatmul.mubr.f32.gmra.mxu0 %v2569
        %v2749 = vpop.f32.mrf.mxu0
        %v2750 = vadd.f32 0.0, %v2749
        %v2751 = vpop.f32.mrf.mxu0
        %2752 = vmatprep.mubr.f32.mxu0 0.0
        %2753 = vmatmul.mubr.f32.gmra.mxu0 %v2572
        %v2754 = vpop.f32.mrf.mxu0
        %v2755 = vadd.f32 0.0, %v2754
        %v2756 = vpop.f32.mrf.mxu0
        %2757 = vmatprep.mubr.f32.mxu0 0.0
        %2758 = vmatmul.mubr.f32.gmra.mxu0 %v2575
        %v2759 = vpop.f32.mrf.mxu0
        %v2760 = vadd.f32 0.0, %v2759
        %v2761 = vpop.f32.mrf.mxu0
        %2762 = vmatprep.mubr.f32.mxu0 0.0
        %2763 = vmatmul.mubr.f32.gmra.mxu0 %v2578
        %v2764 = vpop.f32.mrf.mxu0
        %v2765 = vadd.f32 0.0, %v2764
        %v2766 = vpop.f32.mrf.mxu0
        %2767 = vmatprep.mubr.f32.mxu0 0.0
        %2768 = vmatmul.mubr.f32.gmra.mxu0 %v2581
        %v2769 = vpop.f32.mrf.mxu0
        %v2770 = vadd.f32 0.0, %v2769
        %v2771 = vpop.f32.mrf.mxu0
        %2772 = vmatprep.mubr.f32.mxu0 0.0
        %2773 = vmatmul.mubr.f32.gmra.mxu0 %v2584
        %v2774 = vpop.f32.mrf.mxu0
        %v2775 = vadd.f32 0.0, %v2774
        %v2776 = vpop.f32.mrf.mxu0
        %2777 = vmatprep.mubr.f32.mxu0 0.0
        %2778 = vmatmul.mubr.f32.gmra.mxu0 %v2587
        %v2779 = vpop.f32.mrf.mxu0
        %v2780 = vadd.f32 0.0, %v2779
        %v2781 = vpop.f32.mrf.mxu0
        %2782 = vmatprep.mubr.f32.mxu0 0.0
        %2783 = vmatmul.mubr.f32.gmra.mxu0 %v2590
        %v2784 = vpop.f32.mrf.mxu0
        %v2785 = vadd.f32 0.0, %v2784
        %v2786 = vpop.f32.mrf.mxu0
        %2787 = vmatprep.mubr.f32.mxu0 0.0
        %2788 = vmatmul.mubr.f32.gmra.mxu0 %v2593
        %v2789 = vpop.f32.mrf.mxu0
        %v2790 = vadd.f32 0.0, %v2789
        %v2791 = vpop.f32.mrf.mxu0
        %2792 = vmatprep.mubr.f32.mxu0 0.0
        %2793 = vmatmul.mubr.f32.gmra.mxu0 %v2596
        %v2794 = vpop.f32.mrf.mxu0
        %v2795 = vadd.f32 0.0, %v2794
        %v2796 = vpop.f32.mrf.mxu0
        %2797 = vmatprep.mubr.f32.mxu0 0.0
        %2798 = vmatmul.mubr.f32.gmra.mxu0 %v2599
        %v2799 = vpop.f32.mrf.mxu0
        %v2800 = vadd.f32 0.0, %v2799
        %v2801 = vpop.f32.mrf.mxu0
        %2802 = vmatprep.mubr.f32.mxu0 0.0
        %2803 = vmatmul.mubr.f32.gmra.mxu0 %v2602
        %v2804 = vpop.f32.mrf.mxu0
        %v2805 = vadd.f32 0.0, %v2804
        %v2806 = vpop.f32.mrf.mxu0
        %2807 = vmatprep.mubr.f32.mxu0 0.0
        %2808 = vmatmul.mubr.f32.gmra.mxu0 %v2605
        %v2809 = vpop.f32.mrf.mxu0
        %v2810 = vadd.f32 0.0, %v2809
        %v2811 = vpop.f32.mrf.mxu0
        %2812 = vmatprep.mubr.f32.mxu0 0.0
        %2813 = vmatmul.mubr.f32.gmra.mxu0 %v2608
        %v2814 = vpop.f32.mrf.mxu0
        %v2815 = vadd.f32 0.0, %v2814
        %v2816 = vpop.f32.mrf.mxu0
        %2817 = vmatprep.mubr.f32.mxu0 0.0
        %2818 = vmatmul.mubr.f32.gmra.mxu0 %v2611
        %v2819 = vpop.f32.mrf.mxu0
        %v2820 = vadd.f32 0.0, %v2819
        %v2821 = vpop.f32.mrf.mxu0
        %2822 = vmatprep.mubr.f32.mxu0 0.0
        %2823 = vmatmul.mubr.f32.gmra.mxu0 %v2614
        %v2824 = vpop.f32.mrf.mxu0
        %v2825 = vadd.f32 0.0, %v2824
        %v2826 = vpop.f32.mrf.mxu0
        %2827 = vmatprep.mubr.f32.mxu0 0.0
        %2828 = vmatmul.mubr.f32.gmra.mxu0 %v2617
        %v2829 = vpop.f32.mrf.mxu0
        %v2830 = vadd.f32 0.0, %v2829
        %v2831 = vpop.f32.mrf.mxu0
        %2832 = vmatprep.mubr.f32.mxu0 0.0
        %2833 = vmatmul.mubr.f32.gmra.mxu0 %v2620
        %v2834 = vpop.f32.mrf.mxu0
        %v2835 = vadd.f32 0.0, %v2834
        %v2836 = vpop.f32.mrf.mxu0
        %2837 = vmatprep.mubr.f32.mxu0 0.0
        %2838 = vmatmul.mubr.f32.gmra.mxu0 %v2623
        %v2839 = vpop.f32.mrf.mxu0
        %v2840 = vadd.f32 0.0, %v2839
        %v2841 = vpop.f32.mrf.mxu0
        %2842 = vmatprep.mubr.f32.mxu0 0.0
        %2843 = vmatmul.mubr.f32.gmra.mxu0 %v2626
        %v2844 = vpop.f32.mrf.mxu0
        %v2845 = vadd.f32 0.0, %v2844
        %v2846 = vpop.f32.mrf.mxu0
        %2847 = vmatprep.mubr.f32.mxu0 0.0
        %2848 = vmatmul.mubr.f32.gmra.mxu0 %v2629
        %v2849 = vpop.f32.mrf.mxu0
        %v2850 = vadd.f32 0.0, %v2849
        %v2851 = vpop.f32.mrf.mxu0
        %2852 = vmatprep.mubr.f32.mxu0 0.0
        %2853 = vmatmul.mubr.f32.gmra.mxu0 %v2632
        %v2854 = vpop.f32.mrf.mxu0
        %v2855 = vadd.f32 0.0, %v2854
        %v2856 = vpop.f32.mrf.mxu0
        %2857 = vmatprep.mubr.f32.mxu0 0.0
        %2858 = vmatmul.mubr.f32.gmra.mxu0 %v2635
        %v2859 = vpop.f32.mrf.mxu0
        %v2860 = vadd.f32 0.0, %v2859
        %v2861 = vpop.f32.mrf.mxu0
        %2862 = vmatprep.mubr.f32.mxu0 0.0
        %2863 = vmatmul.mubr.f32.gmra.mxu0 %v2638
        %v2864 = vpop.f32.mrf.mxu0
        %v2865 = vadd.f32 0.0, %v2864
        %v2866 = vpop.f32.mrf.mxu0
        %2867 = vdwg.mxu0
        %v2868 = vadd.f32 %v2475, %v2710
        %v2869 = vadd.f32 %v2476, %v2715
        %v2870 = vadd.f32 %v2477, %v2720
        %v2871 = vadd.f32 %v2478, %v2725
        %v2872 = vadd.f32 %v2479, %v2730
        %v2873 = vadd.f32 %v2480, %v2735
        %v2874 = vadd.f32 %v2481, %v2740
        %v2875 = vadd.f32 %v2482, %v2745
        %v2876 = vadd.f32 %v2483, %v2750
        %v2877 = vadd.f32 %v2484, %v2755
        %v2878 = vadd.f32 %v2485, %v2760
        %v2879 = vadd.f32 %v2486, %v2765
        %v2880 = vadd.f32 %v2487, %v2770
        %v2881 = vadd.f32 %v2488, %v2775
        %v2882 = vadd.f32 %v2489, %v2780
        %v2883 = vadd.f32 %v2490, %v2785
        %v2884 = vadd.f32 %v2491, %v2790
        %v2885 = vadd.f32 %v2492, %v2795
        %v2886 = vadd.f32 %v2493, %v2800
        %v2887 = vadd.f32 %v2494, %v2805
        %v2888 = vadd.f32 %v2495, %v2810
        %v2889 = vadd.f32 %v2496, %v2815
        %v2890 = vadd.f32 %v2497, %v2820
        %v2891 = vadd.f32 %v2498, %v2825
        %v2892 = vadd.f32 %v2499, %v2830
        %v2893 = vadd.f32 %v2500, %v2835
        %v2894 = vadd.f32 %v2501, %v2840
        %v2895 = vadd.f32 %v2502, %v2845
        %v2896 = vadd.f32 %v2503, %v2850
        %v2897 = vadd.f32 %v2504, %v2855
        %v2898 = vadd.f32 %v2505, %v2860
        %v2899 = vadd.f32 %v2506, %v2865
        %v2900 = vld [vmem:[%s2509 + $0x1] sm:$0xff]
        %v2901 = vld [vmem:[%s2509 + $0x9] sm:$0xff]
        %v2902 = vld [vmem:[%s2509 + $0x19] sm:$0xff]
        %v2903 = vld [vmem:[%s2509 + $0x21] sm:$0xff]
        %v2904 = vld [vmem:[%s2509 + $0x31] sm:$0xff]
        %v2905 = vld [vmem:[%s2509 + $0x39] sm:$0xff]
        %v2906 = vld [vmem:[%s2509 + $0x49] sm:$0xff]
        %v2907 = vld [vmem:[%s2509 + $0x51] sm:$0xff]
        %v2908 = vld [vmem:[%s2509 + $0x61] sm:$0xff]
        %v2909 = vld [vmem:[%s2509 + $0x69] sm:$0xff]
        %v2910 = vld [vmem:[%s2509 + $0x79] sm:$0xff]
        %v2911 = vld [vmem:[%s2509 + $0x81] sm:$0xff]
        %v2912 = vld [vmem:[%s2509 + $0x91] sm:$0xff]
        %v2913 = vld [vmem:[%s2509 + $0x99] sm:$0xff]
        %v2914 = vld [vmem:[%s2509 + $0xa9] sm:$0xff]
        %v2915 = vld [vmem:[%s2509 + $0xb1] sm:$0xff]
        %v2916 = vld [vmem:[%s2509 + $0xc1] sm:$0xff]
        %v2917 = vld [vmem:[%s2509 + $0xc9] sm:$0xff]
        %v2918 = vld [vmem:[%s2509 + $0xd9] sm:$0xff]
        %v2919 = vld [vmem:[%s2509 + $0xe1] sm:$0xff]
        %v2920 = vld [vmem:[%s2509 + $0xf1] sm:$0xff]
        %v2921 = vld [vmem:[%s2509 + $0xf9] sm:$0xff]
        %v2922 = vld [vmem:[%s2509 + $0x109] sm:$0xff]
        %v2923 = vld [vmem:[%s2509 + $0x111] sm:$0xff]
        %v2924 = vld [vmem:[%s2509 + $0x121] sm:$0xff]
        %v2925 = vld [vmem:[%s2509 + $0x129] sm:$0xff]
        %v2926 = vld [vmem:[%s2509 + $0x139] sm:$0xff]
        %v2927 = vld [vmem:[%s2509 + $0x141] sm:$0xff]
        %v2928 = vld [vmem:[%s2509 + $0x151] sm:$0xff]
        %v2929 = vld [vmem:[%s2509 + $0x159] sm:$0xff]
        %v2930 = vld [vmem:[%s2509 + $0x169] sm:$0xff]
        %v2931 = vld [vmem:[%s2509 + $0x171] sm:$0xff]
        %s2932 = scalar_lea.vmem %s1, 28
        %v2933 = vld [vmem:[%s2932] sm:$0xf]
        %v2935 = vsel %vm294, %v2900, 0
        %v2938 = vsel %vm294, %v2901, 0
        %v2941 = vsel %vm294, %v2902, 0
        %v2944 = vsel %vm294, %v2903, 0
        %v2947 = vsel %vm294, %v2904, 0
        %v2950 = vsel %vm294, %v2905, 0
        %v2953 = vsel %vm294, %v2906, 0
        %v2956 = vsel %vm294, %v2907, 0
        %v2959 = vsel %vm294, %v2908, 0
        %v2962 = vsel %vm294, %v2909, 0
        %v2965 = vsel %vm294, %v2910, 0
        %v2968 = vsel %vm294, %v2911, 0
        %v2971 = vsel %vm294, %v2912, 0
        %v2974 = vsel %vm294, %v2913, 0
        %v2977 = vsel %vm294, %v2914, 0
        %v2980 = vsel %vm294, %v2915, 0
        %v2983 = vsel %vm294, %v2916, 0
        %v2986 = vsel %vm294, %v2917, 0
        %v2989 = vsel %vm294, %v2918, 0
        %v2992 = vsel %vm294, %v2919, 0
        %v2995 = vsel %vm294, %v2920, 0
        %v2998 = vsel %vm294, %v2921, 0
        %v3001 = vsel %vm294, %v2922, 0
        %v3004 = vsel %vm294, %v2923, 0
        %v3007 = vsel %vm294, %v2924, 0
        %v3010 = vsel %vm294, %v2925, 0
        %v3013 = vsel %vm294, %v2926, 0
        %v3016 = vsel %vm294, %v2927, 0
        %v3019 = vsel %vm294, %v2928, 0
        %v3022 = vsel %vm294, %v2929, 0
        %v3025 = vsel %vm294, %v2930, 0
        %v3028 = vsel %vm294, %v2931, 0
        %v3031 = vsel %vm391, %v2933, 0
        %3033 = vmatprep.subr.mxu0 0.0
        %3034 = vmatpush1.msra.mxu0 0.0
        %3035 = vmatprep.subr.mxu0 0.0
        %3036 = vmatpush1.msra.mxu0 0.0
        %3037 = vmatprep.subr.mxu0 0.0
        %3038 = vmatpush1.msra.mxu0 0.0
        %3039 = vmatprep.subr.mxu0 0.0
        %3040 = vmatpush1.msra.mxu0 0.0
        %3041 = vmatprep.subr.mxu0 0.0
        %3042 = vmatpush1.msra.mxu0 0.0
        %3043 = vmatprep.subr.mxu0 0.0
        %3044 = vmatpush1.msra.mxu0 0.0
        %3045 = vmatprep.subr.mxu0 0.0
        %3046 = vmatpush1.msra.mxu0 0.0
        %3047 = vmatprep.subr.mxu0 0.0
        %3048 = vmatpush1.msra.mxu0 0.0
        %3049 = vmatprep.subr.mxu0 0.0
        %3050 = vmatpush1.msra.mxu0 0.0
        %3051 = vmatprep.subr.mxu0 0.0
        %3052 = vmatpush1.msra.mxu0 0.0
        %3053 = vmatprep.subr.mxu0 0.0
        %3054 = vmatpush1.msra.mxu0 0.0
        %3055 = vmatprep.subr.mxu0 0.0
        %3056 = vmatpush1.msra.mxu0 0.0
        %3057 = vmatprep.subr.mxu0 0.0
        %3058 = vmatpush1.msra.mxu0 0.0
        %3059 = vmatprep.subr.mxu0 0.0
        %3060 = vmatpush1.msra.mxu0 0.0
        %3061 = vmatprep.subr.mxu0 0.0
        %3062 = vmatpush1.msra.mxu0 0.0
        %3063 = vmatprep.subr.mxu0 0.0
        %3064 = vmatpush1.msra.mxu0 %v3031
        %3065 = vmatprep.subr.mxu0 0.0
        %3066 = vmatpush2.msra.mxu0 0.0
        %3067 = vmatprep.subr.mxu0 0.0
        %3068 = vmatpush2.msra.mxu0 0.0
        %3069 = vmatprep.subr.mxu0 0.0
        %3070 = vmatpush2.msra.mxu0 0.0
        %3071 = vmatprep.subr.mxu0 0.0
        %3072 = vmatpush2.msra.mxu0 0.0
        %3073 = vmatprep.subr.mxu0 0.0
        %3074 = vmatpush2.msra.mxu0 0.0
        %3075 = vmatprep.subr.mxu0 0.0
        %3076 = vmatpush2.msra.mxu0 0.0
        %3077 = vmatprep.subr.mxu0 0.0
        %3078 = vmatpush2.msra.mxu0 0.0
        %3079 = vmatprep.subr.mxu0 0.0
        %3080 = vmatpush2.msra.mxu0 0.0
        %3081 = vmatprep.subr.mxu0 0.0
        %3082 = vmatpush2.msra.mxu0 0.0
        %3083 = vmatprep.subr.mxu0 0.0
        %3084 = vmatpush2.msra.mxu0 0.0
        %3085 = vmatprep.subr.mxu0 0.0
        %3086 = vmatpush2.msra.mxu0 0.0
        %3087 = vmatprep.subr.mxu0 0.0
        %3088 = vmatpush2.msra.mxu0 0.0
        %3089 = vmatprep.subr.mxu0 0.0
        %3090 = vmatpush2.msra.mxu0 0.0
        %3091 = vmatprep.subr.mxu0 0.0
        %3092 = vmatpush2.msra.mxu0 0.0
        %3093 = vmatprep.subr.mxu0 0.0
        %3094 = vmatpush2.msra.mxu0 0.0
        %3095 = vmatprep.subr.mxu0 0.0
        %3096 = vmatpush2.msra.mxu0 0.0
        %3097 = vmatprep.mubr.f32.mxu0 0.0
        %3098 = vmatmul.mubr.f32.gmra.mxu0 %v2935
        %v3099 = vpop.f32.mrf.mxu0
        %v3100 = vadd.f32 0.0, %v3099
        %v3101 = vpop.f32.mrf.mxu0
        %3102 = vmatprep.mubr.f32.mxu0 0.0
        %3103 = vmatmul.mubr.f32.gmra.mxu0 %v2938
        %v3104 = vpop.f32.mrf.mxu0
        %v3105 = vadd.f32 0.0, %v3104
        %v3106 = vpop.f32.mrf.mxu0
        %3107 = vmatprep.mubr.f32.mxu0 0.0
        %3108 = vmatmul.mubr.f32.gmra.mxu0 %v2941
        %v3109 = vpop.f32.mrf.mxu0
        %v3110 = vadd.f32 0.0, %v3109
        %v3111 = vpop.f32.mrf.mxu0
        %3112 = vmatprep.mubr.f32.mxu0 0.0
        %3113 = vmatmul.mubr.f32.gmra.mxu0 %v2944
        %v3114 = vpop.f32.mrf.mxu0
        %v3115 = vadd.f32 0.0, %v3114
        %v3116 = vpop.f32.mrf.mxu0
        %3117 = vmatprep.mubr.f32.mxu0 0.0
        %3118 = vmatmul.mubr.f32.gmra.mxu0 %v2947
        %v3119 = vpop.f32.mrf.mxu0
        %v3120 = vadd.f32 0.0, %v3119
        %v3121 = vpop.f32.mrf.mxu0
        %3122 = vmatprep.mubr.f32.mxu0 0.0
        %3123 = vmatmul.mubr.f32.gmra.mxu0 %v2950
        %v3124 = vpop.f32.mrf.mxu0
        %v3125 = vadd.f32 0.0, %v3124
        %v3126 = vpop.f32.mrf.mxu0
        %3127 = vmatprep.mubr.f32.mxu0 0.0
        %3128 = vmatmul.mubr.f32.gmra.mxu0 %v2953
        %v3129 = vpop.f32.mrf.mxu0
        %v3130 = vadd.f32 0.0, %v3129
        %v3131 = vpop.f32.mrf.mxu0
        %3132 = vmatprep.mubr.f32.mxu0 0.0
        %3133 = vmatmul.mubr.f32.gmra.mxu0 %v2956
        %v3134 = vpop.f32.mrf.mxu0
        %v3135 = vadd.f32 0.0, %v3134
        %v3136 = vpop.f32.mrf.mxu0
        %3137 = vmatprep.mubr.f32.mxu0 0.0
        %3138 = vmatmul.mubr.f32.gmra.mxu0 %v2959
        %v3139 = vpop.f32.mrf.mxu0
        %v3140 = vadd.f32 0.0, %v3139
        %v3141 = vpop.f32.mrf.mxu0
        %3142 = vmatprep.mubr.f32.mxu0 0.0
        %3143 = vmatmul.mubr.f32.gmra.mxu0 %v2962
        %v3144 = vpop.f32.mrf.mxu0
        %v3145 = vadd.f32 0.0, %v3144
        %v3146 = vpop.f32.mrf.mxu0
        %3147 = vmatprep.mubr.f32.mxu0 0.0
        %3148 = vmatmul.mubr.f32.gmra.mxu0 %v2965
        %v3149 = vpop.f32.mrf.mxu0
        %v3150 = vadd.f32 0.0, %v3149
        %v3151 = vpop.f32.mrf.mxu0
        %3152 = vmatprep.mubr.f32.mxu0 0.0
        %3153 = vmatmul.mubr.f32.gmra.mxu0 %v2968
        %v3154 = vpop.f32.mrf.mxu0
        %v3155 = vadd.f32 0.0, %v3154
        %v3156 = vpop.f32.mrf.mxu0
        %3157 = vmatprep.mubr.f32.mxu0 0.0
        %3158 = vmatmul.mubr.f32.gmra.mxu0 %v2971
        %v3159 = vpop.f32.mrf.mxu0
        %v3160 = vadd.f32 0.0, %v3159
        %v3161 = vpop.f32.mrf.mxu0
        %3162 = vmatprep.mubr.f32.mxu0 0.0
        %3163 = vmatmul.mubr.f32.gmra.mxu0 %v2974
        %v3164 = vpop.f32.mrf.mxu0
        %v3165 = vadd.f32 0.0, %v3164
        %v3166 = vpop.f32.mrf.mxu0
        %3167 = vmatprep.mubr.f32.mxu0 0.0
        %3168 = vmatmul.mubr.f32.gmra.mxu0 %v2977
        %v3169 = vpop.f32.mrf.mxu0
        %v3170 = vadd.f32 0.0, %v3169
        %v3171 = vpop.f32.mrf.mxu0
        %3172 = vmatprep.mubr.f32.mxu0 0.0
        %3173 = vmatmul.mubr.f32.gmra.mxu0 %v2980
        %v3174 = vpop.f32.mrf.mxu0
        %v3175 = vadd.f32 0.0, %v3174
        %v3176 = vpop.f32.mrf.mxu0
        %3177 = vmatprep.mubr.f32.mxu0 0.0
        %3178 = vmatmul.mubr.f32.gmra.mxu0 %v2983
        %v3179 = vpop.f32.mrf.mxu0
        %v3180 = vadd.f32 0.0, %v3179
        %v3181 = vpop.f32.mrf.mxu0
        %3182 = vmatprep.mubr.f32.mxu0 0.0
        %3183 = vmatmul.mubr.f32.gmra.mxu0 %v2986
        %v3184 = vpop.f32.mrf.mxu0
        %v3185 = vadd.f32 0.0, %v3184
        %v3186 = vpop.f32.mrf.mxu0
        %3187 = vmatprep.mubr.f32.mxu0 0.0
        %3188 = vmatmul.mubr.f32.gmra.mxu0 %v2989
        %v3189 = vpop.f32.mrf.mxu0
        %v3190 = vadd.f32 0.0, %v3189
        %v3191 = vpop.f32.mrf.mxu0
        %3192 = vmatprep.mubr.f32.mxu0 0.0
        %3193 = vmatmul.mubr.f32.gmra.mxu0 %v2992
        %v3194 = vpop.f32.mrf.mxu0
        %v3195 = vadd.f32 0.0, %v3194
        %v3196 = vpop.f32.mrf.mxu0
        %3197 = vmatprep.mubr.f32.mxu0 0.0
        %3198 = vmatmul.mubr.f32.gmra.mxu0 %v2995
        %v3199 = vpop.f32.mrf.mxu0
        %v3200 = vadd.f32 0.0, %v3199
        %v3201 = vpop.f32.mrf.mxu0
        %3202 = vmatprep.mubr.f32.mxu0 0.0
        %3203 = vmatmul.mubr.f32.gmra.mxu0 %v2998
        %v3204 = vpop.f32.mrf.mxu0
        %v3205 = vadd.f32 0.0, %v3204
        %v3206 = vpop.f32.mrf.mxu0
        %3207 = vmatprep.mubr.f32.mxu0 0.0
        %3208 = vmatmul.mubr.f32.gmra.mxu0 %v3001
        %v3209 = vpop.f32.mrf.mxu0
        %v3210 = vadd.f32 0.0, %v3209
        %v3211 = vpop.f32.mrf.mxu0
        %3212 = vmatprep.mubr.f32.mxu0 0.0
        %3213 = vmatmul.mubr.f32.gmra.mxu0 %v3004
        %v3214 = vpop.f32.mrf.mxu0
        %v3215 = vadd.f32 0.0, %v3214
        %v3216 = vpop.f32.mrf.mxu0
        %3217 = vmatprep.mubr.f32.mxu0 0.0
        %3218 = vmatmul.mubr.f32.gmra.mxu0 %v3007
        %v3219 = vpop.f32.mrf.mxu0
        %v3220 = vadd.f32 0.0, %v3219
        %v3221 = vpop.f32.mrf.mxu0
        %3222 = vmatprep.mubr.f32.mxu0 0.0
        %3223 = vmatmul.mubr.f32.gmra.mxu0 %v3010
        %v3224 = vpop.f32.mrf.mxu0
        %v3225 = vadd.f32 0.0, %v3224
        %v3226 = vpop.f32.mrf.mxu0
        %3227 = vmatprep.mubr.f32.mxu0 0.0
        %3228 = vmatmul.mubr.f32.gmra.mxu0 %v3013
        %v3229 = vpop.f32.mrf.mxu0
        %v3230 = vadd.f32 0.0, %v3229
        %v3231 = vpop.f32.mrf.mxu0
        %3232 = vmatprep.mubr.f32.mxu0 0.0
        %3233 = vmatmul.mubr.f32.gmra.mxu0 %v3016
        %v3234 = vpop.f32.mrf.mxu0
        %v3235 = vadd.f32 0.0, %v3234
        %v3236 = vpop.f32.mrf.mxu0
        %3237 = vmatprep.mubr.f32.mxu0 0.0
        %3238 = vmatmul.mubr.f32.gmra.mxu0 %v3019
        %v3239 = vpop.f32.mrf.mxu0
        %v3240 = vadd.f32 0.0, %v3239
        %v3241 = vpop.f32.mrf.mxu0
        %3242 = vmatprep.mubr.f32.mxu0 0.0
        %3243 = vmatmul.mubr.f32.gmra.mxu0 %v3022
        %v3244 = vpop.f32.mrf.mxu0
        %v3245 = vadd.f32 0.0, %v3244
        %v3246 = vpop.f32.mrf.mxu0
        %3247 = vmatprep.mubr.f32.mxu0 0.0
        %3248 = vmatmul.mubr.f32.gmra.mxu0 %v3025
        %v3249 = vpop.f32.mrf.mxu0
        %v3250 = vadd.f32 0.0, %v3249
        %v3251 = vpop.f32.mrf.mxu0
        %3252 = vmatprep.mubr.f32.mxu0 0.0
        %3253 = vmatmul.mubr.f32.gmra.mxu0 %v3028
        %v3254 = vpop.f32.mrf.mxu0
        %v3255 = vadd.f32 0.0, %v3254
        %v3256 = vpop.f32.mrf.mxu0
        %3257 = vdwg.mxu0
        %v3258 = vadd.f32 %v2868, %v3100
        %v3259 = vadd.f32 %v2869, %v3105
        %v3260 = vadd.f32 %v2870, %v3110
        %v3261 = vadd.f32 %v2871, %v3115
        %v3262 = vadd.f32 %v2872, %v3120
        %v3263 = vadd.f32 %v2873, %v3125
        %v3264 = vadd.f32 %v2874, %v3130
        %v3265 = vadd.f32 %v2875, %v3135
        %v3266 = vadd.f32 %v2876, %v3140
        %v3267 = vadd.f32 %v2877, %v3145
        %v3268 = vadd.f32 %v2878, %v3150
        %v3269 = vadd.f32 %v2879, %v3155
        %v3270 = vadd.f32 %v2880, %v3160
        %v3271 = vadd.f32 %v2881, %v3165
        %v3272 = vadd.f32 %v2882, %v3170
        %v3273 = vadd.f32 %v2883, %v3175
        %v3274 = vadd.f32 %v2884, %v3180
        %v3275 = vadd.f32 %v2885, %v3185
        %v3276 = vadd.f32 %v2886, %v3190
        %v3277 = vadd.f32 %v2887, %v3195
        %v3278 = vadd.f32 %v2888, %v3200
        %v3279 = vadd.f32 %v2889, %v3205
        %v3280 = vadd.f32 %v2890, %v3210
        %v3281 = vadd.f32 %v2891, %v3215
        %v3282 = vadd.f32 %v2892, %v3220
        %v3283 = vadd.f32 %v2893, %v3225
        %v3284 = vadd.f32 %v2894, %v3230
        %v3285 = vadd.f32 %v2895, %v3235
        %v3286 = vadd.f32 %v2896, %v3240
        %v3287 = vadd.f32 %v2897, %v3245
        %v3288 = vadd.f32 %v2898, %v3250
        %v3289 = vadd.f32 %v2899, %v3255
        %v3290 = vld [vmem:[%s2509 + $0x2] sm:$0xff]
        %v3291 = vld [vmem:[%s2509 + $0xa] sm:$0xff]
        %v3292 = vld [vmem:[%s2509 + $0x1a] sm:$0xff]
        %v3293 = vld [vmem:[%s2509 + $0x22] sm:$0xff]
        %v3294 = vld [vmem:[%s2509 + $0x32] sm:$0xff]
        %v3295 = vld [vmem:[%s2509 + $0x3a] sm:$0xff]
        %v3296 = vld [vmem:[%s2509 + $0x4a] sm:$0xff]
        %v3297 = vld [vmem:[%s2509 + $0x52] sm:$0xff]
        %v3298 = vld [vmem:[%s2509 + $0x62] sm:$0xff]
        %v3299 = vld [vmem:[%s2509 + $0x6a] sm:$0xff]
        %v3300 = vld [vmem:[%s2509 + $0x7a] sm:$0xff]
        %v3301 = vld [vmem:[%s2509 + $0x82] sm:$0xff]
        %v3302 = vld [vmem:[%s2509 + $0x92] sm:$0xff]
        %v3303 = vld [vmem:[%s2509 + $0x9a] sm:$0xff]
        %v3304 = vld [vmem:[%s2509 + $0xaa] sm:$0xff]
        %v3305 = vld [vmem:[%s2509 + $0xb2] sm:$0xff]
        %v3306 = vld [vmem:[%s2509 + $0xc2] sm:$0xff]
        %v3307 = vld [vmem:[%s2509 + $0xca] sm:$0xff]
        %v3308 = vld [vmem:[%s2509 + $0xda] sm:$0xff]
        %v3309 = vld [vmem:[%s2509 + $0xe2] sm:$0xff]
        %v3310 = vld [vmem:[%s2509 + $0xf2] sm:$0xff]
        %v3311 = vld [vmem:[%s2509 + $0xfa] sm:$0xff]
        %v3312 = vld [vmem:[%s2509 + $0x10a] sm:$0xff]
        %v3313 = vld [vmem:[%s2509 + $0x112] sm:$0xff]
        %v3314 = vld [vmem:[%s2509 + $0x122] sm:$0xff]
        %v3315 = vld [vmem:[%s2509 + $0x12a] sm:$0xff]
        %v3316 = vld [vmem:[%s2509 + $0x13a] sm:$0xff]
        %v3317 = vld [vmem:[%s2509 + $0x142] sm:$0xff]
        %v3318 = vld [vmem:[%s2509 + $0x152] sm:$0xff]
        %v3319 = vld [vmem:[%s2509 + $0x15a] sm:$0xff]
        %v3320 = vld [vmem:[%s2509 + $0x16a] sm:$0xff]
        %v3321 = vld [vmem:[%s2509 + $0x172] sm:$0xff]
        %s3322 = scalar_lea.vmem %s1, 32
        %v3323 = vld [vmem:[%s3322] sm:$0xf]
        %v3325 = vsel %vm294, %v3290, 0
        %v3328 = vsel %vm294, %v3291, 0
        %v3331 = vsel %vm294, %v3292, 0
        %v3334 = vsel %vm294, %v3293, 0
        %v3337 = vsel %vm294, %v3294, 0
        %v3340 = vsel %vm294, %v3295, 0
        %v3343 = vsel %vm294, %v3296, 0
        %v3346 = vsel %vm294, %v3297, 0
        %v3349 = vsel %vm294, %v3298, 0
        %v3352 = vsel %vm294, %v3299, 0
        %v3355 = vsel %vm294, %v3300, 0
        %v3358 = vsel %vm294, %v3301, 0
        %v3361 = vsel %vm294, %v3302, 0
        %v3364 = vsel %vm294, %v3303, 0
        %v3367 = vsel %vm294, %v3304, 0
        %v3370 = vsel %vm294, %v3305, 0
        %v3373 = vsel %vm294, %v3306, 0
        %v3376 = vsel %vm294, %v3307, 0
        %v3379 = vsel %vm294, %v3308, 0
        %v3382 = vsel %vm294, %v3309, 0
        %v3385 = vsel %vm294, %v3310, 0
        %v3388 = vsel %vm294, %v3311, 0
        %v3391 = vsel %vm294, %v3312, 0
        %v3394 = vsel %vm294, %v3313, 0
        %v3397 = vsel %vm294, %v3314, 0
        %v3400 = vsel %vm294, %v3315, 0
        %v3403 = vsel %vm294, %v3316, 0
        %v3406 = vsel %vm294, %v3317, 0
        %v3409 = vsel %vm294, %v3318, 0
        %v3412 = vsel %vm294, %v3319, 0
        %v3415 = vsel %vm294, %v3320, 0
        %v3418 = vsel %vm294, %v3321, 0
        %v3421 = vsel %vm391, %v3323, 0
        %3423 = vmatprep.subr.mxu0 0.0
        %3424 = vmatpush1.msra.mxu0 0.0
        %3425 = vmatprep.subr.mxu0 0.0
        %3426 = vmatpush1.msra.mxu0 0.0
        %3427 = vmatprep.subr.mxu0 0.0
        %3428 = vmatpush1.msra.mxu0 0.0
        %3429 = vmatprep.subr.mxu0 0.0
        %3430 = vmatpush1.msra.mxu0 0.0
        %3431 = vmatprep.subr.mxu0 0.0
        %3432 = vmatpush1.msra.mxu0 0.0
        %3433 = vmatprep.subr.mxu0 0.0
        %3434 = vmatpush1.msra.mxu0 0.0
        %3435 = vmatprep.subr.mxu0 0.0
        %3436 = vmatpush1.msra.mxu0 0.0
        %3437 = vmatprep.subr.mxu0 0.0
        %3438 = vmatpush1.msra.mxu0 0.0
        %3439 = vmatprep.subr.mxu0 0.0
        %3440 = vmatpush1.msra.mxu0 0.0
        %3441 = vmatprep.subr.mxu0 0.0
        %3442 = vmatpush1.msra.mxu0 0.0
        %3443 = vmatprep.subr.mxu0 0.0
        %3444 = vmatpush1.msra.mxu0 0.0
        %3445 = vmatprep.subr.mxu0 0.0
        %3446 = vmatpush1.msra.mxu0 0.0
        %3447 = vmatprep.subr.mxu0 0.0
        %3448 = vmatpush1.msra.mxu0 0.0
        %3449 = vmatprep.subr.mxu0 0.0
        %3450 = vmatpush1.msra.mxu0 0.0
        %3451 = vmatprep.subr.mxu0 0.0
        %3452 = vmatpush1.msra.mxu0 0.0
        %3453 = vmatprep.subr.mxu0 0.0
        %3454 = vmatpush1.msra.mxu0 %v3421
        %3455 = vmatprep.subr.mxu0 0.0
        %3456 = vmatpush2.msra.mxu0 0.0
        %3457 = vmatprep.subr.mxu0 0.0
        %3458 = vmatpush2.msra.mxu0 0.0
        %3459 = vmatprep.subr.mxu0 0.0
        %3460 = vmatpush2.msra.mxu0 0.0
        %3461 = vmatprep.subr.mxu0 0.0
        %3462 = vmatpush2.msra.mxu0 0.0
        %3463 = vmatprep.subr.mxu0 0.0
        %3464 = vmatpush2.msra.mxu0 0.0
        %3465 = vmatprep.subr.mxu0 0.0
        %3466 = vmatpush2.msra.mxu0 0.0
        %3467 = vmatprep.subr.mxu0 0.0
        %3468 = vmatpush2.msra.mxu0 0.0
        %3469 = vmatprep.subr.mxu0 0.0
        %3470 = vmatpush2.msra.mxu0 0.0
        %3471 = vmatprep.subr.mxu0 0.0
        %3472 = vmatpush2.msra.mxu0 0.0
        %3473 = vmatprep.subr.mxu0 0.0
        %3474 = vmatpush2.msra.mxu0 0.0
        %3475 = vmatprep.subr.mxu0 0.0
        %3476 = vmatpush2.msra.mxu0 0.0
        %3477 = vmatprep.subr.mxu0 0.0
        %3478 = vmatpush2.msra.mxu0 0.0
        %3479 = vmatprep.subr.mxu0 0.0
        %3480 = vmatpush2.msra.mxu0 0.0
        %3481 = vmatprep.subr.mxu0 0.0
        %3482 = vmatpush2.msra.mxu0 0.0
        %3483 = vmatprep.subr.mxu0 0.0
        %3484 = vmatpush2.msra.mxu0 0.0
        %3485 = vmatprep.subr.mxu0 0.0
        %3486 = vmatpush2.msra.mxu0 0.0
        %3487 = vmatprep.mubr.f32.mxu0 0.0
        %3488 = vmatmul.mubr.f32.gmra.mxu0 %v3325
        %v3489 = vpop.f32.mrf.mxu0
        %v3490 = vadd.f32 0.0, %v3489
        %v3491 = vpop.f32.mrf.mxu0
        %3492 = vmatprep.mubr.f32.mxu0 0.0
        %3493 = vmatmul.mubr.f32.gmra.mxu0 %v3328
        %v3494 = vpop.f32.mrf.mxu0
        %v3495 = vadd.f32 0.0, %v3494
        %v3496 = vpop.f32.mrf.mxu0
        %3497 = vmatprep.mubr.f32.mxu0 0.0
        %3498 = vmatmul.mubr.f32.gmra.mxu0 %v3331
        %v3499 = vpop.f32.mrf.mxu0
        %v3500 = vadd.f32 0.0, %v3499
        %v3501 = vpop.f32.mrf.mxu0
        %3502 = vmatprep.mubr.f32.mxu0 0.0
        %3503 = vmatmul.mubr.f32.gmra.mxu0 %v3334
        %v3504 = vpop.f32.mrf.mxu0
        %v3505 = vadd.f32 0.0, %v3504
        %v3506 = vpop.f32.mrf.mxu0
        %3507 = vmatprep.mubr.f32.mxu0 0.0
        %3508 = vmatmul.mubr.f32.gmra.mxu0 %v3337
        %v3509 = vpop.f32.mrf.mxu0
        %v3510 = vadd.f32 0.0, %v3509
        %v3511 = vpop.f32.mrf.mxu0
        %3512 = vmatprep.mubr.f32.mxu0 0.0
        %3513 = vmatmul.mubr.f32.gmra.mxu0 %v3340
        %v3514 = vpop.f32.mrf.mxu0
        %v3515 = vadd.f32 0.0, %v3514
        %v3516 = vpop.f32.mrf.mxu0
        %3517 = vmatprep.mubr.f32.mxu0 0.0
        %3518 = vmatmul.mubr.f32.gmra.mxu0 %v3343
        %v3519 = vpop.f32.mrf.mxu0
        %v3520 = vadd.f32 0.0, %v3519
        %v3521 = vpop.f32.mrf.mxu0
        %3522 = vmatprep.mubr.f32.mxu0 0.0
        %3523 = vmatmul.mubr.f32.gmra.mxu0 %v3346
        %v3524 = vpop.f32.mrf.mxu0
        %v3525 = vadd.f32 0.0, %v3524
        %v3526 = vpop.f32.mrf.mxu0
        %3527 = vmatprep.mubr.f32.mxu0 0.0
        %3528 = vmatmul.mubr.f32.gmra.mxu0 %v3349
        %v3529 = vpop.f32.mrf.mxu0
        %v3530 = vadd.f32 0.0, %v3529
        %v3531 = vpop.f32.mrf.mxu0
        %3532 = vmatprep.mubr.f32.mxu0 0.0
        %3533 = vmatmul.mubr.f32.gmra.mxu0 %v3352
        %v3534 = vpop.f32.mrf.mxu0
        %v3535 = vadd.f32 0.0, %v3534
        %v3536 = vpop.f32.mrf.mxu0
        %3537 = vmatprep.mubr.f32.mxu0 0.0
        %3538 = vmatmul.mubr.f32.gmra.mxu0 %v3355
        %v3539 = vpop.f32.mrf.mxu0
        %v3540 = vadd.f32 0.0, %v3539
        %v3541 = vpop.f32.mrf.mxu0
        %3542 = vmatprep.mubr.f32.mxu0 0.0
        %3543 = vmatmul.mubr.f32.gmra.mxu0 %v3358
        %v3544 = vpop.f32.mrf.mxu0
        %v3545 = vadd.f32 0.0, %v3544
        %v3546 = vpop.f32.mrf.mxu0
        %3547 = vmatprep.mubr.f32.mxu0 0.0
        %3548 = vmatmul.mubr.f32.gmra.mxu0 %v3361
        %v3549 = vpop.f32.mrf.mxu0
        %v3550 = vadd.f32 0.0, %v3549
        %v3551 = vpop.f32.mrf.mxu0
        %3552 = vmatprep.mubr.f32.mxu0 0.0
        %3553 = vmatmul.mubr.f32.gmra.mxu0 %v3364
        %v3554 = vpop.f32.mrf.mxu0
        %v3555 = vadd.f32 0.0, %v3554
        %v3556 = vpop.f32.mrf.mxu0
        %3557 = vmatprep.mubr.f32.mxu0 0.0
        %3558 = vmatmul.mubr.f32.gmra.mxu0 %v3367
        %v3559 = vpop.f32.mrf.mxu0
        %v3560 = vadd.f32 0.0, %v3559
        %v3561 = vpop.f32.mrf.mxu0
        %3562 = vmatprep.mubr.f32.mxu0 0.0
        %3563 = vmatmul.mubr.f32.gmra.mxu0 %v3370
        %v3564 = vpop.f32.mrf.mxu0
        %v3565 = vadd.f32 0.0, %v3564
        %v3566 = vpop.f32.mrf.mxu0
        %3567 = vmatprep.mubr.f32.mxu0 0.0
        %3568 = vmatmul.mubr.f32.gmra.mxu0 %v3373
        %v3569 = vpop.f32.mrf.mxu0
        %v3570 = vadd.f32 0.0, %v3569
        %v3571 = vpop.f32.mrf.mxu0
        %3572 = vmatprep.mubr.f32.mxu0 0.0
        %3573 = vmatmul.mubr.f32.gmra.mxu0 %v3376
        %v3574 = vpop.f32.mrf.mxu0
        %v3575 = vadd.f32 0.0, %v3574
        %v3576 = vpop.f32.mrf.mxu0
        %3577 = vmatprep.mubr.f32.mxu0 0.0
        %3578 = vmatmul.mubr.f32.gmra.mxu0 %v3379
        %v3579 = vpop.f32.mrf.mxu0
        %v3580 = vadd.f32 0.0, %v3579
        %v3581 = vpop.f32.mrf.mxu0
        %3582 = vmatprep.mubr.f32.mxu0 0.0
        %3583 = vmatmul.mubr.f32.gmra.mxu0 %v3382
        %v3584 = vpop.f32.mrf.mxu0
        %v3585 = vadd.f32 0.0, %v3584
        %v3586 = vpop.f32.mrf.mxu0
        %3587 = vmatprep.mubr.f32.mxu0 0.0
        %3588 = vmatmul.mubr.f32.gmra.mxu0 %v3385
        %v3589 = vpop.f32.mrf.mxu0
        %v3590 = vadd.f32 0.0, %v3589
        %v3591 = vpop.f32.mrf.mxu0
        %3592 = vmatprep.mubr.f32.mxu0 0.0
        %3593 = vmatmul.mubr.f32.gmra.mxu0 %v3388
        %v3594 = vpop.f32.mrf.mxu0
        %v3595 = vadd.f32 0.0, %v3594
        %v3596 = vpop.f32.mrf.mxu0
        %3597 = vmatprep.mubr.f32.mxu0 0.0
        %3598 = vmatmul.mubr.f32.gmra.mxu0 %v3391
        %v3599 = vpop.f32.mrf.mxu0
        %v3600 = vadd.f32 0.0, %v3599
        %v3601 = vpop.f32.mrf.mxu0
        %3602 = vmatprep.mubr.f32.mxu0 0.0
        %3603 = vmatmul.mubr.f32.gmra.mxu0 %v3394
        %v3604 = vpop.f32.mrf.mxu0
        %v3605 = vadd.f32 0.0, %v3604
        %v3606 = vpop.f32.mrf.mxu0
        %3607 = vmatprep.mubr.f32.mxu0 0.0
        %3608 = vmatmul.mubr.f32.gmra.mxu0 %v3397
        %v3609 = vpop.f32.mrf.mxu0
        %v3610 = vadd.f32 0.0, %v3609
        %v3611 = vpop.f32.mrf.mxu0
        %3612 = vmatprep.mubr.f32.mxu0 0.0
        %3613 = vmatmul.mubr.f32.gmra.mxu0 %v3400
        %v3614 = vpop.f32.mrf.mxu0
        %v3615 = vadd.f32 0.0, %v3614
        %v3616 = vpop.f32.mrf.mxu0
        %3617 = vmatprep.mubr.f32.mxu0 0.0
        %3618 = vmatmul.mubr.f32.gmra.mxu0 %v3403
        %v3619 = vpop.f32.mrf.mxu0
        %v3620 = vadd.f32 0.0, %v3619
        %v3621 = vpop.f32.mrf.mxu0
        %3622 = vmatprep.mubr.f32.mxu0 0.0
        %3623 = vmatmul.mubr.f32.gmra.mxu0 %v3406
        %v3624 = vpop.f32.mrf.mxu0
        %v3625 = vadd.f32 0.0, %v3624
        %v3626 = vpop.f32.mrf.mxu0
        %3627 = vmatprep.mubr.f32.mxu0 0.0
        %3628 = vmatmul.mubr.f32.gmra.mxu0 %v3409
        %v3629 = vpop.f32.mrf.mxu0
        %v3630 = vadd.f32 0.0, %v3629
        %v3631 = vpop.f32.mrf.mxu0
        %3632 = vmatprep.mubr.f32.mxu0 0.0
        %3633 = vmatmul.mubr.f32.gmra.mxu0 %v3412
        %v3634 = vpop.f32.mrf.mxu0
        %v3635 = vadd.f32 0.0, %v3634
        %v3636 = vpop.f32.mrf.mxu0
        %3637 = vmatprep.mubr.f32.mxu0 0.0
        %3638 = vmatmul.mubr.f32.gmra.mxu0 %v3415
        %v3639 = vpop.f32.mrf.mxu0
        %v3640 = vadd.f32 0.0, %v3639
        %v3641 = vpop.f32.mrf.mxu0
        %3642 = vmatprep.mubr.f32.mxu0 0.0
        %3643 = vmatmul.mubr.f32.gmra.mxu0 %v3418
        %v3644 = vpop.f32.mrf.mxu0
        %v3645 = vadd.f32 0.0, %v3644
        %v3646 = vpop.f32.mrf.mxu0
        %3647 = vdwg.mxu0
        %v3648 = vadd.f32 %v3258, %v3490
        %v3649 = vadd.f32 %v3259, %v3495
        %v3650 = vadd.f32 %v3260, %v3500
        %v3651 = vadd.f32 %v3261, %v3505
        %v3652 = vadd.f32 %v3262, %v3510
        %v3653 = vadd.f32 %v3263, %v3515
        %v3654 = vadd.f32 %v3264, %v3520
        %v3655 = vadd.f32 %v3265, %v3525
        %v3656 = vadd.f32 %v3266, %v3530
        %v3657 = vadd.f32 %v3267, %v3535
        %v3658 = vadd.f32 %v3268, %v3540
        %v3659 = vadd.f32 %v3269, %v3545
        %v3660 = vadd.f32 %v3270, %v3550
        %v3661 = vadd.f32 %v3271, %v3555
        %v3662 = vadd.f32 %v3272, %v3560
        %v3663 = vadd.f32 %v3273, %v3565
        %v3664 = vadd.f32 %v3274, %v3570
        %v3665 = vadd.f32 %v3275, %v3575
        %v3666 = vadd.f32 %v3276, %v3580
        %v3667 = vadd.f32 %v3277, %v3585
        %v3668 = vadd.f32 %v3278, %v3590
        %v3669 = vadd.f32 %v3279, %v3595
        %v3670 = vadd.f32 %v3280, %v3600
        %v3671 = vadd.f32 %v3281, %v3605
        %v3672 = vadd.f32 %v3282, %v3610
        %v3673 = vadd.f32 %v3283, %v3615
        %v3674 = vadd.f32 %v3284, %v3620
        %v3675 = vadd.f32 %v3285, %v3625
        %v3676 = vadd.f32 %v3286, %v3630
        %v3677 = vadd.f32 %v3287, %v3635
        %v3678 = vadd.f32 %v3288, %v3640
        %v3679 = vadd.f32 %v3289, %v3645
        %v3680 = vadd.f32 %v3648, %v3649
        %v3681 = vadd.f32 %v3680, %v3650
        %v3682 = vadd.f32 %v3681, %v3651
        %v3683 = vadd.f32 %v3682, %v3652
        %v3684 = vadd.f32 %v3683, %v3653
        %v3685 = vadd.f32 %v3684, %v3654
        %v3686 = vadd.f32 %v3685, %v3655
        %v3687 = vadd.f32 %v3686, %v3656
        %v3688 = vadd.f32 %v3687, %v3657
        %v3689 = vadd.f32 %v3688, %v3658
        %v3690 = vadd.f32 %v3689, %v3659
        %v3691 = vadd.f32 %v3690, %v3660
        %v3692 = vadd.f32 %v3691, %v3661
        %v3693 = vadd.f32 %v3692, %v3662
        %v3694 = vadd.f32 %v3693, %v3663
        %v3695 = vadd.f32 %v3694, %v3664
        %v3696 = vadd.f32 %v3695, %v3665
        %v3697 = vadd.f32 %v3696, %v3666
        %v3698 = vadd.f32 %v3697, %v3667
        %v3699 = vadd.f32 %v3698, %v3668
        %v3700 = vadd.f32 %v3699, %v3669
        %v3701 = vadd.f32 %v3700, %v3670
        %v3702 = vadd.f32 %v3701, %v3671
        %v3703 = vadd.f32 %v3702, %v3672
        %v3704 = vadd.f32 %v3703, %v3673
        %v3705 = vadd.f32 %v3704, %v3674
        %v3706 = vadd.f32 %v3705, %v3675
        %v3707 = vadd.f32 %v3706, %v3676
        %v3708 = vadd.f32 %v3707, %v3677
        %v3709 = vadd.f32 %v3708, %v3678
        %v3710 = vadd.f32 %v3709, %v3679
        %v3711 = vrot.slane %v3710, 4
        %v3712 = vadd.f32 %v3710, %v3711
        %v3713 = vrot.slane %v3712, 2
        %v3714 = vadd.f32 %v3712, %v3713
        %v3715 = vrot.slane %v3714, 1
        %v3716 = vadd.f32 %v3714, %v3715
        %v3717 = vmul.f32 %v3648, %v3648
        %v3718 = vmul.f32 %v3649, %v3649
        %v3719 = vmul.f32 %v3650, %v3650
        %v3720 = vmul.f32 %v3651, %v3651
        %v3721 = vmul.f32 %v3652, %v3652
        %v3722 = vmul.f32 %v3653, %v3653
        %v3723 = vmul.f32 %v3654, %v3654
        %v3724 = vmul.f32 %v3655, %v3655
        %v3725 = vmul.f32 %v3656, %v3656
        %v3726 = vmul.f32 %v3657, %v3657
        %v3727 = vmul.f32 %v3658, %v3658
        %v3728 = vmul.f32 %v3659, %v3659
        %v3729 = vmul.f32 %v3660, %v3660
        %v3730 = vmul.f32 %v3661, %v3661
        %v3731 = vmul.f32 %v3662, %v3662
        %v3732 = vmul.f32 %v3663, %v3663
        %v3733 = vmul.f32 %v3664, %v3664
        %v3734 = vmul.f32 %v3665, %v3665
        %v3735 = vmul.f32 %v3666, %v3666
        %v3736 = vmul.f32 %v3667, %v3667
        %v3737 = vmul.f32 %v3668, %v3668
        %v3738 = vmul.f32 %v3669, %v3669
        %v3739 = vmul.f32 %v3670, %v3670
        %v3740 = vmul.f32 %v3671, %v3671
        %v3741 = vmul.f32 %v3672, %v3672
        %v3742 = vmul.f32 %v3673, %v3673
        %v3743 = vmul.f32 %v3674, %v3674
        %v3744 = vmul.f32 %v3675, %v3675
        %v3745 = vmul.f32 %v3676, %v3676
        %v3746 = vmul.f32 %v3677, %v3677
        %v3747 = vmul.f32 %v3678, %v3678
        %v3748 = vmul.f32 %v3679, %v3679
        %v3749 = vadd.f32 %v3717, %v3718
        %v3750 = vadd.f32 %v3749, %v3719
        %v3751 = vadd.f32 %v3750, %v3720
        %v3752 = vadd.f32 %v3751, %v3721
        %v3753 = vadd.f32 %v3752, %v3722
        %v3754 = vadd.f32 %v3753, %v3723
        %v3755 = vadd.f32 %v3754, %v3724
        %v3756 = vadd.f32 %v3755, %v3725
        %v3757 = vadd.f32 %v3756, %v3726
        %v3758 = vadd.f32 %v3757, %v3727
        %v3759 = vadd.f32 %v3758, %v3728
        %v3760 = vadd.f32 %v3759, %v3729
        %v3761 = vadd.f32 %v3760, %v3730
        %v3762 = vadd.f32 %v3761, %v3731
        %v3763 = vadd.f32 %v3762, %v3732
        %v3764 = vadd.f32 %v3763, %v3733
        %v3765 = vadd.f32 %v3764, %v3734
        %v3766 = vadd.f32 %v3765, %v3735
        %v3767 = vadd.f32 %v3766, %v3736
        %v3768 = vadd.f32 %v3767, %v3737
        %v3769 = vadd.f32 %v3768, %v3738
        %v3770 = vadd.f32 %v3769, %v3739
        %v3771 = vadd.f32 %v3770, %v3740
        %v3772 = vadd.f32 %v3771, %v3741
        %v3773 = vadd.f32 %v3772, %v3742
        %v3774 = vadd.f32 %v3773, %v3743
        %v3775 = vadd.f32 %v3774, %v3744
        %v3776 = vadd.f32 %v3775, %v3745
        %v3777 = vadd.f32 %v3776, %v3746
        %v3778 = vadd.f32 %v3777, %v3747
        %v3779 = vadd.f32 %v3778, %v3748
        %v3780 = vrot.slane %v3779, 4
        %v3781 = vadd.f32 %v3779, %v3780
        %v3782 = vrot.slane %v3781, 2
        %v3783 = vadd.f32 %v3781, %v3782
        %v3784 = vrot.slane %v3783, 1
        %v3785 = vadd.f32 %v3783, %v3784
        %3786 = vst [vmem:[%s217] sm:$0x1] %v3716
        %3787 = vst [vmem:[%s217 + $0x1] sm:$0x1] %v3785
        %3788 = vst [vmem:[%s210] sm:$0xff] %v3648
        %3789 = vst [vmem:[%s210 + $0x8] sm:$0xff] %v3649
        %3790 = vst [vmem:[%s210 + $0x10] sm:$0xff] %v3650
        %3791 = vst [vmem:[%s210 + $0x18] sm:$0xff] %v3651
        %3792 = vst [vmem:[%s210 + $0x20] sm:$0xff] %v3652
        %3793 = vst [vmem:[%s210 + $0x28] sm:$0xff] %v3653
        %3794 = vst [vmem:[%s210 + $0x30] sm:$0xff] %v3654
        %3795 = vst [vmem:[%s210 + $0x38] sm:$0xff] %v3655
        %3796 = vst [vmem:[%s210 + $0x40] sm:$0xff] %v3656
        %3797 = vst [vmem:[%s210 + $0x48] sm:$0xff] %v3657
        %3798 = vst [vmem:[%s210 + $0x50] sm:$0xff] %v3658
        %3799 = vst [vmem:[%s210 + $0x58] sm:$0xff] %v3659
        %3800 = vst [vmem:[%s210 + $0x60] sm:$0xff] %v3660
        %3801 = vst [vmem:[%s210 + $0x68] sm:$0xff] %v3661
        %3802 = vst [vmem:[%s210 + $0x70] sm:$0xff] %v3662
        %3803 = vst [vmem:[%s210 + $0x78] sm:$0xff] %v3663
        %3804 = vst [vmem:[%s210 + $0x80] sm:$0xff] %v3664
        %3805 = vst [vmem:[%s210 + $0x88] sm:$0xff] %v3665
        %3806 = vst [vmem:[%s210 + $0x90] sm:$0xff] %v3666
        %3807 = vst [vmem:[%s210 + $0x98] sm:$0xff] %v3667
        %3808 = vst [vmem:[%s210 + $0xa0] sm:$0xff] %v3668
        %3809 = vst [vmem:[%s210 + $0xa8] sm:$0xff] %v3669
        %3810 = vst [vmem:[%s210 + $0xb0] sm:$0xff] %v3670
        %3811 = vst [vmem:[%s210 + $0xb8] sm:$0xff] %v3671
        %3812 = vst [vmem:[%s210 + $0xc0] sm:$0xff] %v3672
        %3813 = vst [vmem:[%s210 + $0xc8] sm:$0xff] %v3673
        %3814 = vst [vmem:[%s210 + $0xd0] sm:$0xff] %v3674
        %3815 = vst [vmem:[%s210 + $0xd8] sm:$0xff] %v3675
        %3816 = vst [vmem:[%s210 + $0xe0] sm:$0xff] %v3676
        %3817 = vst [vmem:[%s210 + $0xe8] sm:$0xff] %v3677
        %3818 = vst [vmem:[%s210 + $0xf0] sm:$0xff] %v3678
        %3819 = vst [vmem:[%s210 + $0xf8] sm:$0xff] %v3679
        %s3820 = sand.u32 %s112, 1
        %s3821 = scalar_lea.sflag [#allocation3], %s3820
        %s3822 = sand.u32 %s112, 1
        %s3823 = smul.addr %s3822, 256
        %s3824 = scalar_lea.vmem [#allocation2], %s3823
        %s3825 = sand.u32 %s140, 1
        %s3826 = scalar_lea.sflag [#allocation5], %s3825
        %s3827 = sand.u32 %s140, 1
        %s3828 = smul.addr %s3827, 2
        %s3829 = scalar_lea.vmem [#allocation4], %s3828
        // Predicated region
        $region33: #{tpu_custom_call.1} parent=31 // pred_check
          %p3830 = pneg %p122
        $region34: #{tpu_custom_call.1} parent=31 // pred_check_branch
          %3832 = sbr.rel (%p3830) target = $region36
        $region35: #{tpu_custom_call.1} parent=31 // pred_region
          %s3833 = smul.u32 32, %s27
          %s3835 = ssub.s32 4096, 4096
          %3836 = vsyncadd %s3821, %s3835
          %s3837 = smul.addr %s26, 32
          %s3838 = sadd.s32 %s3833, %s3837
          %s3839 = smul.addr %s3838, 128
          %s3840 = scalar_lea.hbm %s3, %s3839
          %s3841 = sshll.u32 %s3824, 4
          %s3842 = int_to_ptr.vmem [resolvable:$true] %s3841
          %3847 = dma.vmem_to_hbm [thread:$0]  %s3842, 4096, %s3840, %s3821, 128, 128, 8
        $region36: #{tpu_custom_call.1} parent=31 // pred_fallthru
          _
        // Predicated region
        $region37: #{tpu_custom_call.1} parent=31 // pred_check
          %p3848 = pneg %p150
        $region38: #{tpu_custom_call.1} parent=31 // pred_check_branch
          %3850 = sbr.rel (%p3848) target = $region40
        $region39: #{tpu_custom_call.1} parent=31 // pred_region
          %s3852 = ssub.s32 32, 32
          %3853 = vsyncadd %s3826, %s3852
          %s3854 = sadd.s32 %s27, %s26
          %s3855 = smul.addr %s3854, 32
          %s3856 = scalar_lea.hbm %s4, %s3855
          %s3858 = sshll.u32 %s3829, 4
          %s3859 = int_to_ptr.vmem [resolvable:$true] %s3858
          %3861 = dma.vmem_to_hbm [thread:$0]  %s3859, 32, %s3856, %s3826
        $region40: #{tpu_custom_call.1} parent=31 // pred_fallthru
          _
      $region32: #{tpu_custom_call.1} parent=5 // pred_fallthru
        _
      %p3862 = scmp.le.s32.totalorder 2, %s17
      // Predicated region
      $region41: #{tpu_custom_call.1} parent=5 // pred_check
        %p3863 = pneg %p3862
      $region42: #{tpu_custom_call.1} parent=5 // pred_check_branch
        %3865 = sbr.rel (%p3863) target = $region44
      $region43: #{tpu_custom_call.1} parent=5 // pred_region
        %s3866 = ssub.s32 %s17, 2
        // Predicated region
        $region45: #{tpu_custom_call.1} parent=43 // pred_check
          %p3867 = pneg %p128
        $region46: #{tpu_custom_call.1} parent=43 // pred_check_branch
          %3869 = sbr.rel (%p3867) target = $region48
        $region47: #{tpu_custom_call.1} parent=43 // pred_region
          %s3870 = sand.u32 %s113, 1
          %s3871 = scalar_lea.sflag [#allocation3], %s3870
          %s3872 = sand.u32 %s113, 1
          %s3873 = smul.addr %s3872, 256
          %s3874 = scalar_lea.vmem [#allocation2], %s3873
          %3875 = dma.done %s3871, 4096
        $region48: #{tpu_custom_call.1} parent=43 // pred_fallthru
          _
        // Predicated region
        $region49: #{tpu_custom_call.1} parent=43 // pred_check
          %p3876 = pneg %p156
        $region50: #{tpu_custom_call.1} parent=43 // pred_check_branch
          %3878 = sbr.rel (%p3876) target = $region52
        $region51: #{tpu_custom_call.1} parent=43 // pred_region
          %s3879 = sand.u32 %s141, 1
          %s3880 = scalar_lea.sflag [#allocation5], %s3879
          %s3881 = sand.u32 %s141, 1
          %s3882 = smul.addr %s3881, 2
          %s3883 = scalar_lea.vmem [#allocation4], %s3882
          %3884 = dma.done %s3880, 32
        $region52: #{tpu_custom_call.1} parent=43 // pred_fallthru
          _
      $region44: #{tpu_custom_call.1} parent=5 // pred_fallthru
        _
    $region6: #{tpu_custom_call.1} parent=1 // loop_footer
      %s21 = sadd.s32 1, %s17
    $region7: #{tpu_custom_call.1} parent=1 // loop_footer_branch
      %16 = sbr.rel target = $region3
    $region8: #{tpu_custom_call.1} parent=1 // loop_exit
      _
    %3885 = vsyncpa [#allocation3], 1
    %s3886 = scalar_lea.sflag [#allocation3], 1
    %3887 = vsyncpa %s3886, 1
    %3888 = vsyncpa [#allocation5], 1
    %s3889 = scalar_lea.sflag [#allocation5], 1
    %3890 = vsyncpa %s3889, 1

</llo_original>
